<compile_context>
chip_gen: v5e
topology: v5e:2x2
jax: 0.10.0
libtpu: 0.0.40
codegen_flags: <defaults>
</compile_context>

<pallas_src>
import functools

import jax
import jax.numpy as jnp
from jax.experimental import pallas as pl
from jax.experimental.pallas import tpu as pltpu


# ----------------------------------------------------------------------------
# Generation-aware VMEM budget (v7x: 64 MiB physical; v5e/v6e: 128 MiB)
# ----------------------------------------------------------------------------
def _vmem_limit_bytes():
  try:
    cap = int(pltpu.get_tpu_info().vmem_capacity_bytes)
    if cap >= (32 << 20):
      return int(min(cap - (16 << 20), 64 << 20))
  except Exception:
    pass
  return 48 << 20


_VMEM_LIMIT = _vmem_limit_bytes()


# ----------------------------------------------------------------------------
# Pallas kernels
# ----------------------------------------------------------------------------
def _conv_kernel(x_ref, w_ref, s_ref, b_ref, o_ref, *,
                 k, wp, wo, rt_h, negative_slope, apply_act, fuse_pool):
  """Implicit-GEMM conv tile: sum over k*k taps of shifted-rows(X) @ W_tap.

  x_ref : (1, rows_in, Cin) bf16  full flattened zero-padded image (batch b)
  w_ref : (k*k, Cin, tn)    bf16  weights for this output-channel tile
  s_ref : (1, tn) f32 folded-BN scale        b_ref: (1, tn) f32 bias
  o_ref : (1, rt_h*wp, tn)            if not fuse_pool
          (1, (rt_h//2)*(wo//2), tn)  if fuse_pool (fused MaxPool2d(2,2))
  The tap accumulator is a jnp f32 value (single store in the epilogue).
  """
  row_tile = rt_h * wp
  base = pl.program_id(2) * row_tile
  if row_tile % 8 == 0:
    base = pl.multiple_of(base, 8)

  acc = None
  for ki in range(k):
    for kj in range(k):
      t = ki * k + kj
      xt = x_ref[0, pl.ds(base + ki * wp + kj, row_tile), :]
      d = jnp.dot(xt, w_ref[t], preferred_element_type=jnp.float32)
      acc = d if acc is None else acc + d

  y = acc * s_ref[...] + b_ref[...]
  if apply_act:
    y = jnp.where(y >= 0, y, y * negative_slope)          # LeakyReLU(0.1)

  if not fuse_pool:
    o_ref[0] = y.astype(o_ref.dtype)
    return

  # Fused MaxPool2d((2,2), stride 2) on the VMEM-resident tile: the pre-pool
  # activation never touches HBM and junk columns (w >= wo) are dropped here.
  tn = y.shape[-1]
  y = y.reshape(rt_h, wp, tn)
  if wo != wp:
    y = y[:, :wo, :]                                      # drop junk columns
  y = y.reshape(rt_h // 2, 2, wo, tn)
  y = jnp.maximum(y[:, 0], y[:, 1])                       # max over row pairs
  y = y.reshape(rt_h // 2, wo // 2, 2, tn)
  y = jnp.maximum(y[:, :, 0, :], y[:, :, 1, :])           # max over col pairs
  o_ref[0] = y.reshape((rt_h // 2) * (wo // 2), tn).astype(o_ref.dtype)


def _gap_softmax_kernel(x_ref, o_ref, *, inv_hw, valid_c):
  """GlobalAvgPool over spatial rows + masked Softmax over channels (1 image).

  x_ref: (1, HW, Cpad) bf16 logits; o_ref: (1, Cpad) f32 probabilities.
  """
  s = jnp.sum(x_ref[0].astype(jnp.float32), axis=0, keepdims=True) * inv_hw
  col = jax.lax.broadcasted_iota(jnp.int32, s.shape, 1)
  s = jnp.where(col < valid_c, s, -1e30)                  # mask padded channels
  m = jnp.max(s, axis=-1, keepdims=True)
  e = jnp.exp(s - m)
  e = jnp.where(col < valid_c, e, 0.0)
  o_ref[...] = e / jnp.sum(e, axis=-1, keepdims=True)


# ----------------------------------------------------------------------------
# Wrappers (thin plain-JAX glue around the kernels)
# ----------------------------------------------------------------------------
def _round_up(x, m):
  return (x + m - 1) // m * m


def _choose_rt_h(ho, wp, wo, fuse_pool, target_rows=2048):
  """Pick image-rows per tile: divides ho, keeps the compute tile around
  target_rows flattened rows, keeps the (tiled) output block 8-row aligned."""
  if ho * wp <= target_rows:
    return ho                                   # whole image fits one tile
  step = 2 if fuse_pool else 1
  best = None
  for rt in range(step, max(step, target_rows // wp) + 1, step):
    if ho % rt:
      continue
    out_rows = (rt // 2) * (wo // 2) if fuse_pool else rt * wp
    if out_rows % 8:
      continue
    best = rt
  return best if best is not None else ho       # full extent is always legal


def conv_block(x, layer, out_dtype=jnp.bfloat16, fuse_pool=False,
               return_raw=False):
  """Conv2d(k, stride=1, padding=p) + folded BN + optional LeakyReLU(0.1),
  optionally with a fused MaxPool2d(2,2), on an NHWC activation."""
  w, scale, bias = layer["w"], layer["scale"], layer["bias"]
  k, p, cout, act = layer["k"], layer["p"], layer["cout"], layer["act"]

  if layer.get("stem_im2col", False):
    # cin=3 stem: wrapper-side im2col (27 values/pixel, cheap) so the conv
    # runs as one K=27 matmul instead of a K=3 implicit GEMM.
    N, H, W, _ = x.shape
    xp = jnp.pad(x, ((0, 0), (p, p), (p, p), (0, 0)))
    x = jnp.concatenate(
        [xp[:, ki:ki + H, kj:kj + W, :] for ki in range(k) for kj in range(k)],
        axis=-1)
    k, p = 1, 0

  kk, cin, cout_pad = w.shape
  N, H, W, C = x.shape
  assert C == cin, (C, cin)

  hp, wp = H + 2 * p, W + 2 * p
  ho, wo = hp - k + 1, wp - k + 1
  extra = 1 if k > 1 else 0           # junk bottom row keeps tap shifts in-bounds
  if p or extra:
    x = jnp.pad(x, ((0, 0), (p, p + extra), (p, p), (0, 0)))
  rows_in = (hp + extra) * wp
  xf = x.reshape(N, rows_in, cin)     # free (contiguous) reshape

  if fuse_pool:
    assert ho % 2 == 0 and wo % 2 == 0, (ho, wo)

  tn = cout_pad if cout_pad <= 256 else 256
  jgrid = cout_pad // tn
  rt_h = _choose_rt_h(ho, wp, wo, fuse_pool)
  m_tiles = ho // rt_h
  if fuse_pool:
    tile_rows, out_rows = (rt_h // 2) * (wo // 2), (ho // 2) * (wo // 2)
  else:
    tile_rows, out_rows = rt_h * wp, ho * wp

  out = pl.pallas_call(
      functools.partial(_conv_kernel, k=k, wp=wp, wo=wo, rt_h=rt_h,
                        negative_slope=0.1, apply_act=act, fuse_pool=fuse_pool),
      out_shape=jax.ShapeDtypeStruct((N, out_rows, cout_pad), out_dtype),
      grid_spec=pltpu.PrefetchScalarGridSpec(
          num_scalar_prefetch=0,
          # batch outermost: the (large) flattened image is DMA'd once per
          # image; each weight tile once per (image, cout-tile); row tiles
          # innermost give pipeline depth / v7x 2-TC work at real input sizes.
          grid=(N, jgrid, m_tiles),
          in_specs=[
              pl.BlockSpec((1, rows_in, cin), lambda b, j, m: (b, 0, 0)),
              pl.BlockSpec((kk, cin, tn), lambda b, j, m: (0, 0, j)),
              pl.BlockSpec((1, tn), lambda b, j, m: (0, j)),
              pl.BlockSpec((1, tn), lambda b, j, m: (0, j)),
          ],
          out_specs=pl.BlockSpec((1, tile_rows, tn),
                                 lambda b, j, m: (b, m, j))),
      compiler_params=pltpu.CompilerParams(
          dimension_semantics=("parallel", "parallel", "parallel"),
          vmem_limit_bytes=_VMEM_LIMIT),
  )(xf, w, scale, bias)

  if return_raw:                      # classifier path (k=1, p=0: wp == wo)
    return out                        # (N, ho*wo, cout_pad)
  if fuse_pool:
    out = out.reshape(N, ho // 2, wo // 2, cout_pad)
    if cout != cout_pad:
      out = out[..., :cout]
    return out
  out = out.reshape(N, ho, wp, cout_pad)
  if wo != wp or cout != cout_pad:
    out = out[:, :, :wo, :cout]
  return out


def gap_softmax(logits, valid_c):
  """logits: (N, HW, Cpad) bf16 -> (N, Cpad) f32 softmax(mean over HW)."""
  N, HW, Cp = logits.shape
  return pl.pallas_call(
      functools.partial(_gap_softmax_kernel, inv_hw=1.0 / HW, valid_c=valid_c),
      out_shape=jax.ShapeDtypeStruct((N, Cp), jnp.float32),
      grid_spec=pltpu.PrefetchScalarGridSpec(
          num_scalar_prefetch=0,
          grid=(N,),
          in_specs=[pl.BlockSpec((1, HW, Cp), lambda b: (b, 0, 0))],
          out_specs=pl.BlockSpec((1, Cp), lambda b: (b, 0))),
      compiler_params=pltpu.CompilerParams(
          dimension_semantics=("parallel",),
          vmem_limit_bytes=_VMEM_LIMIT),
  )(logits)


# ----------------------------------------------------------------------------
# DarkNet19 definition (channels / kernels / padding exactly as the nn.Module)
# ----------------------------------------------------------------------------
# Each entry: (list of (cin, cout, k, pad), has_maxpool_after)
FEATURE_CFG = [
    ([(3, 32, 3, 1)], True),
    ([(32, 64, 3, 1)], True),
    ([(64, 128, 3, 1), (128, 64, 1, 0), (64, 128, 3, 1)], True),
    ([(128, 256, 3, 1), (256, 128, 1, 0), (128, 256, 3, 1)], True),
    ([(256, 512, 3, 1), (512, 256, 1, 0), (256, 512, 3, 1),
      (512, 256, 1, 1), (256, 512, 3, 1)], True),
    ([(512, 1024, 3, 1), (1024, 512, 1, 0), (512, 1024, 3, 1),
      (1024, 512, 1, 1), (512, 1024, 3, 1)], False),
]


def _make_layer(key, cin, cout, k, p, act=True, bn=True):
  """Synthetic Conv(+BN folded) parameters, pre-laid-out for the kernel."""
  eps = 1e-5
  kw, kg, kb, km, kv = jax.random.split(key, 5)
  fan_in = cin * k * k
  w = jax.random.normal(kw, (cout, cin, k, k), jnp.float32) * jnp.sqrt(2.0 / fan_in)
  if bn:
    gamma = 1.0 + 0.1 * jax.random.normal(kg, (cout,), jnp.float32)
    beta = 0.1 * jax.random.normal(kb, (cout,), jnp.float32)
    mean = 0.1 * jax.random.normal(km, (cout,), jnp.float32)
    var = jnp.abs(jax.random.normal(kv, (cout,), jnp.float32)) + 0.5
    scale = gamma / jnp.sqrt(var + eps)          # eval-mode BN fold
    bias = beta - mean * scale
  else:                                          # classifier: plain conv bias
    scale = jnp.ones((cout,), jnp.float32)
    bias = 0.01 * jax.random.normal(kb, (cout,), jnp.float32)

  cout_pad = cout if (cout < 128 or cout % 128 == 0) else _round_up(cout, 128)
  # One-time layout transform: (Cout, Cin, k, k) -> (k*k, Cin, Cout_pad) bf16.
  wt = jnp.transpose(w, (2, 3, 1, 0)).reshape(k * k, cin, cout)
  wt = jnp.pad(wt, ((0, 0), (0, 0), (0, cout_pad - cout))).astype(jnp.bfloat16)
  scale = jnp.pad(scale, (0, cout_pad - cout)).reshape(1, cout_pad)
  bias = jnp.pad(bias, (0, cout_pad - cout)).reshape(1, cout_pad)

  stem = (cin == 3 and k == 3)
  if stem:                                       # im2col'd stem: (1, 27, Cout_pad)
    wt = wt.reshape(1, k * k * cin, cout_pad)
  return {"w": wt, "scale": scale, "bias": bias, "k": k, "p": p,
          "cout": cout, "act": act, "stem_im2col": stem}


def init_params(key):
  params = {"features": []}
  for cfg, _ in FEATURE_CFG:
    block = []
    for (cin, cout, k, p) in cfg:
      key, sub = jax.random.split(key)
      block.append(_make_layer(sub, cin, cout, k, p, act=True, bn=True))
    params["features"].append(block)
  key, sub = jax.random.split(key)
  # classifier: Conv2d(1024, 1000, 1x1, bias=True), no BN, no activation
  params["classifier"] = _make_layer(sub, 1024, 1000, 1, 0, act=False, bn=False)
  return params


def darknet19_forward(x_nchw, params):
  # layout: input NCHW (PyTorch) -> NHWC; activations carried in bf16.
  x = jnp.transpose(x_nchw, (0, 2, 3, 1)).astype(jnp.bfloat16)

  # features: every MaxPool2d(2,2) directly follows a 3x3 ConvLeakyReLU, so the
  # pool is fused into that conv's epilogue (no standalone pooling pass).
  for block, (_, has_pool) in zip(params["features"], FEATURE_CFG):
    for li, layer in enumerate(block):
      fuse = has_pool and li == len(block) - 1
      x = conv_block(x, layer, fuse_pool=fuse)

  # (PyTorch forward does `print(x.size())` here; the NCHW size would be
  #  (N, 1024, H, W) for the NHWC tensor x of shape (N, H, W, 1024).)

  # classifier: Conv2d(1024,1000,1x1,bias=True) + GlobalAvgPool2d + Softmax.
  clf = params["classifier"]
  logits = conv_block(x, clf, out_dtype=jnp.bfloat16, return_raw=True)  # (N,HW,1024) bf16
  probs = gap_softmax(logits, valid_c=clf["cout"])                      # (N,1024) f32
  return probs[:, :clf["cout"]]                                         # (N,1000) f32


# ----------------------------------------------------------------------------
if __name__ == "__main__":
  key = jax.random.PRNGKey(0)
  pkey, xkey = jax.random.split(key)
  params = init_params(pkey)

  # Small input consistent with the module: batch=2, 3 channels, 32x32 spatial.
  x = jax.random.normal(xkey, (2, 3, 32, 32), jnp.float32)  # NCHW

  out = darknet19_forward(x, params)
  out = jax.block_until_ready(out)

  assert out.shape == (2, 1000), out.shape
  assert out.dtype == jnp.float32
  assert bool(jnp.all(jnp.isfinite(out)))
  assert bool(jnp.allclose(jnp.sum(out, axis=1), 1.0, atol=1e-4))
  print("KERNEL_OK")
</pallas_src>

<mosaic_0001>
module attributes {stable_mosaic.version = 11 : i64} {
  func.func @_conv_kernel(%arg0: i32, %arg1: i32, %arg2: i32, %arg3: memref<1x1024x27xbf16, #tpu.memory_space<vmem>>, %arg4: memref<1x27x32xbf16, #tpu.memory_space<vmem>>, %arg5: memref<1x32xf32, #tpu.memory_space<vmem>>, %arg6: memref<1x32xf32, #tpu.memory_space<vmem>>, %arg7: memref<1x256x32xbf16, #tpu.memory_space<vmem>>) attributes {dimension_semantics = [#tpu.dimension_semantics<parallel>, #tpu.dimension_semantics<parallel>, #tpu.dimension_semantics<parallel>], iteration_bounds = array<i64: 2, 1, 1>, scalar_prefetch = 0 : i64, scratch_operands = 0 : i64, tpu.core_type = #tpu.core_type<tc>, window_params = [{transform_indices = @transform_0, window_bounds = array<i64: 1, 1024, 27>}, {transform_indices = @transform_1, window_bounds = array<i64: 1, 27, 32>}, {transform_indices = @transform_2, window_bounds = array<i64: 1, 32>}, {transform_indices = @transform_3, window_bounds = array<i64: 1, 32>}, {transform_indices = @transform_4, window_bounds = array<i64: 1, 256, 32>}]} {
    %c1024_i32 = arith.constant 1024 : i32
    %0 = arith.muli %arg2, %c1024_i32 : i32
    %1 = tpu.assume_multiple %0, 8 : i32
    %c0_i32 = arith.constant 0 : i32
    %2 = arith.addi %1, %c0_i32 : i32
    %c0_i32_0 = arith.constant 0 : i32
    %3 = arith.addi %2, %c0_i32_0 : i32
    %c0 = arith.constant 0 : index
    %4 = arith.index_cast %3 : i32 to index
    %c0_1 = arith.constant 0 : index
    %5 = vector.load %arg3[%c0, %4, %c0_1] : memref<1x1024x27xbf16, #tpu.memory_space<vmem>>, vector<1x1024x27xbf16>
    %6 = vector.shape_cast %5 : vector<1x1024x27xbf16> to vector<1024x27xbf16>
    %c0_2 = arith.constant 0 : index
    %c0_3 = arith.constant 0 : index
    %c0_4 = arith.constant 0 : index
    %7 = vector.load %arg4[%c0_2, %c0_3, %c0_4] : memref<1x27x32xbf16, #tpu.memory_space<vmem>>, vector<1x27x32xbf16>
    %8 = vector.shape_cast %7 : vector<1x27x32xbf16> to vector<27x32xbf16>
    %cst = arith.constant dense<0.000000e+00> : vector<1024x32xf32>
    %9 = tpu.matmul %6, %8, %cst {dimension_numbers = #tpu.dot_dimension_numbers<[1], [0], [0], [1], [0, 0, 1, 1], [], []>} : vector<1024x27xbf16>, vector<27x32xbf16>, vector<1024x32xf32> -> vector<1024x32xf32>
    %c0_5 = arith.constant 0 : index
    %c0_6 = arith.constant 0 : index
    %10 = vector.load %arg5[%c0_5, %c0_6] : memref<1x32xf32, #tpu.memory_space<vmem>>, vector<1x32xf32>
    %11 = vector.broadcast %10 : vector<1x32xf32> to vector<1024x32xf32>
    %12 = arith.mulf %9, %11 : vector<1024x32xf32>
    %c0_7 = arith.constant 0 : index
    %c0_8 = arith.constant 0 : index
    %13 = vector.load %arg6[%c0_7, %c0_8] : memref<1x32xf32, #tpu.memory_space<vmem>>, vector<1x32xf32>
    %14 = vector.broadcast %13 : vector<1x32xf32> to vector<1024x32xf32>
    %15 = arith.addf %12, %14 : vector<1024x32xf32>
    %cst_9 = arith.constant 0.000000e+00 : f32
    %16 = vector.broadcast %cst_9 : f32 to vector<1024x32xf32>
    %17 = arith.cmpf oge, %15, %16 : vector<1024x32xf32>
    %cst_10 = arith.constant 1.000000e-01 : f32
    %18 = vector.broadcast %cst_10 : f32 to vector<1024x32xf32>
    %19 = arith.mulf %15, %18 : vector<1024x32xf32>
    %20 = arith.select %17, %15, %19 : vector<1024x32xi1>, vector<1024x32xf32>
    %21 = vector.shape_cast %20 : vector<1024x32xf32> to vector<32x32x32xf32>
    %22 = vector.shape_cast %21 : vector<32x32x32xf32> to vector<16x2x32x32xf32>
    %23 = vector.extract_strided_slice %22 {offsets = [0, 0, 0, 0], sizes = [16, 1, 32, 32], strides = [1, 1, 1, 1]} : vector<16x2x32x32xf32> to vector<16x1x32x32xf32>
    %24 = vector.shape_cast %23 : vector<16x1x32x32xf32> to vector<16x32x32xf32>
    %25 = vector.extract_strided_slice %22 {offsets = [0, 1, 0, 0], sizes = [16, 1, 32, 32], strides = [1, 1, 1, 1]} : vector<16x2x32x32xf32> to vector<16x1x32x32xf32>
    %26 = vector.shape_cast %25 : vector<16x1x32x32xf32> to vector<16x32x32xf32>
    %27 = arith.maximumf %24, %26 : vector<16x32x32xf32>
    %28 = vector.shape_cast %27 : vector<16x32x32xf32> to vector<16x16x2x32xf32>
    %29 = vector.extract_strided_slice %28 {offsets = [0, 0, 0, 0], sizes = [16, 16, 1, 32], strides = [1, 1, 1, 1]} : vector<16x16x2x32xf32> to vector<16x16x1x32xf32>
    %30 = vector.shape_cast %29 : vector<16x16x1x32xf32> to vector<16x16x32xf32>
    %31 = vector.extract_strided_slice %28 {offsets = [0, 0, 1, 0], sizes = [16, 16, 1, 32], strides = [1, 1, 1, 1]} : vector<16x16x2x32xf32> to vector<16x16x1x32xf32>
    %32 = vector.shape_cast %31 : vector<16x16x1x32xf32> to vector<16x16x32xf32>
    %33 = arith.maximumf %30, %32 : vector<16x16x32xf32>
    %34 = vector.shape_cast %33 : vector<16x16x32xf32> to vector<256x32xf32>
    %35 = arith.truncf %34 : vector<256x32xf32> to vector<256x32xbf16>
    %c0_11 = arith.constant 0 : index
    %c0_12 = arith.constant 0 : index
    %c0_13 = arith.constant 0 : index
    %36 = vector.load %arg7[%c0_11, %c0_12, %c0_13] : memref<1x256x32xbf16, #tpu.memory_space<vmem>>, vector<1x256x32xbf16>
    %37 = vector.shape_cast %36 : vector<1x256x32xbf16> to vector<256x32xbf16>
    %38 = vector.shape_cast %35 : vector<256x32xbf16> to vector<1x256x32xbf16>
    tpu.vector_store %arg7[%c0_11, %c0_12, %c0_13], %38 {strides = array<i32>} : memref<1x256x32xbf16, #tpu.memory_space<vmem>>, vector<1x256x32xbf16>,
    return
  }
  func.func @transform_0(%arg0: i32, %arg1: i32, %arg2: i32) -> (i32, i32, i32) {
    %c0_i32 = arith.constant 0 : i32
    %c0_i32_0 = arith.constant 0 : i32
    %c0_i32_1 = arith.constant 0 : i32
    return %arg0, %c0_i32, %c0_i32_0 : i32, i32, i32
  }
  func.func @transform_1(%arg0: i32, %arg1: i32, %arg2: i32) -> (i32, i32, i32) {
    %c0_i32 = arith.constant 0 : i32
    %c0_i32_0 = arith.constant 0 : i32
    %c0_i32_1 = arith.constant 0 : i32
    return %c0_i32, %c0_i32_0, %arg1 : i32, i32, i32
  }
  func.func @transform_2(%arg0: i32, %arg1: i32, %arg2: i32) -> (i32, i32) {
    %c0_i32 = arith.constant 0 : i32
    %c0_i32_0 = arith.constant 0 : i32
    return %c0_i32, %arg1 : i32, i32
  }
  func.func @transform_3(%arg0: i32, %arg1: i32, %arg2: i32) -> (i32, i32) {
    %c0_i32 = arith.constant 0 : i32
    %c0_i32_0 = arith.constant 0 : i32
    return %c0_i32, %arg1 : i32, i32
  }
  func.func @transform_4(%arg0: i32, %arg1: i32, %arg2: i32) -> (i32, i32, i32) {
    %c0_i32 = arith.constant 0 : i32
    return %arg0, %arg2, %arg1 : i32, i32, i32
  }
}

</mosaic_0001>

<llo_original>
// kernel: tpu_custom_call.1
$region0: #{tpu_custom_call.1}
  #allocation0 [shape = 'u32[]', space=smem, size = 0x4, offset = 0x4, fixed_abs, tag = 'smem constant byte address 0x4 - core index']
  #allocation1 [shape = 'u32[72,128]{1,0:T(1,128)}', space=vmem, size = 0x9000, scoped, tag = 'internal scratch']
  %s0 = inlined_call_operand.vmem [shape: bf16[2,1024,27], index: 0, kind: input, shape index: {}]
  %s1 = inlined_call_operand.vmem [shape: bf16[1,27,32], index: 1, kind: input, shape index: {}]
  %s2 = inlined_call_operand.vmem [shape: f32[1,32], index: 2, kind: input, shape index: {}]
  %s3 = inlined_call_operand.vmem [shape: f32[1,32], index: 3, kind: input, shape index: {}]
  %s4 = inlined_call_operand.vmem [shape: bf16[2,256,32], index: 4, kind: output, shape index: {}]
  %s5 = sld [smem:[#allocation0]]
  $region49: #{tpu_custom_call.1} parent=0
    _
  %s7 = ssub.s32 1, %s5
  %s8 = scalar_select 0, %s7, %s5
  loop: start=0, step=1, limit=4
  $region2: #{tpu_custom_call.1} parent=0 // loop_pre_header
    _
  $region3: #{tpu_custom_call.1} parent=0 // loop_header
    %s10 = sphi 0, %s14
    %p11 = scmp.ge.s32.totalorder %s10, 4
    %s17 = sphi 0, %s36
    %s18 = sphi 0, %s32
    %s19 = sphi 0, %s28
    %s20 = sphi 0, %s17
    %s21 = sphi 0, %s18
    %s22 = sphi 0, %s19
    %s23 = sphi 0, %s20
    %s24 = sphi 0, %s21
    %s25 = sphi 0, %s22
    %s39 = sphi 0, %s41
    %s42 = sphi 0, %s39
    %s43 = sphi 0, %s42
    %s59 = sphi 0, %s43
    %s65 = sphi 0, %s67
    %s68 = sphi 0, %s65
    %s69 = sphi 0, %s68
    %s85 = sphi 0, %s69
    %s91 = sphi 0, %s93
    %s94 = sphi 0, %s91
    %s95 = sphi 0, %s94
    %s111 = sphi 0, %s95
    %s117 = sphi 0, %s119
    %s120 = sphi 0, %s117
    %s121 = sphi 0, %s120
    %s137 = sphi 0, %s121
    %s147 = sphi 0, %s149
    %s150 = sphi 0, %s147
    %s151 = sphi 0, %s150
    %s167 = sphi 0, %s151
  $region4: #{tpu_custom_call.1} parent=0 // loop_header_branch
    %13 = sbr.rel (%p11) target = $region8
  $region5: #{tpu_custom_call.1} parent=0 // loop_body
    %s15 = ssub.s32 %s10, 1
    %s16 = ssub.s32 %s10, 2
    %s26 = sadd.s32 1, %s19
    %p27 = scmp.ge.s32.totalorder %s26, 1
    %s28 = scalar_select %p27, 0, %s26
    %s29 = sadd.s32 1, %s18
    %s30 = scalar_select %p27, %s29, %s18
    %p31 = scmp.ge.s32.totalorder %s30, 1
    %s32 = scalar_select %p31, 0, %s30
    %s33 = sadd.s32 1, %s17
    %s34 = scalar_select %p31, %s33, %s17
    %p35 = scmp.ge.s32.totalorder %s34, 2
    %s36 = scalar_select %p35, 0, %s34
    %s37 = ssub.s32 %s17, %s36
    %p38 = scmp.eq.s32.totalorder %s37, 0
    %s40 = sadd.s32 %s39, 1
    %s41 = scalar_select %p38, %s39, %s40
    %p44 = pneg %p38
    %p45 = scmp.eq.s32.totalorder %s10, 1
    %p46 = por %p44, %p45
    %p47 = scmp.ne.s32.totalorder %s39, %s42
    %p48 = scmp.eq.s32.totalorder %s10, 0
    %p49 = por %p47, %p48
    %p50 = scmp.ne.s32.totalorder %s39, %s42
    %p51 = scmp.eq.s32.totalorder %s15, 1
    %p52 = por %p50, %p51
    %p53 = scmp.ne.s32.totalorder %s42, %s43
    %p54 = scmp.eq.s32.totalorder %s15, 0
    %p55 = por %p53, %p54
    %p56 = scmp.ne.s32.totalorder %s42, %s43
    %p57 = scmp.eq.s32.totalorder %s16, 1
    %p58 = por %p56, %p57
    %p60 = scmp.ne.s32.totalorder %s43, %s59
    %p61 = scmp.eq.s32.totalorder %s16, 0
    %p62 = por %p60, %p61
    %s63 = ssub.s32 %s18, %s32
    %p64 = scmp.eq.s32.totalorder %s63, 0
    %s66 = sadd.s32 %s65, 1
    %s67 = scalar_select %p64, %s65, %s66
    %p70 = pneg %p64
    %p71 = scmp.eq.s32.totalorder %s10, 1
    %p72 = por %p70, %p71
    %p73 = scmp.ne.s32.totalorder %s65, %s68
    %p74 = scmp.eq.s32.totalorder %s10, 0
    %p75 = por %p73, %p74
    %p76 = scmp.ne.s32.totalorder %s65, %s68
    %p77 = scmp.eq.s32.totalorder %s15, 1
    %p78 = por %p76, %p77
    %p79 = scmp.ne.s32.totalorder %s68, %s69
    %p80 = scmp.eq.s32.totalorder %s15, 0
    %p81 = por %p79, %p80
    %p82 = scmp.ne.s32.totalorder %s68, %s69
    %p83 = scmp.eq.s32.totalorder %s16, 1
    %p84 = por %p82, %p83
    %p86 = scmp.ne.s32.totalorder %s69, %s85
    %p87 = scmp.eq.s32.totalorder %s16, 0
    %p88 = por %p86, %p87
    %s89 = ssub.s32 %s18, %s32
    %p90 = scmp.eq.s32.totalorder %s89, 0
    %s92 = sadd.s32 %s91, 1
    %s93 = scalar_select %p90, %s91, %s92
    %p96 = pneg %p90
    %p97 = scmp.eq.s32.totalorder %s10, 1
    %p98 = por %p96, %p97
    %p99 = scmp.ne.s32.totalorder %s91, %s94
    %p100 = scmp.eq.s32.totalorder %s10, 0
    %p101 = por %p99, %p100
    %p102 = scmp.ne.s32.totalorder %s91, %s94
    %p103 = scmp.eq.s32.totalorder %s15, 1
    %p104 = por %p102, %p103
    %p105 = scmp.ne.s32.totalorder %s94, %s95
    %p106 = scmp.eq.s32.totalorder %s15, 0
    %p107 = por %p105, %p106
    %p108 = scmp.ne.s32.totalorder %s94, %s95
    %p109 = scmp.eq.s32.totalorder %s16, 1
    %p110 = por %p108, %p109
    %p112 = scmp.ne.s32.totalorder %s95, %s111
    %p113 = scmp.eq.s32.totalorder %s16, 0
    %p114 = por %p112, %p113
    %s115 = ssub.s32 %s18, %s32
    %p116 = scmp.eq.s32.totalorder %s115, 0
    %s118 = sadd.s32 %s117, 1
    %s119 = scalar_select %p116, %s117, %s118
    %p122 = pneg %p116
    %p123 = scmp.eq.s32.totalorder %s10, 1
    %p124 = por %p122, %p123
    %p125 = scmp.ne.s32.totalorder %s117, %s120
    %p126 = scmp.eq.s32.totalorder %s10, 0
    %p127 = por %p125, %p126
    %p128 = scmp.ne.s32.totalorder %s117, %s120
    %p129 = scmp.eq.s32.totalorder %s15, 1
    %p130 = por %p128, %p129
    %p131 = scmp.ne.s32.totalorder %s120, %s121
    %p132 = scmp.eq.s32.totalorder %s15, 0
    %p133 = por %p131, %p132
    %p134 = scmp.ne.s32.totalorder %s120, %s121
    %p135 = scmp.eq.s32.totalorder %s16, 1
    %p136 = por %p134, %p135
    %p138 = scmp.ne.s32.totalorder %s121, %s137
    %p139 = scmp.eq.s32.totalorder %s16, 0
    %p140 = por %p138, %p139
    %s141 = ssub.s32 %s17, %s36
    %s142 = ssub.s32 %s19, %s28
    %s143 = sor.u32 %s141, %s142
    %s144 = ssub.s32 %s18, %s32
    %s145 = sor.u32 %s143, %s144
    %p146 = scmp.eq.s32.totalorder %s145, 0
    %s148 = sadd.s32 %s147, 1
    %s149 = scalar_select %p146, %s147, %s148
    %p152 = pneg %p146
    %p153 = scmp.eq.s32.totalorder %s10, 1
    %p154 = por %p152, %p153
    %p155 = scmp.ne.s32.totalorder %s147, %s150
    %p156 = scmp.eq.s32.totalorder %s10, 0
    %p157 = por %p155, %p156
    %p158 = scmp.ne.s32.totalorder %s147, %s150
    %p159 = scmp.eq.s32.totalorder %s15, 1
    %p160 = por %p158, %p159
    %p161 = scmp.ne.s32.totalorder %s150, %s151
    %p162 = scmp.eq.s32.totalorder %s15, 0
    %p163 = por %p161, %p162
    %p164 = scmp.ne.s32.totalorder %s150, %s151
    %p165 = scmp.eq.s32.totalorder %s16, 1
    %p166 = por %p164, %p165
    %p168 = scmp.ne.s32.totalorder %s151, %s167
    %p169 = scmp.eq.s32.totalorder %s16, 0
    %p170 = por %p168, %p169
    %p171 = scmp.le.s32.totalorder 1, %s10
    %p172 = scmp.lt.s32.totalorder %s10, 3
    %p173 = pnand %p171, %p172
    %p174 = pneg %p173
    // Predicated region
    $region9: #{tpu_custom_call.1} parent=5 // pred_check
      _
    $region10: #{tpu_custom_call.1} parent=5 // pred_check_branch
      %176 = sbr.rel (%p173) target = $region12
    $region11: #{tpu_custom_call.1} parent=5 // pred_region
      %s177 = ssub.s32 %s10, 1
      // Predicated region
      $region13: #{tpu_custom_call.1} parent=11 // pred_check
        %p178 = pneg %p81
      $region14: #{tpu_custom_call.1} parent=11 // pred_check_branch
        %180 = sbr.rel (%p178) target = $region16
      $region15: #{tpu_custom_call.1} parent=11 // pred_region
        %p181 = scmp.lt.s32.totalorder %s21, 0
        %s182 = scalar_select %p181, %s21, 0
        %s183 = smul.addr %s182, 4
        %s184 = scalar_lea.vmem %s1, %s183
      $region16: #{tpu_custom_call.1} parent=11 // pred_fallthru
        _
      // Predicated region
      $region17: #{tpu_custom_call.1} parent=11 // pred_check
        %p185 = pneg %p107
      $region18: #{tpu_custom_call.1} parent=11 // pred_check_branch
        %187 = sbr.rel (%p185) target = $region20
      $region19: #{tpu_custom_call.1} parent=11 // pred_region
        %p188 = scmp.lt.s32.totalorder %s21, 0
        %s189 = scalar_select %p188, %s21, 0
        %s190 = scalar_lea.vmem %s2, %s189
      $region20: #{tpu_custom_call.1} parent=11 // pred_fallthru
        _
      // Predicated region
      $region21: #{tpu_custom_call.1} parent=11 // pred_check
        %p191 = pneg %p133
      $region22: #{tpu_custom_call.1} parent=11 // pred_check_branch
        %193 = sbr.rel (%p191) target = $region24
      $region23: #{tpu_custom_call.1} parent=11 // pred_region
        %p194 = scmp.lt.s32.totalorder %s21, 0
        %s195 = scalar_select %p194, %s21, 0
        %s196 = scalar_lea.vmem %s3, %s195
      $region24: #{tpu_custom_call.1} parent=11 // pred_fallthru
        _
    $region12: #{tpu_custom_call.1} parent=5 // pred_fallthru
      _
    %p197 = scmp.lt.s32.totalorder %s10, 2
    // Predicated region
    $region25: #{tpu_custom_call.1} parent=5 // pred_check
      %p198 = pneg %p197
    $region26: #{tpu_custom_call.1} parent=5 // pred_check_branch
      %200 = sbr.rel (%p198) target = $region28
    $region27: #{tpu_custom_call.1} parent=5 // pred_region
      // Predicated region
      $region29: #{tpu_custom_call.1} parent=27 // pred_check
        %p201 = pneg %p49
      $region30: #{tpu_custom_call.1} parent=27 // pred_check_branch
        %203 = sbr.rel (%p201) target = $region32
      $region31: #{tpu_custom_call.1} parent=27 // pred_region
        %p204 = scmp.lt.s32.totalorder %s17, 1
        %s205 = scalar_select %p204, %s17, 1
        %s206 = smul.addr %s205, 128
        %s207 = smul.addr %s206, 4
        %s208 = scalar_lea.vmem %s0, %s207
      $region32: #{tpu_custom_call.1} parent=27 // pred_fallthru
        _
    $region28: #{tpu_custom_call.1} parent=5 // pred_fallthru
      _
    %p209 = scmp.le.s32.totalorder 1, %s10
    %p210 = scmp.lt.s32.totalorder %s10, 3
    %p211 = pnand %p209, %p210
    %p212 = pneg %p211
    // Predicated region
    $region33: #{tpu_custom_call.1} parent=5 // pred_check
      _
    $region34: #{tpu_custom_call.1} parent=5 // pred_check_branch
      %214 = sbr.rel (%p211) target = $region36
    $region35: #{tpu_custom_call.1} parent=5 // pred_region
      %s215 = ssub.s32 %s10, 1
      %p216 = scmp.lt.s32.totalorder %s20, 1
      %s217 = scalar_select %p216, %s20, 1
      %s218 = smul.addr %s217, 128
      %s219 = smul.addr %s218, 4
      %s220 = scalar_lea.vmem %s0, %s219
      %p221 = pneg %p55
      %p222 = pneg %p52
      %p223 = scmp.lt.s32.totalorder %s21, 0
      %s224 = scalar_select %p223, %s21, 0
      %s225 = smul.addr %s224, 4
      %s226 = scalar_lea.vmem %s1, %s225
      %p227 = pneg %p81
      %p228 = pneg %p78
      %p229 = scmp.lt.s32.totalorder %s21, 0
      %s230 = scalar_select %p229, %s21, 0
      %s231 = scalar_lea.vmem %s2, %s230
      %p232 = pneg %p107
      %p233 = pneg %p104
      %p234 = scmp.lt.s32.totalorder %s21, 0
      %s235 = scalar_select %p234, %s21, 0
      %s236 = scalar_lea.vmem %s3, %s235
      %p237 = pneg %p133
      %p238 = pneg %p130
      %p239 = pneg %p163
      %p240 = pneg %p160
      %s241 = smul.u32 32, %s22
      %p242 = scmp.lt.s32.totalorder %s20, 1
      %s243 = scalar_select %p242, %s20, 1
      %p244 = scmp.lt.s32.totalorder %s241, 31
      %s245 = scalar_select %p244, %s241, 31
      %p246 = scmp.lt.s32.totalorder %s21, 0
      %s247 = scalar_select %p246, %s21, 0
      %s248 = sadd.s32 %s247, %s245
      %s249 = smul.addr %s243, 32
      %s250 = sadd.s32 %s248, %s249
      %s251 = smul.addr %s250, 4
      %s252 = scalar_lea.vmem %s4, %s251
      %p253 = scmp.lt.s32.totalorder %s20, 1
      %s254 = scalar_select %p253, %s20, 1
      %s255 = smul.addr %s254, 128
      %s256 = smul.addr %s255, 4
      %s257 = scalar_lea.vmem %s0, %s256
      %p258 = scmp.lt.s32.totalorder %s21, 0
      %s259 = scalar_select %p258, %s21, 0
      %s260 = smul.addr %s259, 4
      %s261 = scalar_lea.vmem %s1, %s260
      %p262 = scmp.lt.s32.totalorder %s21, 0
      %s263 = scalar_select %p262, %s21, 0
      %s264 = scalar_lea.vmem %s2, %s263
      %p265 = scmp.lt.s32.totalorder %s21, 0
      %s266 = scalar_select %p265, %s21, 0
      %s267 = scalar_lea.vmem %s3, %s266
      %s268 = smul.u32 32, %s22
      %p269 = scmp.lt.s32.totalorder %s20, 1
      %s270 = scalar_select %p269, %s20, 1
      %p271 = scmp.lt.s32.totalorder %s268, 31
      %s272 = scalar_select %p271, %s268, 31
      %p273 = scmp.lt.s32.totalorder %s21, 0
      %s274 = scalar_select %p273, %s21, 0
      %s275 = sadd.s32 %s274, %s272
      %s276 = smul.addr %s270, 32
      %s277 = sadd.s32 %s275, %s276
      %s278 = smul.addr %s277, 4
      %s279 = scalar_lea.vmem %s4, %s278
      %s280 = smul.u32 32, %s22
      %s282 = smul.u32 %s22, 1024
      %s283 = sshra.s32 %s282, 3
      %s284 = sand.u32 %s282, 7
      %s285 = smul.addr %s283, 4
      %s286 = scalar_lea.vmem %s257, %s285
      %v287 = vld [vmem:[%s286] sm:$0xf]
      %v288 = vld [vmem:[%s286 + $0x4] sm:$0xf]
      %v289 = vld [vmem:[%s286 + $0x8] sm:$0xf]
      %v290 = vld [vmem:[%s286 + $0xc] sm:$0xf]
      %v291 = vld [vmem:[%s286 + $0x10] sm:$0xf]
      %v292 = vld [vmem:[%s286 + $0x14] sm:$0xf]
      %v293 = vld [vmem:[%s286 + $0x18] sm:$0xf]
      %v294 = vld [vmem:[%s286 + $0x1c] sm:$0xf]
      %v295 = vld [vmem:[%s286 + $0x20] sm:$0xf]
      %v296 = vld [vmem:[%s286 + $0x24] sm:$0xf]
      %v297 = vld [vmem:[%s286 + $0x28] sm:$0xf]
      %v298 = vld [vmem:[%s286 + $0x2c] sm:$0xf]
      %v299 = vld [vmem:[%s286 + $0x30] sm:$0xf]
      %v300 = vld [vmem:[%s286 + $0x34] sm:$0xf]
      %v301 = vld [vmem:[%s286 + $0x38] sm:$0xf]
      %v302 = vld [vmem:[%s286 + $0x3c] sm:$0xf]
      %v303 = vld [vmem:[%s286 + $0x40] sm:$0xf]
      %v304 = vld [vmem:[%s286 + $0x44] sm:$0xf]
      %v305 = vld [vmem:[%s286 + $0x48] sm:$0xf]
      %v306 = vld [vmem:[%s286 + $0x4c] sm:$0xf]
      %v307 = vld [vmem:[%s286 + $0x50] sm:$0xf]
      %v308 = vld [vmem:[%s286 + $0x54] sm:$0xf]
      %v309 = vld [vmem:[%s286 + $0x58] sm:$0xf]
      %v310 = vld [vmem:[%s286 + $0x5c] sm:$0xf]
      %v311 = vld [vmem:[%s286 + $0x60] sm:$0xf]
      %v312 = vld [vmem:[%s286 + $0x64] sm:$0xf]
      %v313 = vld [vmem:[%s286 + $0x68] sm:$0xf]
      %v314 = vld [vmem:[%s286 + $0x6c] sm:$0xf]
      %v315 = vld [vmem:[%s286 + $0x70] sm:$0xf]
      %v316 = vld [vmem:[%s286 + $0x74] sm:$0xf]
      %v317 = vld [vmem:[%s286 + $0x78] sm:$0xf]
      %v318 = vld [vmem:[%s286 + $0x7c] sm:$0xf]
      %v319 = vld [vmem:[%s286 + $0x80] sm:$0xf]
      %v320 = vld [vmem:[%s286 + $0x84] sm:$0xf]
      %v321 = vld [vmem:[%s286 + $0x88] sm:$0xf]
      %v322 = vld [vmem:[%s286 + $0x8c] sm:$0xf]
      %v323 = vld [vmem:[%s286 + $0x90] sm:$0xf]
      %v324 = vld [vmem:[%s286 + $0x94] sm:$0xf]
      %v325 = vld [vmem:[%s286 + $0x98] sm:$0xf]
      %v326 = vld [vmem:[%s286 + $0x9c] sm:$0xf]
      %v327 = vld [vmem:[%s286 + $0xa0] sm:$0xf]
      %v328 = vld [vmem:[%s286 + $0xa4] sm:$0xf]
      %v329 = vld [vmem:[%s286 + $0xa8] sm:$0xf]
      %v330 = vld [vmem:[%s286 + $0xac] sm:$0xf]
      %v331 = vld [vmem:[%s286 + $0xb0] sm:$0xf]
      %v332 = vld [vmem:[%s286 + $0xb4] sm:$0xf]
      %v333 = vld [vmem:[%s286 + $0xb8] sm:$0xf]
      %v334 = vld [vmem:[%s286 + $0xbc] sm:$0xf]
      %v335 = vld [vmem:[%s286 + $0xc0] sm:$0xf]
      %v336 = vld [vmem:[%s286 + $0xc4] sm:$0xf]
      %v337 = vld [vmem:[%s286 + $0xc8] sm:$0xf]
      %v338 = vld [vmem:[%s286 + $0xcc] sm:$0xf]
      %v339 = vld [vmem:[%s286 + $0xd0] sm:$0xf]
      %v340 = vld [vmem:[%s286 + $0xd4] sm:$0xf]
      %v341 = vld [vmem:[%s286 + $0xd8] sm:$0xf]
      %v342 = vld [vmem:[%s286 + $0xdc] sm:$0xf]
      %v343 = vld [vmem:[%s286 + $0xe0] sm:$0xf]
      %v344 = vld [vmem:[%s286 + $0xe4] sm:$0xf]
      %v345 = vld [vmem:[%s286 + $0xe8] sm:$0xf]
      %v346 = vld [vmem:[%s286 + $0xec] sm:$0xf]
      %v347 = vld [vmem:[%s286 + $0xf0] sm:$0xf]
      %v348 = vld [vmem:[%s286 + $0xf4] sm:$0xf]
      %v349 = vld [vmem:[%s286 + $0xf8] sm:$0xf]
      %v350 = vld [vmem:[%s286 + $0xfc] sm:$0xf]
      %v351 = vld [vmem:[%s286 + $0x100] sm:$0xf]
      %v352 = vld [vmem:[%s286 + $0x104] sm:$0xf]
      %v353 = vld [vmem:[%s286 + $0x108] sm:$0xf]
      %v354 = vld [vmem:[%s286 + $0x10c] sm:$0xf]
      %v355 = vld [vmem:[%s286 + $0x110] sm:$0xf]
      %v356 = vld [vmem:[%s286 + $0x114] sm:$0xf]
      %v357 = vld [vmem:[%s286 + $0x118] sm:$0xf]
      %v358 = vld [vmem:[%s286 + $0x11c] sm:$0xf]
      %v359 = vld [vmem:[%s286 + $0x120] sm:$0xf]
      %v360 = vld [vmem:[%s286 + $0x124] sm:$0xf]
      %v361 = vld [vmem:[%s286 + $0x128] sm:$0xf]
      %v362 = vld [vmem:[%s286 + $0x12c] sm:$0xf]
      %v363 = vld [vmem:[%s286 + $0x130] sm:$0xf]
      %v364 = vld [vmem:[%s286 + $0x134] sm:$0xf]
      %v365 = vld [vmem:[%s286 + $0x138] sm:$0xf]
      %v366 = vld [vmem:[%s286 + $0x13c] sm:$0xf]
      %v367 = vld [vmem:[%s286 + $0x140] sm:$0xf]
      %v368 = vld [vmem:[%s286 + $0x144] sm:$0xf]
      %v369 = vld [vmem:[%s286 + $0x148] sm:$0xf]
      %v370 = vld [vmem:[%s286 + $0x14c] sm:$0xf]
      %v371 = vld [vmem:[%s286 + $0x150] sm:$0xf]
      %v372 = vld [vmem:[%s286 + $0x154] sm:$0xf]
      %v373 = vld [vmem:[%s286 + $0x158] sm:$0xf]
      %v374 = vld [vmem:[%s286 + $0x15c] sm:$0xf]
      %v375 = vld [vmem:[%s286 + $0x160] sm:$0xf]
      %v376 = vld [vmem:[%s286 + $0x164] sm:$0xf]
      %v377 = vld [vmem:[%s286 + $0x168] sm:$0xf]
      %v378 = vld [vmem:[%s286 + $0x16c] sm:$0xf]
      %v379 = vld [vmem:[%s286 + $0x170] sm:$0xf]
      %v380 = vld [vmem:[%s286 + $0x174] sm:$0xf]
      %v381 = vld [vmem:[%s286 + $0x178] sm:$0xf]
      %v382 = vld [vmem:[%s286 + $0x17c] sm:$0xf]
      %v383 = vld [vmem:[%s286 + $0x180] sm:$0xf]
      %v384 = vld [vmem:[%s286 + $0x184] sm:$0xf]
      %v385 = vld [vmem:[%s286 + $0x188] sm:$0xf]
      %v386 = vld [vmem:[%s286 + $0x18c] sm:$0xf]
      %v387 = vld [vmem:[%s286 + $0x190] sm:$0xf]
      %v388 = vld [vmem:[%s286 + $0x194] sm:$0xf]
      %v389 = vld [vmem:[%s286 + $0x198] sm:$0xf]
      %v390 = vld [vmem:[%s286 + $0x19c] sm:$0xf]
      %v391 = vld [vmem:[%s286 + $0x1a0] sm:$0xf]
      %v392 = vld [vmem:[%s286 + $0x1a4] sm:$0xf]
      %v393 = vld [vmem:[%s286 + $0x1a8] sm:$0xf]
      %v394 = vld [vmem:[%s286 + $0x1ac] sm:$0xf]
      %v395 = vld [vmem:[%s286 + $0x1b0] sm:$0xf]
      %v396 = vld [vmem:[%s286 + $0x1b4] sm:$0xf]
      %v397 = vld [vmem:[%s286 + $0x1b8] sm:$0xf]
      %v398 = vld [vmem:[%s286 + $0x1bc] sm:$0xf]
      %v399 = vld [vmem:[%s286 + $0x1c0] sm:$0xf]
      %v400 = vld [vmem:[%s286 + $0x1c4] sm:$0xf]
      %v401 = vld [vmem:[%s286 + $0x1c8] sm:$0xf]
      %v402 = vld [vmem:[%s286 + $0x1cc] sm:$0xf]
      %v403 = vld [vmem:[%s286 + $0x1d0] sm:$0xf]
      %v404 = vld [vmem:[%s286 + $0x1d4] sm:$0xf]
      %v405 = vld [vmem:[%s286 + $0x1d8] sm:$0xf]
      %v406 = vld [vmem:[%s286 + $0x1dc] sm:$0xf]
      %v407 = vld [vmem:[%s286 + $0x1e0] sm:$0xf]
      %v408 = vld [vmem:[%s286 + $0x1e4] sm:$0xf]
      %v409 = vld [vmem:[%s286 + $0x1e8] sm:$0xf]
      %v410 = vld [vmem:[%s286 + $0x1ec] sm:$0xf]
      %v411 = vld [vmem:[%s286 + $0x1f0] sm:$0xf]
      %v412 = vld [vmem:[%s286 + $0x1f4] sm:$0xf]
      %v413 = vld [vmem:[%s286 + $0x1f8] sm:$0xf]
      %v414 = vld [vmem:[%s286 + $0x1fc] sm:$0xf]
      %v415 = vld [vmem:[%s261] sm:$0xf]
      %v416 = vld [vmem:[%s261 + $0x4] sm:$0xf]
      %v417 = vld [vmem:[%s261 + $0x8] sm:$0xf]
      %v418 = vld [vmem:[%s261 + $0xc] sm:$0x3]
      %v547 = vunpack.c.l.b16 %v287
      %v548 = vunpack.c.l.b16 %v288
      %v549 = vunpack.c.l.b16 %v289
      %v550 = vunpack.c.l.b16 %v290
      %v551 = vunpack.c.l.b16 %v291
      %v552 = vunpack.c.l.b16 %v292
      %v553 = vunpack.c.l.b16 %v293
      %v554 = vunpack.c.l.b16 %v294
      %v555 = vunpack.c.l.b16 %v295
      %v556 = vunpack.c.l.b16 %v296
      %v557 = vunpack.c.l.b16 %v297
      %v558 = vunpack.c.l.b16 %v298
      %v559 = vunpack.c.l.b16 %v299
      %v560 = vunpack.c.l.b16 %v300
      %v561 = vunpack.c.l.b16 %v301
      %v562 = vunpack.c.l.b16 %v302
      %v563 = vunpack.c.l.b16 %v303
      %v564 = vunpack.c.l.b16 %v304
      %v565 = vunpack.c.l.b16 %v305
      %v566 = vunpack.c.l.b16 %v306
      %v567 = vunpack.c.l.b16 %v307
      %v568 = vunpack.c.l.b16 %v308
      %v569 = vunpack.c.l.b16 %v309
      %v570 = vunpack.c.l.b16 %v310
      %v571 = vunpack.c.l.b16 %v311
      %v572 = vunpack.c.l.b16 %v312
      %v573 = vunpack.c.l.b16 %v313
      %v574 = vunpack.c.l.b16 %v314
      %v575 = vunpack.c.l.b16 %v315
      %v576 = vunpack.c.l.b16 %v316
      %v577 = vunpack.c.l.b16 %v317
      %v578 = vunpack.c.l.b16 %v318
      %v579 = vunpack.c.l.b16 %v319
      %v580 = vunpack.c.l.b16 %v320
      %v581 = vunpack.c.l.b16 %v321
      %v582 = vunpack.c.l.b16 %v322
      %v583 = vunpack.c.l.b16 %v323
      %v584 = vunpack.c.l.b16 %v324
      %v585 = vunpack.c.l.b16 %v325
      %v586 = vunpack.c.l.b16 %v326
      %v587 = vunpack.c.l.b16 %v327
      %v588 = vunpack.c.l.b16 %v328
      %v589 = vunpack.c.l.b16 %v329
      %v590 = vunpack.c.l.b16 %v330
      %v591 = vunpack.c.l.b16 %v331
      %v592 = vunpack.c.l.b16 %v332
      %v593 = vunpack.c.l.b16 %v333
      %v594 = vunpack.c.l.b16 %v334
      %v595 = vunpack.c.l.b16 %v335
      %v596 = vunpack.c.l.b16 %v336
      %v597 = vunpack.c.l.b16 %v337
      %v598 = vunpack.c.l.b16 %v338
      %v599 = vunpack.c.l.b16 %v339
      %v600 = vunpack.c.l.b16 %v340
      %v601 = vunpack.c.l.b16 %v341
      %v602 = vunpack.c.l.b16 %v342
      %v603 = vunpack.c.l.b16 %v343
      %v604 = vunpack.c.l.b16 %v344
      %v605 = vunpack.c.l.b16 %v345
      %v606 = vunpack.c.l.b16 %v346
      %v607 = vunpack.c.l.b16 %v347
      %v608 = vunpack.c.l.b16 %v348
      %v609 = vunpack.c.l.b16 %v349
      %v610 = vunpack.c.l.b16 %v350
      %v611 = vunpack.c.l.b16 %v351
      %v612 = vunpack.c.l.b16 %v352
      %v613 = vunpack.c.l.b16 %v353
      %v614 = vunpack.c.l.b16 %v354
      %v615 = vunpack.c.l.b16 %v355
      %v616 = vunpack.c.l.b16 %v356
      %v617 = vunpack.c.l.b16 %v357
      %v618 = vunpack.c.l.b16 %v358
      %v619 = vunpack.c.l.b16 %v359
      %v620 = vunpack.c.l.b16 %v360
      %v621 = vunpack.c.l.b16 %v361
      %v622 = vunpack.c.l.b16 %v362
      %v623 = vunpack.c.l.b16 %v363
      %v624 = vunpack.c.l.b16 %v364
      %v625 = vunpack.c.l.b16 %v365
      %v626 = vunpack.c.l.b16 %v366
      %v627 = vunpack.c.l.b16 %v367
      %v628 = vunpack.c.l.b16 %v368
      %v629 = vunpack.c.l.b16 %v369
      %v630 = vunpack.c.l.b16 %v370
      %v631 = vunpack.c.l.b16 %v371
      %v632 = vunpack.c.l.b16 %v372
      %v633 = vunpack.c.l.b16 %v373
      %v634 = vunpack.c.l.b16 %v374
      %v635 = vunpack.c.l.b16 %v375
      %v636 = vunpack.c.l.b16 %v376
      %v637 = vunpack.c.l.b16 %v377
      %v638 = vunpack.c.l.b16 %v378
      %v639 = vunpack.c.l.b16 %v379
      %v640 = vunpack.c.l.b16 %v380
      %v641 = vunpack.c.l.b16 %v381
      %v642 = vunpack.c.l.b16 %v382
      %v643 = vunpack.c.l.b16 %v383
      %v644 = vunpack.c.l.b16 %v384
      %v645 = vunpack.c.l.b16 %v385
      %v646 = vunpack.c.l.b16 %v386
      %v647 = vunpack.c.l.b16 %v387
      %v648 = vunpack.c.l.b16 %v388
      %v649 = vunpack.c.l.b16 %v389
      %v650 = vunpack.c.l.b16 %v390
      %v651 = vunpack.c.l.b16 %v391
      %v652 = vunpack.c.l.b16 %v392
      %v653 = vunpack.c.l.b16 %v393
      %v654 = vunpack.c.l.b16 %v394
      %v655 = vunpack.c.l.b16 %v395
      %v656 = vunpack.c.l.b16 %v396
      %v657 = vunpack.c.l.b16 %v397
      %v658 = vunpack.c.l.b16 %v398
      %v659 = vunpack.c.l.b16 %v399
      %v660 = vunpack.c.l.b16 %v400
      %v661 = vunpack.c.l.b16 %v401
      %v662 = vunpack.c.l.b16 %v402
      %v663 = vunpack.c.l.b16 %v403
      %v664 = vunpack.c.l.b16 %v404
      %v665 = vunpack.c.l.b16 %v405
      %v666 = vunpack.c.l.b16 %v406
      %v667 = vunpack.c.l.b16 %v407
      %v668 = vunpack.c.l.b16 %v408
      %v669 = vunpack.c.l.b16 %v409
      %v670 = vunpack.c.l.b16 %v410
      %v671 = vunpack.c.l.b16 %v411
      %v672 = vunpack.c.l.b16 %v412
      %v673 = vunpack.c.l.b16 %v413
      %v674 = vunpack.c.l.b16 %v414
      %v675 = vpack.c.b16 %v548, %v547
      %v676 = vpack.c.b16 %v550, %v549
      %v677 = vpack.c.b16 %v552, %v551
      %v678 = vpack.c.b16 %v554, %v553
      %v679 = vpack.c.b16 %v556, %v555
      %v680 = vpack.c.b16 %v558, %v557
      %v681 = vpack.c.b16 %v560, %v559
      %v682 = vpack.c.b16 %v562, %v561
      %v683 = vpack.c.b16 %v564, %v563
      %v684 = vpack.c.b16 %v566, %v565
      %v685 = vpack.c.b16 %v568, %v567
      %v686 = vpack.c.b16 %v570, %v569
      %v687 = vpack.c.b16 %v572, %v571
      %v688 = vpack.c.b16 %v574, %v573
      %v689 = vpack.c.b16 %v576, %v575
      %v690 = vpack.c.b16 %v578, %v577
      %v691 = vpack.c.b16 %v580, %v579
      %v692 = vpack.c.b16 %v582, %v581
      %v693 = vpack.c.b16 %v584, %v583
      %v694 = vpack.c.b16 %v586, %v585
      %v695 = vpack.c.b16 %v588, %v587
      %v696 = vpack.c.b16 %v590, %v589
      %v697 = vpack.c.b16 %v592, %v591
      %v698 = vpack.c.b16 %v594, %v593
      %v699 = vpack.c.b16 %v596, %v595
      %v700 = vpack.c.b16 %v598, %v597
      %v701 = vpack.c.b16 %v600, %v599
      %v702 = vpack.c.b16 %v602, %v601
      %v703 = vpack.c.b16 %v604, %v603
      %v704 = vpack.c.b16 %v606, %v605
      %v705 = vpack.c.b16 %v608, %v607
      %v706 = vpack.c.b16 %v610, %v609
      %v707 = vpack.c.b16 %v612, %v611
      %v708 = vpack.c.b16 %v614, %v613
      %v709 = vpack.c.b16 %v616, %v615
      %v710 = vpack.c.b16 %v618, %v617
      %v711 = vpack.c.b16 %v620, %v619
      %v712 = vpack.c.b16 %v622, %v621
      %v713 = vpack.c.b16 %v624, %v623
      %v714 = vpack.c.b16 %v626, %v625
      %v715 = vpack.c.b16 %v628, %v627
      %v716 = vpack.c.b16 %v630, %v629
      %v717 = vpack.c.b16 %v632, %v631
      %v718 = vpack.c.b16 %v634, %v633
      %v719 = vpack.c.b16 %v636, %v635
      %v720 = vpack.c.b16 %v638, %v637
      %v721 = vpack.c.b16 %v640, %v639
      %v722 = vpack.c.b16 %v642, %v641
      %v723 = vpack.c.b16 %v644, %v643
      %v724 = vpack.c.b16 %v646, %v645
      %v725 = vpack.c.b16 %v648, %v647
      %v726 = vpack.c.b16 %v650, %v649
      %v727 = vpack.c.b16 %v652, %v651
      %v728 = vpack.c.b16 %v654, %v653
      %v729 = vpack.c.b16 %v656, %v655
      %v730 = vpack.c.b16 %v658, %v657
      %v731 = vpack.c.b16 %v660, %v659
      %v732 = vpack.c.b16 %v662, %v661
      %v733 = vpack.c.b16 %v664, %v663
      %v734 = vpack.c.b16 %v666, %v665
      %v735 = vpack.c.b16 %v668, %v667
      %v736 = vpack.c.b16 %v670, %v669
      %v737 = vpack.c.b16 %v672, %v671
      %v738 = vpack.c.b16 %v674, %v673
      %v743 = vunpack.c.l.b16 %v415
      %v744 = vunpack.c.l.b16 %v416
      %v745 = vunpack.c.l.b16 %v417
      %v746 = vunpack.c.l.b16 %v418
      %v747 = vpack.c.b16 %v744, %v743
      %v748 = vpack.c.b16 %v746, %v745
      %vm750 = vcmask 220160
      %v752 = vsel %vm750, %v675, 0
      %v755 = vsel %vm750, %v676, 0
      %v758 = vsel %vm750, %v677, 0
      %v761 = vsel %vm750, %v678, 0
      %v764 = vsel %vm750, %v679, 0
      %v767 = vsel %vm750, %v680, 0
      %v770 = vsel %vm750, %v681, 0
      %v773 = vsel %vm750, %v682, 0
      %v776 = vsel %vm750, %v683, 0
      %v779 = vsel %vm750, %v684, 0
      %v782 = vsel %vm750, %v685, 0
      %v785 = vsel %vm750, %v686, 0
      %v788 = vsel %vm750, %v687, 0
      %v791 = vsel %vm750, %v688, 0
      %v794 = vsel %vm750, %v689, 0
      %v797 = vsel %vm750, %v690, 0
      %v800 = vsel %vm750, %v691, 0
      %v803 = vsel %vm750, %v692, 0
      %v806 = vsel %vm750, %v693, 0
      %v809 = vsel %vm750, %v694, 0
      %v812 = vsel %vm750, %v695, 0
      %v815 = vsel %vm750, %v696, 0
      %v818 = vsel %vm750, %v697, 0
      %v821 = vsel %vm750, %v698, 0
      %v824 = vsel %vm750, %v699, 0
      %v827 = vsel %vm750, %v700, 0
      %v830 = vsel %vm750, %v701, 0
      %v833 = vsel %vm750, %v702, 0
      %v836 = vsel %vm750, %v703, 0
      %v839 = vsel %vm750, %v704, 0
      %v842 = vsel %vm750, %v705, 0
      %v845 = vsel %vm750, %v706, 0
      %v848 = vsel %vm750, %v707, 0
      %v851 = vsel %vm750, %v708, 0
      %v854 = vsel %vm750, %v709, 0
      %v857 = vsel %vm750, %v710, 0
      %v860 = vsel %vm750, %v711, 0
      %v863 = vsel %vm750, %v712, 0
      %v866 = vsel %vm750, %v713, 0
      %v869 = vsel %vm750, %v714, 0
      %v872 = vsel %vm750, %v715, 0
      %v875 = vsel %vm750, %v716, 0
      %v878 = vsel %vm750, %v717, 0
      %v881 = vsel %vm750, %v718, 0
      %v884 = vsel %vm750, %v719, 0
      %v887 = vsel %vm750, %v720, 0
      %v890 = vsel %vm750, %v721, 0
      %v893 = vsel %vm750, %v722, 0
      %v896 = vsel %vm750, %v723, 0
      %v899 = vsel %vm750, %v724, 0
      %v902 = vsel %vm750, %v725, 0
      %v905 = vsel %vm750, %v726, 0
      %v908 = vsel %vm750, %v727, 0
      %v911 = vsel %vm750, %v728, 0
      %v914 = vsel %vm750, %v729, 0
      %v917 = vsel %vm750, %v730, 0
      %v920 = vsel %vm750, %v731, 0
      %v923 = vsel %vm750, %v732, 0
      %v926 = vsel %vm750, %v733, 0
      %v929 = vsel %vm750, %v734, 0
      %v932 = vsel %vm750, %v735, 0
      %v935 = vsel %vm750, %v736, 0
      %v938 = vsel %vm750, %v737, 0
      %v941 = vsel %vm750, %v738, 0
      %vm943 = vcmask 1044480
      %vm944 = vcmask 1045504
      %v945 = vsel %vm943, 4294967295, 65535
      %v946 = vsel %vm944, %v945, 0
      %v948 = vand.u32 %v748, %v946
      %950 = vmatpush.bf16.msra.mxu0 0
      %951 = vmatpush.bf16.msra.mxu0 0
      %952 = vmatpush.bf16.msra.mxu0 0
      %953 = vmatpush.bf16.msra.mxu0 0
      %954 = vmatpush.bf16.msra.mxu0 0
      %955 = vmatpush.bf16.msra.mxu0 0
      %956 = vmatpush.bf16.msra.mxu0 %v948
      %957 = vmatpush.bf16.msra.mxu0 %v747
      %958 = vmatmul.bf16.gmra.mxu0 %v752
      %v959 = vpop.f32.mrf.mxu0
      %v960 = vadd.f32 0.0, %v959
      %v961 = vpop.f32.mrf.mxu0
      %v962 = vadd.f32 0.0, %v961
      %963 = vmatmul.bf16.gmra.mxu0 %v755
      %v964 = vpop.f32.mrf.mxu0
      %v965 = vadd.f32 0.0, %v964
      %v966 = vpop.f32.mrf.mxu0
      %v967 = vadd.f32 0.0, %v966
      %968 = vmatmul.bf16.gmra.mxu0 %v758
      %v969 = vpop.f32.mrf.mxu0
      %v970 = vadd.f32 0.0, %v969
      %v971 = vpop.f32.mrf.mxu0
      %v972 = vadd.f32 0.0, %v971
      %973 = vmatmul.bf16.gmra.mxu0 %v761
      %v974 = vpop.f32.mrf.mxu0
      %v975 = vadd.f32 0.0, %v974
      %v976 = vpop.f32.mrf.mxu0
      %v977 = vadd.f32 0.0, %v976
      %978 = vmatmul.bf16.gmra.mxu0 %v764
      %v979 = vpop.f32.mrf.mxu0
      %v980 = vadd.f32 0.0, %v979
      %v981 = vpop.f32.mrf.mxu0
      %v982 = vadd.f32 0.0, %v981
      %983 = vmatmul.bf16.gmra.mxu0 %v767
      %v984 = vpop.f32.mrf.mxu0
      %v985 = vadd.f32 0.0, %v984
      %v986 = vpop.f32.mrf.mxu0
      %v987 = vadd.f32 0.0, %v986
      %988 = vmatmul.bf16.gmra.mxu0 %v770
      %v989 = vpop.f32.mrf.mxu0
      %v990 = vadd.f32 0.0, %v989
      %v991 = vpop.f32.mrf.mxu0
      %v992 = vadd.f32 0.0, %v991
      %993 = vmatmul.bf16.gmra.mxu0 %v773
      %v994 = vpop.f32.mrf.mxu0
      %v995 = vadd.f32 0.0, %v994
      %v996 = vpop.f32.mrf.mxu0
      %v997 = vadd.f32 0.0, %v996
      %998 = vmatmul.bf16.gmra.mxu0 %v776
      %v999 = vpop.f32.mrf.mxu0
      %v1000 = vadd.f32 0.0, %v999
      %v1001 = vpop.f32.mrf.mxu0
      %v1002 = vadd.f32 0.0, %v1001
      %1003 = vmatmul.bf16.gmra.mxu0 %v779
      %v1004 = vpop.f32.mrf.mxu0
      %v1005 = vadd.f32 0.0, %v1004
      %v1006 = vpop.f32.mrf.mxu0
      %v1007 = vadd.f32 0.0, %v1006
      %1008 = vmatmul.bf16.gmra.mxu0 %v782
      %v1009 = vpop.f32.mrf.mxu0
      %v1010 = vadd.f32 0.0, %v1009
      %v1011 = vpop.f32.mrf.mxu0
      %v1012 = vadd.f32 0.0, %v1011
      %1013 = vmatmul.bf16.gmra.mxu0 %v785
      %v1014 = vpop.f32.mrf.mxu0
      %v1015 = vadd.f32 0.0, %v1014
      %v1016 = vpop.f32.mrf.mxu0
      %v1017 = vadd.f32 0.0, %v1016
      %1018 = vmatmul.bf16.gmra.mxu0 %v788
      %v1019 = vpop.f32.mrf.mxu0
      %v1020 = vadd.f32 0.0, %v1019
      %v1021 = vpop.f32.mrf.mxu0
      %v1022 = vadd.f32 0.0, %v1021
      %1023 = vmatmul.bf16.gmra.mxu0 %v791
      %v1024 = vpop.f32.mrf.mxu0
      %v1025 = vadd.f32 0.0, %v1024
      %v1026 = vpop.f32.mrf.mxu0
      %v1027 = vadd.f32 0.0, %v1026
      %1028 = vmatmul.bf16.gmra.mxu0 %v794
      %v1029 = vpop.f32.mrf.mxu0
      %v1030 = vadd.f32 0.0, %v1029
      %v1031 = vpop.f32.mrf.mxu0
      %v1032 = vadd.f32 0.0, %v1031
      %1033 = vmatmul.bf16.gmra.mxu0 %v797
      %v1034 = vpop.f32.mrf.mxu0
      %v1035 = vadd.f32 0.0, %v1034
      %v1036 = vpop.f32.mrf.mxu0
      %v1037 = vadd.f32 0.0, %v1036
      %1038 = vmatmul.bf16.gmra.mxu0 %v800
      %v1039 = vpop.f32.mrf.mxu0
      %v1040 = vadd.f32 0.0, %v1039
      %v1041 = vpop.f32.mrf.mxu0
      %v1042 = vadd.f32 0.0, %v1041
      %1043 = vmatmul.bf16.gmra.mxu0 %v803
      %v1044 = vpop.f32.mrf.mxu0
      %v1045 = vadd.f32 0.0, %v1044
      %v1046 = vpop.f32.mrf.mxu0
      %v1047 = vadd.f32 0.0, %v1046
      %1048 = vmatmul.bf16.gmra.mxu0 %v806
      %v1049 = vpop.f32.mrf.mxu0
      %v1050 = vadd.f32 0.0, %v1049
      %v1051 = vpop.f32.mrf.mxu0
      %v1052 = vadd.f32 0.0, %v1051
      %1053 = vmatmul.bf16.gmra.mxu0 %v809
      %v1054 = vpop.f32.mrf.mxu0
      %v1055 = vadd.f32 0.0, %v1054
      %v1056 = vpop.f32.mrf.mxu0
      %v1057 = vadd.f32 0.0, %v1056
      %1058 = vmatmul.bf16.gmra.mxu0 %v812
      %v1059 = vpop.f32.mrf.mxu0
      %v1060 = vadd.f32 0.0, %v1059
      %v1061 = vpop.f32.mrf.mxu0
      %v1062 = vadd.f32 0.0, %v1061
      %1063 = vmatmul.bf16.gmra.mxu0 %v815
      %v1064 = vpop.f32.mrf.mxu0
      %v1065 = vadd.f32 0.0, %v1064
      %v1066 = vpop.f32.mrf.mxu0
      %v1067 = vadd.f32 0.0, %v1066
      %1068 = vmatmul.bf16.gmra.mxu0 %v818
      %v1069 = vpop.f32.mrf.mxu0
      %v1070 = vadd.f32 0.0, %v1069
      %v1071 = vpop.f32.mrf.mxu0
      %v1072 = vadd.f32 0.0, %v1071
      %1073 = vmatmul.bf16.gmra.mxu0 %v821
      %v1074 = vpop.f32.mrf.mxu0
      %v1075 = vadd.f32 0.0, %v1074
      %v1076 = vpop.f32.mrf.mxu0
      %v1077 = vadd.f32 0.0, %v1076
      %1078 = vmatmul.bf16.gmra.mxu0 %v824
      %v1079 = vpop.f32.mrf.mxu0
      %v1080 = vadd.f32 0.0, %v1079
      %v1081 = vpop.f32.mrf.mxu0
      %v1082 = vadd.f32 0.0, %v1081
      %1083 = vmatmul.bf16.gmra.mxu0 %v827
      %v1084 = vpop.f32.mrf.mxu0
      %v1085 = vadd.f32 0.0, %v1084
      %v1086 = vpop.f32.mrf.mxu0
      %v1087 = vadd.f32 0.0, %v1086
      %1088 = vmatmul.bf16.gmra.mxu0 %v830
      %v1089 = vpop.f32.mrf.mxu0
      %v1090 = vadd.f32 0.0, %v1089
      %v1091 = vpop.f32.mrf.mxu0
      %v1092 = vadd.f32 0.0, %v1091
      %1093 = vmatmul.bf16.gmra.mxu0 %v833
      %v1094 = vpop.f32.mrf.mxu0
      %v1095 = vadd.f32 0.0, %v1094
      %v1096 = vpop.f32.mrf.mxu0
      %v1097 = vadd.f32 0.0, %v1096
      %1098 = vmatmul.bf16.gmra.mxu0 %v836
      %v1099 = vpop.f32.mrf.mxu0
      %v1100 = vadd.f32 0.0, %v1099
      %v1101 = vpop.f32.mrf.mxu0
      %v1102 = vadd.f32 0.0, %v1101
      %1103 = vmatmul.bf16.gmra.mxu0 %v839
      %v1104 = vpop.f32.mrf.mxu0
      %v1105 = vadd.f32 0.0, %v1104
      %v1106 = vpop.f32.mrf.mxu0
      %v1107 = vadd.f32 0.0, %v1106
      %1108 = vmatmul.bf16.gmra.mxu0 %v842
      %v1109 = vpop.f32.mrf.mxu0
      %v1110 = vadd.f32 0.0, %v1109
      %v1111 = vpop.f32.mrf.mxu0
      %v1112 = vadd.f32 0.0, %v1111
      %1113 = vmatmul.bf16.gmra.mxu0 %v845
      %v1114 = vpop.f32.mrf.mxu0
      %v1115 = vadd.f32 0.0, %v1114
      %v1116 = vpop.f32.mrf.mxu0
      %v1117 = vadd.f32 0.0, %v1116
      %1118 = vmatmul.bf16.gmra.mxu0 %v848
      %v1119 = vpop.f32.mrf.mxu0
      %v1120 = vadd.f32 0.0, %v1119
      %v1121 = vpop.f32.mrf.mxu0
      %v1122 = vadd.f32 0.0, %v1121
      %1123 = vmatmul.bf16.gmra.mxu0 %v851
      %v1124 = vpop.f32.mrf.mxu0
      %v1125 = vadd.f32 0.0, %v1124
      %v1126 = vpop.f32.mrf.mxu0
      %v1127 = vadd.f32 0.0, %v1126
      %1128 = vmatmul.bf16.gmra.mxu0 %v854
      %v1129 = vpop.f32.mrf.mxu0
      %v1130 = vadd.f32 0.0, %v1129
      %v1131 = vpop.f32.mrf.mxu0
      %v1132 = vadd.f32 0.0, %v1131
      %1133 = vmatmul.bf16.gmra.mxu0 %v857
      %v1134 = vpop.f32.mrf.mxu0
      %v1135 = vadd.f32 0.0, %v1134
      %v1136 = vpop.f32.mrf.mxu0
      %v1137 = vadd.f32 0.0, %v1136
      %1138 = vmatmul.bf16.gmra.mxu0 %v860
      %v1139 = vpop.f32.mrf.mxu0
      %v1140 = vadd.f32 0.0, %v1139
      %v1141 = vpop.f32.mrf.mxu0
      %v1142 = vadd.f32 0.0, %v1141
      %1143 = vmatmul.bf16.gmra.mxu0 %v863
      %v1144 = vpop.f32.mrf.mxu0
      %v1145 = vadd.f32 0.0, %v1144
      %v1146 = vpop.f32.mrf.mxu0
      %v1147 = vadd.f32 0.0, %v1146
      %1148 = vmatmul.bf16.gmra.mxu0 %v866
      %v1149 = vpop.f32.mrf.mxu0
      %v1150 = vadd.f32 0.0, %v1149
      %v1151 = vpop.f32.mrf.mxu0
      %v1152 = vadd.f32 0.0, %v1151
      %1153 = vmatmul.bf16.gmra.mxu0 %v869
      %v1154 = vpop.f32.mrf.mxu0
      %v1155 = vadd.f32 0.0, %v1154
      %v1156 = vpop.f32.mrf.mxu0
      %v1157 = vadd.f32 0.0, %v1156
      %1158 = vmatmul.bf16.gmra.mxu0 %v872
      %v1159 = vpop.f32.mrf.mxu0
      %v1160 = vadd.f32 0.0, %v1159
      %v1161 = vpop.f32.mrf.mxu0
      %v1162 = vadd.f32 0.0, %v1161
      %1163 = vmatmul.bf16.gmra.mxu0 %v875
      %v1164 = vpop.f32.mrf.mxu0
      %v1165 = vadd.f32 0.0, %v1164
      %v1166 = vpop.f32.mrf.mxu0
      %v1167 = vadd.f32 0.0, %v1166
      %1168 = vmatmul.bf16.gmra.mxu0 %v878
      %v1169 = vpop.f32.mrf.mxu0
      %v1170 = vadd.f32 0.0, %v1169
      %v1171 = vpop.f32.mrf.mxu0
      %v1172 = vadd.f32 0.0, %v1171
      %1173 = vmatmul.bf16.gmra.mxu0 %v881
      %v1174 = vpop.f32.mrf.mxu0
      %v1175 = vadd.f32 0.0, %v1174
      %v1176 = vpop.f32.mrf.mxu0
      %v1177 = vadd.f32 0.0, %v1176
      %1178 = vmatmul.bf16.gmra.mxu0 %v884
      %v1179 = vpop.f32.mrf.mxu0
      %v1180 = vadd.f32 0.0, %v1179
      %v1181 = vpop.f32.mrf.mxu0
      %v1182 = vadd.f32 0.0, %v1181
      %1183 = vmatmul.bf16.gmra.mxu0 %v887
      %v1184 = vpop.f32.mrf.mxu0
      %v1185 = vadd.f32 0.0, %v1184
      %v1186 = vpop.f32.mrf.mxu0
      %v1187 = vadd.f32 0.0, %v1186
      %1188 = vmatmul.bf16.gmra.mxu0 %v890
      %v1189 = vpop.f32.mrf.mxu0
      %v1190 = vadd.f32 0.0, %v1189
      %v1191 = vpop.f32.mrf.mxu0
      %v1192 = vadd.f32 0.0, %v1191
      %1193 = vmatmul.bf16.gmra.mxu0 %v893
      %v1194 = vpop.f32.mrf.mxu0
      %v1195 = vadd.f32 0.0, %v1194
      %v1196 = vpop.f32.mrf.mxu0
      %v1197 = vadd.f32 0.0, %v1196
      %1198 = vmatmul.bf16.gmra.mxu0 %v896
      %v1199 = vpop.f32.mrf.mxu0
      %v1200 = vadd.f32 0.0, %v1199
      %v1201 = vpop.f32.mrf.mxu0
      %v1202 = vadd.f32 0.0, %v1201
      %1203 = vmatmul.bf16.gmra.mxu0 %v899
      %v1204 = vpop.f32.mrf.mxu0
      %v1205 = vadd.f32 0.0, %v1204
      %v1206 = vpop.f32.mrf.mxu0
      %v1207 = vadd.f32 0.0, %v1206
      %1208 = vmatmul.bf16.gmra.mxu0 %v902
      %v1209 = vpop.f32.mrf.mxu0
      %v1210 = vadd.f32 0.0, %v1209
      %v1211 = vpop.f32.mrf.mxu0
      %v1212 = vadd.f32 0.0, %v1211
      %1213 = vmatmul.bf16.gmra.mxu0 %v905
      %v1214 = vpop.f32.mrf.mxu0
      %v1215 = vadd.f32 0.0, %v1214
      %v1216 = vpop.f32.mrf.mxu0
      %v1217 = vadd.f32 0.0, %v1216
      %1218 = vmatmul.bf16.gmra.mxu0 %v908
      %v1219 = vpop.f32.mrf.mxu0
      %v1220 = vadd.f32 0.0, %v1219
      %v1221 = vpop.f32.mrf.mxu0
      %v1222 = vadd.f32 0.0, %v1221
      %1223 = vmatmul.bf16.gmra.mxu0 %v911
      %v1224 = vpop.f32.mrf.mxu0
      %v1225 = vadd.f32 0.0, %v1224
      %v1226 = vpop.f32.mrf.mxu0
      %v1227 = vadd.f32 0.0, %v1226
      %1228 = vmatmul.bf16.gmra.mxu0 %v914
      %v1229 = vpop.f32.mrf.mxu0
      %v1230 = vadd.f32 0.0, %v1229
      %v1231 = vpop.f32.mrf.mxu0
      %v1232 = vadd.f32 0.0, %v1231
      %1233 = vmatmul.bf16.gmra.mxu0 %v917
      %v1234 = vpop.f32.mrf.mxu0
      %v1235 = vadd.f32 0.0, %v1234
      %v1236 = vpop.f32.mrf.mxu0
      %v1237 = vadd.f32 0.0, %v1236
      %1238 = vmatmul.bf16.gmra.mxu0 %v920
      %v1239 = vpop.f32.mrf.mxu0
      %v1240 = vadd.f32 0.0, %v1239
      %v1241 = vpop.f32.mrf.mxu0
      %v1242 = vadd.f32 0.0, %v1241
      %1243 = vmatmul.bf16.gmra.mxu0 %v923
      %v1244 = vpop.f32.mrf.mxu0
      %v1245 = vadd.f32 0.0, %v1244
      %v1246 = vpop.f32.mrf.mxu0
      %v1247 = vadd.f32 0.0, %v1246
      %1248 = vmatmul.bf16.gmra.mxu0 %v926
      %v1249 = vpop.f32.mrf.mxu0
      %v1250 = vadd.f32 0.0, %v1249
      %v1251 = vpop.f32.mrf.mxu0
      %v1252 = vadd.f32 0.0, %v1251
      %1253 = vmatmul.bf16.gmra.mxu0 %v929
      %v1254 = vpop.f32.mrf.mxu0
      %v1255 = vadd.f32 0.0, %v1254
      %v1256 = vpop.f32.mrf.mxu0
      %v1257 = vadd.f32 0.0, %v1256
      %1258 = vmatmul.bf16.gmra.mxu0 %v932
      %v1259 = vpop.f32.mrf.mxu0
      %v1260 = vadd.f32 0.0, %v1259
      %v1261 = vpop.f32.mrf.mxu0
      %v1262 = vadd.f32 0.0, %v1261
      %1263 = vmatmul.bf16.gmra.mxu0 %v935
      %v1264 = vpop.f32.mrf.mxu0
      %v1265 = vadd.f32 0.0, %v1264
      %v1266 = vpop.f32.mrf.mxu0
      %v1267 = vadd.f32 0.0, %v1266
      %1268 = vmatmul.bf16.gmra.mxu0 %v938
      %v1269 = vpop.f32.mrf.mxu0
      %v1270 = vadd.f32 0.0, %v1269
      %v1271 = vpop.f32.mrf.mxu0
      %v1272 = vadd.f32 0.0, %v1271
      %1273 = vmatmul.bf16.gmra.mxu0 %v941
      %v1274 = vpop.f32.mrf.mxu0
      %v1275 = vadd.f32 0.0, %v1274
      %v1276 = vpop.f32.mrf.mxu0
      %v1277 = vadd.f32 0.0, %v1276
      %1278 = vdwg.mxu0
      %v1279 = vld [vmem:[%s264] sm:$0x1]
      %v1281 = vperm.slane %v1279, 0
      %v1283 = vmul.f32 %v960, %v1281
      %v1284 = vmul.f32 %v962, %v1281
      %v1285 = vmul.f32 %v965, %v1281
      %v1286 = vmul.f32 %v967, %v1281
      %v1287 = vmul.f32 %v970, %v1281
      %v1288 = vmul.f32 %v972, %v1281
      %v1289 = vmul.f32 %v975, %v1281
      %v1290 = vmul.f32 %v977, %v1281
      %v1291 = vmul.f32 %v980, %v1281
      %v1292 = vmul.f32 %v982, %v1281
      %v1293 = vmul.f32 %v985, %v1281
      %v1294 = vmul.f32 %v987, %v1281
      %v1295 = vmul.f32 %v990, %v1281
      %v1296 = vmul.f32 %v992, %v1281
      %v1297 = vmul.f32 %v995, %v1281
      %v1298 = vmul.f32 %v997, %v1281
      %v1299 = vmul.f32 %v1000, %v1281
      %v1300 = vmul.f32 %v1002, %v1281
      %v1301 = vmul.f32 %v1005, %v1281
      %v1302 = vmul.f32 %v1007, %v1281
      %v1303 = vmul.f32 %v1010, %v1281
      %v1304 = vmul.f32 %v1012, %v1281
      %v1305 = vmul.f32 %v1015, %v1281
      %v1306 = vmul.f32 %v1017, %v1281
      %v1307 = vmul.f32 %v1020, %v1281
      %v1308 = vmul.f32 %v1022, %v1281
      %v1309 = vmul.f32 %v1025, %v1281
      %v1310 = vmul.f32 %v1027, %v1281
      %v1311 = vmul.f32 %v1030, %v1281
      %v1312 = vmul.f32 %v1032, %v1281
      %v1313 = vmul.f32 %v1035, %v1281
      %v1314 = vmul.f32 %v1037, %v1281
      %v1315 = vmul.f32 %v1040, %v1281
      %v1316 = vmul.f32 %v1042, %v1281
      %v1317 = vmul.f32 %v1045, %v1281
      %v1318 = vmul.f32 %v1047, %v1281
      %v1319 = vmul.f32 %v1050, %v1281
      %v1320 = vmul.f32 %v1052, %v1281
      %v1321 = vmul.f32 %v1055, %v1281
      %v1322 = vmul.f32 %v1057, %v1281
      %v1323 = vmul.f32 %v1060, %v1281
      %v1324 = vmul.f32 %v1062, %v1281
      %v1325 = vmul.f32 %v1065, %v1281
      %v1326 = vmul.f32 %v1067, %v1281
      %v1327 = vmul.f32 %v1070, %v1281
      %v1328 = vmul.f32 %v1072, %v1281
      %v1329 = vmul.f32 %v1075, %v1281
      %v1330 = vmul.f32 %v1077, %v1281
      %v1331 = vmul.f32 %v1080, %v1281
      %v1332 = vmul.f32 %v1082, %v1281
      %v1333 = vmul.f32 %v1085, %v1281
      %v1334 = vmul.f32 %v1087, %v1281
      %v1335 = vmul.f32 %v1090, %v1281
      %v1336 = vmul.f32 %v1092, %v1281
      %v1337 = vmul.f32 %v1095, %v1281
      %v1338 = vmul.f32 %v1097, %v1281
      %v1339 = vmul.f32 %v1100, %v1281
      %v1340 = vmul.f32 %v1102, %v1281
      %v1341 = vmul.f32 %v1105, %v1281
      %v1342 = vmul.f32 %v1107, %v1281
      %v1343 = vmul.f32 %v1110, %v1281
      %v1344 = vmul.f32 %v1112, %v1281
      %v1345 = vmul.f32 %v1115, %v1281
      %v1346 = vmul.f32 %v1117, %v1281
      %v1347 = vmul.f32 %v1120, %v1281
      %v1348 = vmul.f32 %v1122, %v1281
      %v1349 = vmul.f32 %v1125, %v1281
      %v1350 = vmul.f32 %v1127, %v1281
      %v1351 = vmul.f32 %v1130, %v1281
      %v1352 = vmul.f32 %v1132, %v1281
      %v1353 = vmul.f32 %v1135, %v1281
      %v1354 = vmul.f32 %v1137, %v1281
      %v1355 = vmul.f32 %v1140, %v1281
      %v1356 = vmul.f32 %v1142, %v1281
      %v1357 = vmul.f32 %v1145, %v1281
      %v1358 = vmul.f32 %v1147, %v1281
      %v1359 = vmul.f32 %v1150, %v1281
      %v1360 = vmul.f32 %v1152, %v1281
      %v1361 = vmul.f32 %v1155, %v1281
      %v1362 = vmul.f32 %v1157, %v1281
      %v1363 = vmul.f32 %v1160, %v1281
      %v1364 = vmul.f32 %v1162, %v1281
      %v1365 = vmul.f32 %v1165, %v1281
      %v1366 = vmul.f32 %v1167, %v1281
      %v1367 = vmul.f32 %v1170, %v1281
      %v1368 = vmul.f32 %v1172, %v1281
      %v1369 = vmul.f32 %v1175, %v1281
      %v1370 = vmul.f32 %v1177, %v1281
      %v1371 = vmul.f32 %v1180, %v1281
      %v1372 = vmul.f32 %v1182, %v1281
      %v1373 = vmul.f32 %v1185, %v1281
      %v1374 = vmul.f32 %v1187, %v1281
      %v1375 = vmul.f32 %v1190, %v1281
      %v1376 = vmul.f32 %v1192, %v1281
      %v1377 = vmul.f32 %v1195, %v1281
      %v1378 = vmul.f32 %v1197, %v1281
      %v1379 = vmul.f32 %v1200, %v1281
      %v1380 = vmul.f32 %v1202, %v1281
      %v1381 = vmul.f32 %v1205, %v1281
      %v1382 = vmul.f32 %v1207, %v1281
      %v1383 = vmul.f32 %v1210, %v1281
      %v1384 = vmul.f32 %v1212, %v1281
      %v1385 = vmul.f32 %v1215, %v1281
      %v1386 = vmul.f32 %v1217, %v1281
      %v1387 = vmul.f32 %v1220, %v1281
      %v1388 = vmul.f32 %v1222, %v1281
      %v1389 = vmul.f32 %v1225, %v1281
      %v1390 = vmul.f32 %v1227, %v1281
      %v1391 = vmul.f32 %v1230, %v1281
      %v1392 = vmul.f32 %v1232, %v1281
      %v1393 = vmul.f32 %v1235, %v1281
      %v1394 = vmul.f32 %v1237, %v1281
      %v1395 = vmul.f32 %v1240, %v1281
      %v1396 = vmul.f32 %v1242, %v1281
      %v1397 = vmul.f32 %v1245, %v1281
      %v1398 = vmul.f32 %v1247, %v1281
      %v1399 = vmul.f32 %v1250, %v1281
      %v1400 = vmul.f32 %v1252, %v1281
      %v1401 = vmul.f32 %v1255, %v1281
      %v1402 = vmul.f32 %v1257, %v1281
      %v1403 = vmul.f32 %v1260, %v1281
      %v1404 = vmul.f32 %v1262, %v1281
      %v1405 = vmul.f32 %v1265, %v1281
      %v1406 = vmul.f32 %v1267, %v1281
      %v1407 = vmul.f32 %v1270, %v1281
      %v1408 = vmul.f32 %v1272, %v1281
      %v1409 = vmul.f32 %v1275, %v1281
      %v1410 = vmul.f32 %v1277, %v1281
      %v1411 = vld [vmem:[%s267] sm:$0x1]
      %v1413 = vperm.slane %v1411, 0
      %v1415 = vadd.f32 %v1283, %v1413
      %v1416 = vadd.f32 %v1284, %v1413
      %v1417 = vadd.f32 %v1285, %v1413
      %v1418 = vadd.f32 %v1286, %v1413
      %v1419 = vadd.f32 %v1287, %v1413
      %v1420 = vadd.f32 %v1288, %v1413
      %v1421 = vadd.f32 %v1289, %v1413
      %v1422 = vadd.f32 %v1290, %v1413
      %v1423 = vadd.f32 %v1291, %v1413
      %v1424 = vadd.f32 %v1292, %v1413
      %v1425 = vadd.f32 %v1293, %v1413
      %v1426 = vadd.f32 %v1294, %v1413
      %v1427 = vadd.f32 %v1295, %v1413
      %v1428 = vadd.f32 %v1296, %v1413
      %v1429 = vadd.f32 %v1297, %v1413
      %v1430 = vadd.f32 %v1298, %v1413
      %v1431 = vadd.f32 %v1299, %v1413
      %v1432 = vadd.f32 %v1300, %v1413
      %v1433 = vadd.f32 %v1301, %v1413
      %v1434 = vadd.f32 %v1302, %v1413
      %v1435 = vadd.f32 %v1303, %v1413
      %v1436 = vadd.f32 %v1304, %v1413
      %v1437 = vadd.f32 %v1305, %v1413
      %v1438 = vadd.f32 %v1306, %v1413
      %v1439 = vadd.f32 %v1307, %v1413
      %v1440 = vadd.f32 %v1308, %v1413
      %v1441 = vadd.f32 %v1309, %v1413
      %v1442 = vadd.f32 %v1310, %v1413
      %v1443 = vadd.f32 %v1311, %v1413
      %v1444 = vadd.f32 %v1312, %v1413
      %v1445 = vadd.f32 %v1313, %v1413
      %v1446 = vadd.f32 %v1314, %v1413
      %v1447 = vadd.f32 %v1315, %v1413
      %v1448 = vadd.f32 %v1316, %v1413
      %v1449 = vadd.f32 %v1317, %v1413
      %v1450 = vadd.f32 %v1318, %v1413
      %v1451 = vadd.f32 %v1319, %v1413
      %v1452 = vadd.f32 %v1320, %v1413
      %v1453 = vadd.f32 %v1321, %v1413
      %v1454 = vadd.f32 %v1322, %v1413
      %v1455 = vadd.f32 %v1323, %v1413
      %v1456 = vadd.f32 %v1324, %v1413
      %v1457 = vadd.f32 %v1325, %v1413
      %v1458 = vadd.f32 %v1326, %v1413
      %v1459 = vadd.f32 %v1327, %v1413
      %v1460 = vadd.f32 %v1328, %v1413
      %v1461 = vadd.f32 %v1329, %v1413
      %v1462 = vadd.f32 %v1330, %v1413
      %v1463 = vadd.f32 %v1331, %v1413
      %v1464 = vadd.f32 %v1332, %v1413
      %v1465 = vadd.f32 %v1333, %v1413
      %v1466 = vadd.f32 %v1334, %v1413
      %v1467 = vadd.f32 %v1335, %v1413
      %v1468 = vadd.f32 %v1336, %v1413
      %v1469 = vadd.f32 %v1337, %v1413
      %v1470 = vadd.f32 %v1338, %v1413
      %v1471 = vadd.f32 %v1339, %v1413
      %v1472 = vadd.f32 %v1340, %v1413
      %v1473 = vadd.f32 %v1341, %v1413
      %v1474 = vadd.f32 %v1342, %v1413
      %v1475 = vadd.f32 %v1343, %v1413
      %v1476 = vadd.f32 %v1344, %v1413
      %v1477 = vadd.f32 %v1345, %v1413
      %v1478 = vadd.f32 %v1346, %v1413
      %v1479 = vadd.f32 %v1347, %v1413
      %v1480 = vadd.f32 %v1348, %v1413
      %v1481 = vadd.f32 %v1349, %v1413
      %v1482 = vadd.f32 %v1350, %v1413
      %v1483 = vadd.f32 %v1351, %v1413
      %v1484 = vadd.f32 %v1352, %v1413
      %v1485 = vadd.f32 %v1353, %v1413
      %v1486 = vadd.f32 %v1354, %v1413
      %v1487 = vadd.f32 %v1355, %v1413
      %v1488 = vadd.f32 %v1356, %v1413
      %v1489 = vadd.f32 %v1357, %v1413
      %v1490 = vadd.f32 %v1358, %v1413
      %v1491 = vadd.f32 %v1359, %v1413
      %v1492 = vadd.f32 %v1360, %v1413
      %v1493 = vadd.f32 %v1361, %v1413
      %v1494 = vadd.f32 %v1362, %v1413
      %v1495 = vadd.f32 %v1363, %v1413
      %v1496 = vadd.f32 %v1364, %v1413
      %v1497 = vadd.f32 %v1365, %v1413
      %v1498 = vadd.f32 %v1366, %v1413
      %v1499 = vadd.f32 %v1367, %v1413
      %v1500 = vadd.f32 %v1368, %v1413
      %v1501 = vadd.f32 %v1369, %v1413
      %v1502 = vadd.f32 %v1370, %v1413
      %v1503 = vadd.f32 %v1371, %v1413
      %v1504 = vadd.f32 %v1372, %v1413
      %v1505 = vadd.f32 %v1373, %v1413
      %v1506 = vadd.f32 %v1374, %v1413
      %v1507 = vadd.f32 %v1375, %v1413
      %v1508 = vadd.f32 %v1376, %v1413
      %v1509 = vadd.f32 %v1377, %v1413
      %v1510 = vadd.f32 %v1378, %v1413
      %v1511 = vadd.f32 %v1379, %v1413
      %v1512 = vadd.f32 %v1380, %v1413
      %v1513 = vadd.f32 %v1381, %v1413
      %v1514 = vadd.f32 %v1382, %v1413
      %v1515 = vadd.f32 %v1383, %v1413
      %v1516 = vadd.f32 %v1384, %v1413
      %v1517 = vadd.f32 %v1385, %v1413
      %v1518 = vadd.f32 %v1386, %v1413
      %v1519 = vadd.f32 %v1387, %v1413
      %v1520 = vadd.f32 %v1388, %v1413
      %v1521 = vadd.f32 %v1389, %v1413
      %v1522 = vadd.f32 %v1390, %v1413
      %v1523 = vadd.f32 %v1391, %v1413
      %v1524 = vadd.f32 %v1392, %v1413
      %v1525 = vadd.f32 %v1393, %v1413
      %v1526 = vadd.f32 %v1394, %v1413
      %v1527 = vadd.f32 %v1395, %v1413
      %v1528 = vadd.f32 %v1396, %v1413
      %v1529 = vadd.f32 %v1397, %v1413
      %v1530 = vadd.f32 %v1398, %v1413
      %v1531 = vadd.f32 %v1399, %v1413
      %v1532 = vadd.f32 %v1400, %v1413
      %v1533 = vadd.f32 %v1401, %v1413
      %v1534 = vadd.f32 %v1402, %v1413
      %v1535 = vadd.f32 %v1403, %v1413
      %v1536 = vadd.f32 %v1404, %v1413
      %v1537 = vadd.f32 %v1405, %v1413
      %v1538 = vadd.f32 %v1406, %v1413
      %v1539 = vadd.f32 %v1407, %v1413
      %v1540 = vadd.f32 %v1408, %v1413
      %v1541 = vadd.f32 %v1409, %v1413
      %v1542 = vadd.f32 %v1410, %v1413
      %vm1543 = vcmp.ge.f32.partialorder %v1415, 0.0
      %vm1544 = vcmp.ge.f32.partialorder %v1416, 0.0
      %vm1545 = vcmp.ge.f32.partialorder %v1417, 0.0
      %vm1546 = vcmp.ge.f32.partialorder %v1418, 0.0
      %vm1547 = vcmp.ge.f32.partialorder %v1419, 0.0
      %vm1548 = vcmp.ge.f32.partialorder %v1420, 0.0
      %vm1549 = vcmp.ge.f32.partialorder %v1421, 0.0
      %vm1550 = vcmp.ge.f32.partialorder %v1422, 0.0
      %vm1551 = vcmp.ge.f32.partialorder %v1423, 0.0
      %vm1552 = vcmp.ge.f32.partialorder %v1424, 0.0
      %vm1553 = vcmp.ge.f32.partialorder %v1425, 0.0
      %vm1554 = vcmp.ge.f32.partialorder %v1426, 0.0
      %vm1555 = vcmp.ge.f32.partialorder %v1427, 0.0
      %vm1556 = vcmp.ge.f32.partialorder %v1428, 0.0
      %vm1557 = vcmp.ge.f32.partialorder %v1429, 0.0
      %vm1558 = vcmp.ge.f32.partialorder %v1430, 0.0
      %vm1559 = vcmp.ge.f32.partialorder %v1431, 0.0
      %vm1560 = vcmp.ge.f32.partialorder %v1432, 0.0
      %vm1561 = vcmp.ge.f32.partialorder %v1433, 0.0
      %vm1562 = vcmp.ge.f32.partialorder %v1434, 0.0
      %vm1563 = vcmp.ge.f32.partialorder %v1435, 0.0
      %vm1564 = vcmp.ge.f32.partialorder %v1436, 0.0
      %vm1565 = vcmp.ge.f32.partialorder %v1437, 0.0
      %vm1566 = vcmp.ge.f32.partialorder %v1438, 0.0
      %vm1567 = vcmp.ge.f32.partialorder %v1439, 0.0
      %vm1568 = vcmp.ge.f32.partialorder %v1440, 0.0
      %vm1569 = vcmp.ge.f32.partialorder %v1441, 0.0
      %vm1570 = vcmp.ge.f32.partialorder %v1442, 0.0
      %vm1571 = vcmp.ge.f32.partialorder %v1443, 0.0
      %vm1572 = vcmp.ge.f32.partialorder %v1444, 0.0
      %vm1573 = vcmp.ge.f32.partialorder %v1445, 0.0
      %vm1574 = vcmp.ge.f32.partialorder %v1446, 0.0
      %vm1575 = vcmp.ge.f32.partialorder %v1447, 0.0
      %vm1576 = vcmp.ge.f32.partialorder %v1448, 0.0
      %vm1577 = vcmp.ge.f32.partialorder %v1449, 0.0
      %vm1578 = vcmp.ge.f32.partialorder %v1450, 0.0
      %vm1579 = vcmp.ge.f32.partialorder %v1451, 0.0
      %vm1580 = vcmp.ge.f32.partialorder %v1452, 0.0
      %vm1581 = vcmp.ge.f32.partialorder %v1453, 0.0
      %vm1582 = vcmp.ge.f32.partialorder %v1454, 0.0
      %vm1583 = vcmp.ge.f32.partialorder %v1455, 0.0
      %vm1584 = vcmp.ge.f32.partialorder %v1456, 0.0
      %vm1585 = vcmp.ge.f32.partialorder %v1457, 0.0
      %vm1586 = vcmp.ge.f32.partialorder %v1458, 0.0
      %vm1587 = vcmp.ge.f32.partialorder %v1459, 0.0
      %vm1588 = vcmp.ge.f32.partialorder %v1460, 0.0
      %vm1589 = vcmp.ge.f32.partialorder %v1461, 0.0
      %vm1590 = vcmp.ge.f32.partialorder %v1462, 0.0
      %vm1591 = vcmp.ge.f32.partialorder %v1463, 0.0
      %vm1592 = vcmp.ge.f32.partialorder %v1464, 0.0
      %vm1593 = vcmp.ge.f32.partialorder %v1465, 0.0
      %vm1594 = vcmp.ge.f32.partialorder %v1466, 0.0
      %vm1595 = vcmp.ge.f32.partialorder %v1467, 0.0
      %vm1596 = vcmp.ge.f32.partialorder %v1468, 0.0
      %vm1597 = vcmp.ge.f32.partialorder %v1469, 0.0
      %vm1598 = vcmp.ge.f32.partialorder %v1470, 0.0
      %vm1599 = vcmp.ge.f32.partialorder %v1471, 0.0
      %vm1600 = vcmp.ge.f32.partialorder %v1472, 0.0
      %vm1601 = vcmp.ge.f32.partialorder %v1473, 0.0
      %vm1602 = vcmp.ge.f32.partialorder %v1474, 0.0
      %vm1603 = vcmp.ge.f32.partialorder %v1475, 0.0
      %vm1604 = vcmp.ge.f32.partialorder %v1476, 0.0
      %vm1605 = vcmp.ge.f32.partialorder %v1477, 0.0
      %vm1606 = vcmp.ge.f32.partialorder %v1478, 0.0
      %vm1607 = vcmp.ge.f32.partialorder %v1479, 0.0
      %vm1608 = vcmp.ge.f32.partialorder %v1480, 0.0
      %vm1609 = vcmp.ge.f32.partialorder %v1481, 0.0
      %vm1610 = vcmp.ge.f32.partialorder %v1482, 0.0
      %vm1611 = vcmp.ge.f32.partialorder %v1483, 0.0
      %vm1612 = vcmp.ge.f32.partialorder %v1484, 0.0
      %vm1613 = vcmp.ge.f32.partialorder %v1485, 0.0
      %vm1614 = vcmp.ge.f32.partialorder %v1486, 0.0
      %vm1615 = vcmp.ge.f32.partialorder %v1487, 0.0
      %vm1616 = vcmp.ge.f32.partialorder %v1488, 0.0
      %vm1617 = vcmp.ge.f32.partialorder %v1489, 0.0
      %vm1618 = vcmp.ge.f32.partialorder %v1490, 0.0
      %vm1619 = vcmp.ge.f32.partialorder %v1491, 0.0
      %vm1620 = vcmp.ge.f32.partialorder %v1492, 0.0
      %vm1621 = vcmp.ge.f32.partialorder %v1493, 0.0
      %vm1622 = vcmp.ge.f32.partialorder %v1494, 0.0
      %vm1623 = vcmp.ge.f32.partialorder %v1495, 0.0
      %vm1624 = vcmp.ge.f32.partialorder %v1496, 0.0
      %vm1625 = vcmp.ge.f32.partialorder %v1497, 0.0
      %vm1626 = vcmp.ge.f32.partialorder %v1498, 0.0
      %vm1627 = vcmp.ge.f32.partialorder %v1499, 0.0
      %vm1628 = vcmp.ge.f32.partialorder %v1500, 0.0
      %vm1629 = vcmp.ge.f32.partialorder %v1501, 0.0
      %vm1630 = vcmp.ge.f32.partialorder %v1502, 0.0
      %vm1631 = vcmp.ge.f32.partialorder %v1503, 0.0
      %vm1632 = vcmp.ge.f32.partialorder %v1504, 0.0
      %vm1633 = vcmp.ge.f32.partialorder %v1505, 0.0
      %vm1634 = vcmp.ge.f32.partialorder %v1506, 0.0
      %vm1635 = vcmp.ge.f32.partialorder %v1507, 0.0
      %vm1636 = vcmp.ge.f32.partialorder %v1508, 0.0
      %vm1637 = vcmp.ge.f32.partialorder %v1509, 0.0
      %vm1638 = vcmp.ge.f32.partialorder %v1510, 0.0
      %vm1639 = vcmp.ge.f32.partialorder %v1511, 0.0
      %vm1640 = vcmp.ge.f32.partialorder %v1512, 0.0
      %vm1641 = vcmp.ge.f32.partialorder %v1513, 0.0
      %vm1642 = vcmp.ge.f32.partialorder %v1514, 0.0
      %vm1643 = vcmp.ge.f32.partialorder %v1515, 0.0
      %vm1644 = vcmp.ge.f32.partialorder %v1516, 0.0
      %vm1645 = vcmp.ge.f32.partialorder %v1517, 0.0
      %vm1646 = vcmp.ge.f32.partialorder %v1518, 0.0
      %vm1647 = vcmp.ge.f32.partialorder %v1519, 0.0
      %vm1648 = vcmp.ge.f32.partialorder %v1520, 0.0
      %vm1649 = vcmp.ge.f32.partialorder %v1521, 0.0
      %vm1650 = vcmp.ge.f32.partialorder %v1522, 0.0
      %vm1651 = vcmp.ge.f32.partialorder %v1523, 0.0
      %vm1652 = vcmp.ge.f32.partialorder %v1524, 0.0
      %vm1653 = vcmp.ge.f32.partialorder %v1525, 0.0
      %vm1654 = vcmp.ge.f32.partialorder %v1526, 0.0
      %vm1655 = vcmp.ge.f32.partialorder %v1527, 0.0
      %vm1656 = vcmp.ge.f32.partialorder %v1528, 0.0
      %vm1657 = vcmp.ge.f32.partialorder %v1529, 0.0
      %vm1658 = vcmp.ge.f32.partialorder %v1530, 0.0
      %vm1659 = vcmp.ge.f32.partialorder %v1531, 0.0
      %vm1660 = vcmp.ge.f32.partialorder %v1532, 0.0
      %vm1661 = vcmp.ge.f32.partialorder %v1533, 0.0
      %vm1662 = vcmp.ge.f32.partialorder %v1534, 0.0
      %vm1663 = vcmp.ge.f32.partialorder %v1535, 0.0
      %vm1664 = vcmp.ge.f32.partialorder %v1536, 0.0
      %vm1665 = vcmp.ge.f32.partialorder %v1537, 0.0
      %vm1666 = vcmp.ge.f32.partialorder %v1538, 0.0
      %vm1667 = vcmp.ge.f32.partialorder %v1539, 0.0
      %vm1668 = vcmp.ge.f32.partialorder %v1540, 0.0
      %vm1669 = vcmp.ge.f32.partialorder %v1541, 0.0
      %vm1670 = vcmp.ge.f32.partialorder %v1542, 0.0
      %v1671 = vmul.f32 %v1415, 0.1
      %v1672 = vmul.f32 %v1416, 0.1
      %v1673 = vmul.f32 %v1417, 0.1
      %v1674 = vmul.f32 %v1418, 0.1
      %v1675 = vmul.f32 %v1419, 0.1
      %v1676 = vmul.f32 %v1420, 0.1
      %v1677 = vmul.f32 %v1421, 0.1
      %v1678 = vmul.f32 %v1422, 0.1
      %v1679 = vmul.f32 %v1423, 0.1
      %v1680 = vmul.f32 %v1424, 0.1
      %v1681 = vmul.f32 %v1425, 0.1
      %v1682 = vmul.f32 %v1426, 0.1
      %v1683 = vmul.f32 %v1427, 0.1
      %v1684 = vmul.f32 %v1428, 0.1
      %v1685 = vmul.f32 %v1429, 0.1
      %v1686 = vmul.f32 %v1430, 0.1
      %v1687 = vmul.f32 %v1431, 0.1
      %v1688 = vmul.f32 %v1432, 0.1
      %v1689 = vmul.f32 %v1433, 0.1
      %v1690 = vmul.f32 %v1434, 0.1
      %v1691 = vmul.f32 %v1435, 0.1
      %v1692 = vmul.f32 %v1436, 0.1
      %v1693 = vmul.f32 %v1437, 0.1
      %v1694 = vmul.f32 %v1438, 0.1
      %v1695 = vmul.f32 %v1439, 0.1
      %v1696 = vmul.f32 %v1440, 0.1
      %v1697 = vmul.f32 %v1441, 0.1
      %v1698 = vmul.f32 %v1442, 0.1
      %v1699 = vmul.f32 %v1443, 0.1
      %v1700 = vmul.f32 %v1444, 0.1
      %v1701 = vmul.f32 %v1445, 0.1
      %v1702 = vmul.f32 %v1446, 0.1
      %v1703 = vmul.f32 %v1447, 0.1
      %v1704 = vmul.f32 %v1448, 0.1
      %v1705 = vmul.f32 %v1449, 0.1
      %v1706 = vmul.f32 %v1450, 0.1
      %v1707 = vmul.f32 %v1451, 0.1
      %v1708 = vmul.f32 %v1452, 0.1
      %v1709 = vmul.f32 %v1453, 0.1
      %v1710 = vmul.f32 %v1454, 0.1
      %v1711 = vmul.f32 %v1455, 0.1
      %v1712 = vmul.f32 %v1456, 0.1
      %v1713 = vmul.f32 %v1457, 0.1
      %v1714 = vmul.f32 %v1458, 0.1
      %v1715 = vmul.f32 %v1459, 0.1
      %v1716 = vmul.f32 %v1460, 0.1
      %v1717 = vmul.f32 %v1461, 0.1
      %v1718 = vmul.f32 %v1462, 0.1
      %v1719 = vmul.f32 %v1463, 0.1
      %v1720 = vmul.f32 %v1464, 0.1
      %v1721 = vmul.f32 %v1465, 0.1
      %v1722 = vmul.f32 %v1466, 0.1
      %v1723 = vmul.f32 %v1467, 0.1
      %v1724 = vmul.f32 %v1468, 0.1
      %v1725 = vmul.f32 %v1469, 0.1
      %v1726 = vmul.f32 %v1470, 0.1
      %v1727 = vmul.f32 %v1471, 0.1
      %v1728 = vmul.f32 %v1472, 0.1
      %v1729 = vmul.f32 %v1473, 0.1
      %v1730 = vmul.f32 %v1474, 0.1
      %v1731 = vmul.f32 %v1475, 0.1
      %v1732 = vmul.f32 %v1476, 0.1
      %v1733 = vmul.f32 %v1477, 0.1
      %v1734 = vmul.f32 %v1478, 0.1
      %v1735 = vmul.f32 %v1479, 0.1
      %v1736 = vmul.f32 %v1480, 0.1
      %v1737 = vmul.f32 %v1481, 0.1
      %v1738 = vmul.f32 %v1482, 0.1
      %v1739 = vmul.f32 %v1483, 0.1
      %v1740 = vmul.f32 %v1484, 0.1
      %v1741 = vmul.f32 %v1485, 0.1
      %v1742 = vmul.f32 %v1486, 0.1
      %v1743 = vmul.f32 %v1487, 0.1
      %v1744 = vmul.f32 %v1488, 0.1
      %v1745 = vmul.f32 %v1489, 0.1
      %v1746 = vmul.f32 %v1490, 0.1
      %v1747 = vmul.f32 %v1491, 0.1
      %v1748 = vmul.f32 %v1492, 0.1
      %v1749 = vmul.f32 %v1493, 0.1
      %v1750 = vmul.f32 %v1494, 0.1
      %v1751 = vmul.f32 %v1495, 0.1
      %v1752 = vmul.f32 %v1496, 0.1
      %v1753 = vmul.f32 %v1497, 0.1
      %v1754 = vmul.f32 %v1498, 0.1
      %v1755 = vmul.f32 %v1499, 0.1
      %v1756 = vmul.f32 %v1500, 0.1
      %v1757 = vmul.f32 %v1501, 0.1
      %v1758 = vmul.f32 %v1502, 0.1
      %v1759 = vmul.f32 %v1503, 0.1
      %v1760 = vmul.f32 %v1504, 0.1
      %v1761 = vmul.f32 %v1505, 0.1
      %v1762 = vmul.f32 %v1506, 0.1
      %v1763 = vmul.f32 %v1507, 0.1
      %v1764 = vmul.f32 %v1508, 0.1
      %v1765 = vmul.f32 %v1509, 0.1
      %v1766 = vmul.f32 %v1510, 0.1
      %v1767 = vmul.f32 %v1511, 0.1
      %v1768 = vmul.f32 %v1512, 0.1
      %v1769 = vmul.f32 %v1513, 0.1
      %v1770 = vmul.f32 %v1514, 0.1
      %v1771 = vmul.f32 %v1515, 0.1
      %v1772 = vmul.f32 %v1516, 0.1
      %v1773 = vmul.f32 %v1517, 0.1
      %v1774 = vmul.f32 %v1518, 0.1
      %v1775 = vmul.f32 %v1519, 0.1
      %v1776 = vmul.f32 %v1520, 0.1
      %v1777 = vmul.f32 %v1521, 0.1
      %v1778 = vmul.f32 %v1522, 0.1
      %v1779 = vmul.f32 %v1523, 0.1
      %v1780 = vmul.f32 %v1524, 0.1
      %v1781 = vmul.f32 %v1525, 0.1
      %v1782 = vmul.f32 %v1526, 0.1
      %v1783 = vmul.f32 %v1527, 0.1
      %v1784 = vmul.f32 %v1528, 0.1
      %v1785 = vmul.f32 %v1529, 0.1
      %v1786 = vmul.f32 %v1530, 0.1
      %v1787 = vmul.f32 %v1531, 0.1
      %v1788 = vmul.f32 %v1532, 0.1
      %v1789 = vmul.f32 %v1533, 0.1
      %v1790 = vmul.f32 %v1534, 0.1
      %v1791 = vmul.f32 %v1535, 0.1
      %v1792 = vmul.f32 %v1536, 0.1
      %v1793 = vmul.f32 %v1537, 0.1
      %v1794 = vmul.f32 %v1538, 0.1
      %v1795 = vmul.f32 %v1539, 0.1
      %v1796 = vmul.f32 %v1540, 0.1
      %v1797 = vmul.f32 %v1541, 0.1
      %v1798 = vmul.f32 %v1542, 0.1
      %v1799 = vsel %vm1543, %v1415, %v1671
      %v1800 = vsel %vm1544, %v1416, %v1672
      %v1801 = vsel %vm1545, %v1417, %v1673
      %v1802 = vsel %vm1546, %v1418, %v1674
      %v1803 = vsel %vm1547, %v1419, %v1675
      %v1804 = vsel %vm1548, %v1420, %v1676
      %v1805 = vsel %vm1549, %v1421, %v1677
      %v1806 = vsel %vm1550, %v1422, %v1678
      %v1807 = vsel %vm1551, %v1423, %v1679
      %v1808 = vsel %vm1552, %v1424, %v1680
      %v1809 = vsel %vm1553, %v1425, %v1681
      %v1810 = vsel %vm1554, %v1426, %v1682
      %v1811 = vsel %vm1555, %v1427, %v1683
      %v1812 = vsel %vm1556, %v1428, %v1684
      %v1813 = vsel %vm1557, %v1429, %v1685
      %v1814 = vsel %vm1558, %v1430, %v1686
      %v1815 = vsel %vm1559, %v1431, %v1687
      %v1816 = vsel %vm1560, %v1432, %v1688
      %v1817 = vsel %vm1561, %v1433, %v1689
      %v1818 = vsel %vm1562, %v1434, %v1690
      %v1819 = vsel %vm1563, %v1435, %v1691
      %v1820 = vsel %vm1564, %v1436, %v1692
      %v1821 = vsel %vm1565, %v1437, %v1693
      %v1822 = vsel %vm1566, %v1438, %v1694
      %v1823 = vsel %vm1567, %v1439, %v1695
      %v1824 = vsel %vm1568, %v1440, %v1696
      %v1825 = vsel %vm1569, %v1441, %v1697
      %v1826 = vsel %vm1570, %v1442, %v1698
      %v1827 = vsel %vm1571, %v1443, %v1699
      %v1828 = vsel %vm1572, %v1444, %v1700
      %v1829 = vsel %vm1573, %v1445, %v1701
      %v1830 = vsel %vm1574, %v1446, %v1702
      %v1831 = vsel %vm1575, %v1447, %v1703
      %v1832 = vsel %vm1576, %v1448, %v1704
      %v1833 = vsel %vm1577, %v1449, %v1705
      %v1834 = vsel %vm1578, %v1450, %v1706
      %v1835 = vsel %vm1579, %v1451, %v1707
      %v1836 = vsel %vm1580, %v1452, %v1708
      %v1837 = vsel %vm1581, %v1453, %v1709
      %v1838 = vsel %vm1582, %v1454, %v1710
      %v1839 = vsel %vm1583, %v1455, %v1711
      %v1840 = vsel %vm1584, %v1456, %v1712
      %v1841 = vsel %vm1585, %v1457, %v1713
      %v1842 = vsel %vm1586, %v1458, %v1714
      %v1843 = vsel %vm1587, %v1459, %v1715
      %v1844 = vsel %vm1588, %v1460, %v1716
      %v1845 = vsel %vm1589, %v1461, %v1717
      %v1846 = vsel %vm1590, %v1462, %v1718
      %v1847 = vsel %vm1591, %v1463, %v1719
      %v1848 = vsel %vm1592, %v1464, %v1720
      %v1849 = vsel %vm1593, %v1465, %v1721
      %v1850 = vsel %vm1594, %v1466, %v1722
      %v1851 = vsel %vm1595, %v1467, %v1723
      %v1852 = vsel %vm1596, %v1468, %v1724
      %v1853 = vsel %vm1597, %v1469, %v1725
      %v1854 = vsel %vm1598, %v1470, %v1726
      %v1855 = vsel %vm1599, %v1471, %v1727
      %v1856 = vsel %vm1600, %v1472, %v1728
      %v1857 = vsel %vm1601, %v1473, %v1729
      %v1858 = vsel %vm1602, %v1474, %v1730
      %v1859 = vsel %vm1603, %v1475, %v1731
      %v1860 = vsel %vm1604, %v1476, %v1732
      %v1861 = vsel %vm1605, %v1477, %v1733
      %v1862 = vsel %vm1606, %v1478, %v1734
      %v1863 = vsel %vm1607, %v1479, %v1735
      %v1864 = vsel %vm1608, %v1480, %v1736
      %v1865 = vsel %vm1609, %v1481, %v1737
      %v1866 = vsel %vm1610, %v1482, %v1738
      %v1867 = vsel %vm1611, %v1483, %v1739
      %v1868 = vsel %vm1612, %v1484, %v1740
      %v1869 = vsel %vm1613, %v1485, %v1741
      %v1870 = vsel %vm1614, %v1486, %v1742
      %v1871 = vsel %vm1615, %v1487, %v1743
      %v1872 = vsel %vm1616, %v1488, %v1744
      %v1873 = vsel %vm1617, %v1489, %v1745
      %v1874 = vsel %vm1618, %v1490, %v1746
      %v1875 = vsel %vm1619, %v1491, %v1747
      %v1876 = vsel %vm1620, %v1492, %v1748
      %v1877 = vsel %vm1621, %v1493, %v1749
      %v1878 = vsel %vm1622, %v1494, %v1750
      %v1879 = vsel %vm1623, %v1495, %v1751
      %v1880 = vsel %vm1624, %v1496, %v1752
      %v1881 = vsel %vm1625, %v1497, %v1753
      %v1882 = vsel %vm1626, %v1498, %v1754
      %v1883 = vsel %vm1627, %v1499, %v1755
      %v1884 = vsel %vm1628, %v1500, %v1756
      %v1885 = vsel %vm1629, %v1501, %v1757
      %v1886 = vsel %vm1630, %v1502, %v1758
      %v1887 = vsel %vm1631, %v1503, %v1759
      %v1888 = vsel %vm1632, %v1504, %v1760
      %v1889 = vsel %vm1633, %v1505, %v1761
      %v1890 = vsel %vm1634, %v1506, %v1762
      %v1891 = vsel %vm1635, %v1507, %v1763
      %v1892 = vsel %vm1636, %v1508, %v1764
      %v1893 = vsel %vm1637, %v1509, %v1765
      %v1894 = vsel %vm1638, %v1510, %v1766
      %v1895 = vsel %vm1639, %v1511, %v1767
      %v1896 = vsel %vm1640, %v1512, %v1768
      %v1897 = vsel %vm1641, %v1513, %v1769
      %v1898 = vsel %vm1642, %v1514, %v1770
      %v1899 = vsel %vm1643, %v1515, %v1771
      %v1900 = vsel %vm1644, %v1516, %v1772
      %v1901 = vsel %vm1645, %v1517, %v1773
      %v1902 = vsel %vm1646, %v1518, %v1774
      %v1903 = vsel %vm1647, %v1519, %v1775
      %v1904 = vsel %vm1648, %v1520, %v1776
      %v1905 = vsel %vm1649, %v1521, %v1777
      %v1906 = vsel %vm1650, %v1522, %v1778
      %v1907 = vsel %vm1651, %v1523, %v1779
      %v1908 = vsel %vm1652, %v1524, %v1780
      %v1909 = vsel %vm1653, %v1525, %v1781
      %v1910 = vsel %vm1654, %v1526, %v1782
      %v1911 = vsel %vm1655, %v1527, %v1783
      %v1912 = vsel %vm1656, %v1528, %v1784
      %v1913 = vsel %vm1657, %v1529, %v1785
      %v1914 = vsel %vm1658, %v1530, %v1786
      %v1915 = vsel %vm1659, %v1531, %v1787
      %v1916 = vsel %vm1660, %v1532, %v1788
      %v1917 = vsel %vm1661, %v1533, %v1789
      %v1918 = vsel %vm1662, %v1534, %v1790
      %v1919 = vsel %vm1663, %v1535, %v1791
      %v1920 = vsel %vm1664, %v1536, %v1792
      %v1921 = vsel %vm1665, %v1537, %v1793
      %v1922 = vsel %vm1666, %v1538, %v1794
      %v1923 = vsel %vm1667, %v1539, %v1795
      %v1924 = vsel %vm1668, %v1540, %v1796
      %v1925 = vsel %vm1669, %v1541, %v1797
      %v1926 = vsel %vm1670, %v1542, %v1798
      %v1927 = vmax.f32 %v1799, %v1803
      %v1928 = vmax.f32 %v1800, %v1804
      %v1929 = vmax.f32 %v1801, %v1805
      %v1930 = vmax.f32 %v1802, %v1806
      %v1931 = vmax.f32 %v1807, %v1811
      %v1932 = vmax.f32 %v1808, %v1812
      %v1933 = vmax.f32 %v1809, %v1813
      %v1934 = vmax.f32 %v1810, %v1814
      %v1935 = vmax.f32 %v1815, %v1819
      %v1936 = vmax.f32 %v1816, %v1820
      %v1937 = vmax.f32 %v1817, %v1821
      %v1938 = vmax.f32 %v1818, %v1822
      %v1939 = vmax.f32 %v1823, %v1827
      %v1940 = vmax.f32 %v1824, %v1828
      %v1941 = vmax.f32 %v1825, %v1829
      %v1942 = vmax.f32 %v1826, %v1830
      %v1943 = vmax.f32 %v1831, %v1835
      %v1944 = vmax.f32 %v1832, %v1836
      %v1945 = vmax.f32 %v1833, %v1837
      %v1946 = vmax.f32 %v1834, %v1838
      %v1947 = vmax.f32 %v1839, %v1843
      %v1948 = vmax.f32 %v1840, %v1844
      %v1949 = vmax.f32 %v1841, %v1845
      %v1950 = vmax.f32 %v1842, %v1846
      %v1951 = vmax.f32 %v1847, %v1851
      %v1952 = vmax.f32 %v1848, %v1852
      %v1953 = vmax.f32 %v1849, %v1853
      %v1954 = vmax.f32 %v1850, %v1854
      %v1955 = vmax.f32 %v1855, %v1859
      %v1956 = vmax.f32 %v1856, %v1860
      %v1957 = vmax.f32 %v1857, %v1861
      %v1958 = vmax.f32 %v1858, %v1862
      %v1959 = vmax.f32 %v1863, %v1867
      %v1960 = vmax.f32 %v1864, %v1868
      %v1961 = vmax.f32 %v1865, %v1869
      %v1962 = vmax.f32 %v1866, %v1870
      %v1963 = vmax.f32 %v1871, %v1875
      %v1964 = vmax.f32 %v1872, %v1876
      %v1965 = vmax.f32 %v1873, %v1877
      %v1966 = vmax.f32 %v1874, %v1878
      %v1967 = vmax.f32 %v1879, %v1883
      %v1968 = vmax.f32 %v1880, %v1884
      %v1969 = vmax.f32 %v1881, %v1885
      %v1970 = vmax.f32 %v1882, %v1886
      %v1971 = vmax.f32 %v1887, %v1891
      %v1972 = vmax.f32 %v1888, %v1892
      %v1973 = vmax.f32 %v1889, %v1893
      %v1974 = vmax.f32 %v1890, %v1894
      %v1975 = vmax.f32 %v1895, %v1899
      %v1976 = vmax.f32 %v1896, %v1900
      %v1977 = vmax.f32 %v1897, %v1901
      %v1978 = vmax.f32 %v1898, %v1902
      %v1979 = vmax.f32 %v1903, %v1907
      %v1980 = vmax.f32 %v1904, %v1908
      %v1981 = vmax.f32 %v1905, %v1909
      %v1982 = vmax.f32 %v1906, %v1910
      %v1983 = vmax.f32 %v1911, %v1915
      %v1984 = vmax.f32 %v1912, %v1916
      %v1985 = vmax.f32 %v1913, %v1917
      %v1986 = vmax.f32 %v1914, %v1918
      %v1987 = vmax.f32 %v1919, %v1923
      %v1988 = vmax.f32 %v1920, %v1924
      %v1989 = vmax.f32 %v1921, %v1925
      %v1990 = vmax.f32 %v1922, %v1926
      %v2055 = vrot.slane %v1927, 2
      %v2056 = vrot.slane %v1927, 4
      %v2057 = vrot.slane %v1927, 6
      %v2058 = vrot.slane %v1928, 2
      %v2059 = vrot.slane %v1928, 4
      %v2060 = vrot.slane %v1928, 6
      %v2061 = vrot.slane %v1929, 2
      %v2062 = vrot.slane %v1929, 4
      %v2063 = vrot.slane %v1929, 6
      %v2064 = vrot.slane %v1930, 2
      %v2065 = vrot.slane %v1930, 4
      %v2066 = vrot.slane %v1930, 6
      %v2067 = vrot.slane %v1931, 2
      %v2068 = vrot.slane %v1931, 4
      %v2069 = vrot.slane %v1931, 6
      %v2070 = vrot.slane %v1932, 2
      %v2071 = vrot.slane %v1932, 4
      %v2072 = vrot.slane %v1932, 6
      %v2073 = vrot.slane %v1933, 2
      %v2074 = vrot.slane %v1933, 4
      %v2075 = vrot.slane %v1933, 6
      %v2076 = vrot.slane %v1934, 2
      %v2077 = vrot.slane %v1934, 4
      %v2078 = vrot.slane %v1934, 6
      %v2079 = vrot.slane %v1935, 2
      %v2080 = vrot.slane %v1935, 4
      %v2081 = vrot.slane %v1935, 6
      %v2082 = vrot.slane %v1936, 2
      %v2083 = vrot.slane %v1936, 4
      %v2084 = vrot.slane %v1936, 6
      %v2085 = vrot.slane %v1937, 2
      %v2086 = vrot.slane %v1937, 4
      %v2087 = vrot.slane %v1937, 6
      %v2088 = vrot.slane %v1938, 2
      %v2089 = vrot.slane %v1938, 4
      %v2090 = vrot.slane %v1938, 6
      %v2091 = vrot.slane %v1939, 2
      %v2092 = vrot.slane %v1939, 4
      %v2093 = vrot.slane %v1939, 6
      %v2094 = vrot.slane %v1940, 2
      %v2095 = vrot.slane %v1940, 4
      %v2096 = vrot.slane %v1940, 6
      %v2097 = vrot.slane %v1941, 2
      %v2098 = vrot.slane %v1941, 4
      %v2099 = vrot.slane %v1941, 6
      %v2100 = vrot.slane %v1942, 2
      %v2101 = vrot.slane %v1942, 4
      %v2102 = vrot.slane %v1942, 6
      %v2103 = vrot.slane %v1943, 2
      %v2104 = vrot.slane %v1943, 4
      %v2105 = vrot.slane %v1943, 6
      %v2106 = vrot.slane %v1944, 2
      %v2107 = vrot.slane %v1944, 4
      %v2108 = vrot.slane %v1944, 6
      %v2109 = vrot.slane %v1945, 2
      %v2110 = vrot.slane %v1945, 4
      %v2111 = vrot.slane %v1945, 6
      %v2112 = vrot.slane %v1946, 2
      %v2113 = vrot.slane %v1946, 4
      %v2114 = vrot.slane %v1946, 6
      %v2115 = vrot.slane %v1947, 2
      %v2116 = vrot.slane %v1947, 4
      %v2117 = vrot.slane %v1947, 6
      %v2118 = vrot.slane %v1948, 2
      %v2119 = vrot.slane %v1948, 4
      %v2120 = vrot.slane %v1948, 6
      %v2121 = vrot.slane %v1949, 2
      %v2122 = vrot.slane %v1949, 4
      %v2123 = vrot.slane %v1949, 6
      %v2124 = vrot.slane %v1950, 2
      %v2125 = vrot.slane %v1950, 4
      %v2126 = vrot.slane %v1950, 6
      %v2127 = vrot.slane %v1951, 2
      %v2128 = vrot.slane %v1951, 4
      %v2129 = vrot.slane %v1951, 6
      %v2130 = vrot.slane %v1952, 2
      %v2131 = vrot.slane %v1952, 4
      %v2132 = vrot.slane %v1952, 6
      %v2133 = vrot.slane %v1953, 2
      %v2134 = vrot.slane %v1953, 4
      %v2135 = vrot.slane %v1953, 6
      %v2136 = vrot.slane %v1954, 2
      %v2137 = vrot.slane %v1954, 4
      %v2138 = vrot.slane %v1954, 6
      %v2139 = vrot.slane %v1955, 2
      %v2140 = vrot.slane %v1955, 4
      %v2141 = vrot.slane %v1955, 6
      %v2142 = vrot.slane %v1956, 2
      %v2143 = vrot.slane %v1956, 4
      %v2144 = vrot.slane %v1956, 6
      %v2145 = vrot.slane %v1957, 2
      %v2146 = vrot.slane %v1957, 4
      %v2147 = vrot.slane %v1957, 6
      %v2148 = vrot.slane %v1958, 2
      %v2149 = vrot.slane %v1958, 4
      %v2150 = vrot.slane %v1958, 6
      %v2151 = vrot.slane %v1959, 2
      %v2152 = vrot.slane %v1959, 4
      %v2153 = vrot.slane %v1959, 6
      %v2154 = vrot.slane %v1960, 2
      %v2155 = vrot.slane %v1960, 4
      %v2156 = vrot.slane %v1960, 6
      %v2157 = vrot.slane %v1961, 2
      %v2158 = vrot.slane %v1961, 4
      %v2159 = vrot.slane %v1961, 6
      %v2160 = vrot.slane %v1962, 2
      %v2161 = vrot.slane %v1962, 4
      %v2162 = vrot.slane %v1962, 6
      %v2163 = vrot.slane %v1963, 2
      %v2164 = vrot.slane %v1963, 4
      %v2165 = vrot.slane %v1963, 6
      %v2166 = vrot.slane %v1964, 2
      %v2167 = vrot.slane %v1964, 4
      %v2168 = vrot.slane %v1964, 6
      %v2169 = vrot.slane %v1965, 2
      %v2170 = vrot.slane %v1965, 4
      %v2171 = vrot.slane %v1965, 6
      %v2172 = vrot.slane %v1966, 2
      %v2173 = vrot.slane %v1966, 4
      %v2174 = vrot.slane %v1966, 6
      %v2175 = vrot.slane %v1967, 2
      %v2176 = vrot.slane %v1967, 4
      %v2177 = vrot.slane %v1967, 6
      %v2178 = vrot.slane %v1968, 2
      %v2179 = vrot.slane %v1968, 4
      %v2180 = vrot.slane %v1968, 6
      %v2181 = vrot.slane %v1969, 2
      %v2182 = vrot.slane %v1969, 4
      %v2183 = vrot.slane %v1969, 6
      %v2184 = vrot.slane %v1970, 2
      %v2185 = vrot.slane %v1970, 4
      %v2186 = vrot.slane %v1970, 6
      %v2187 = vrot.slane %v1971, 2
      %v2188 = vrot.slane %v1971, 4
      %v2189 = vrot.slane %v1971, 6
      %v2190 = vrot.slane %v1972, 2
      %v2191 = vrot.slane %v1972, 4
      %v2192 = vrot.slane %v1972, 6
      %v2193 = vrot.slane %v1973, 2
      %v2194 = vrot.slane %v1973, 4
      %v2195 = vrot.slane %v1973, 6
      %v2196 = vrot.slane %v1974, 2
      %v2197 = vrot.slane %v1974, 4
      %v2198 = vrot.slane %v1974, 6
      %v2199 = vrot.slane %v1975, 2
      %v2200 = vrot.slane %v1975, 4
      %v2201 = vrot.slane %v1975, 6
      %v2202 = vrot.slane %v1976, 2
      %v2203 = vrot.slane %v1976, 4
      %v2204 = vrot.slane %v1976, 6
      %v2205 = vrot.slane %v1977, 2
      %v2206 = vrot.slane %v1977, 4
      %v2207 = vrot.slane %v1977, 6
      %v2208 = vrot.slane %v1978, 2
      %v2209 = vrot.slane %v1978, 4
      %v2210 = vrot.slane %v1978, 6
      %v2211 = vrot.slane %v1979, 2
      %v2212 = vrot.slane %v1979, 4
      %v2213 = vrot.slane %v1979, 6
      %v2214 = vrot.slane %v1980, 2
      %v2215 = vrot.slane %v1980, 4
      %v2216 = vrot.slane %v1980, 6
      %v2217 = vrot.slane %v1981, 2
      %v2218 = vrot.slane %v1981, 4
      %v2219 = vrot.slane %v1981, 6
      %v2220 = vrot.slane %v1982, 2
      %v2221 = vrot.slane %v1982, 4
      %v2222 = vrot.slane %v1982, 6
      %v2223 = vrot.slane %v1983, 2
      %v2224 = vrot.slane %v1983, 4
      %v2225 = vrot.slane %v1983, 6
      %v2226 = vrot.slane %v1984, 2
      %v2227 = vrot.slane %v1984, 4
      %v2228 = vrot.slane %v1984, 6
      %v2229 = vrot.slane %v1985, 2
      %v2230 = vrot.slane %v1985, 4
      %v2231 = vrot.slane %v1985, 6
      %v2232 = vrot.slane %v1986, 2
      %v2233 = vrot.slane %v1986, 4
      %v2234 = vrot.slane %v1986, 6
      %v2235 = vrot.slane %v1987, 2
      %v2236 = vrot.slane %v1987, 4
      %v2237 = vrot.slane %v1987, 6
      %v2238 = vrot.slane %v1988, 2
      %v2239 = vrot.slane %v1988, 4
      %v2240 = vrot.slane %v1988, 6
      %v2241 = vrot.slane %v1989, 2
      %v2242 = vrot.slane %v1989, 4
      %v2243 = vrot.slane %v1989, 6
      %v2244 = vrot.slane %v1990, 2
      %v2245 = vrot.slane %v1990, 4
      %v2246 = vrot.slane %v1990, 6
      %v2439 = vrot.slane %v1927, 7
      %v2440 = vrot.slane %v2439, 2
      %v2441 = vrot.slane %v2055, 7
      %v2442 = vrot.slane %v2441, 2
      %v2443 = vrot.slane %v2056, 7
      %v2444 = vrot.slane %v2443, 2
      %v2445 = vrot.slane %v2057, 7
      %v2446 = vrot.slane %v2445, 2
      %v2447 = vrot.slane %v1928, 7
      %v2448 = vrot.slane %v2447, 2
      %v2449 = vrot.slane %v2058, 7
      %v2450 = vrot.slane %v2449, 2
      %v2451 = vrot.slane %v2059, 7
      %v2452 = vrot.slane %v2451, 2
      %v2453 = vrot.slane %v2060, 7
      %v2454 = vrot.slane %v2453, 2
      %v2455 = vrot.slane %v1929, 7
      %v2456 = vrot.slane %v2455, 2
      %v2457 = vrot.slane %v2061, 7
      %v2458 = vrot.slane %v2457, 2
      %v2459 = vrot.slane %v2062, 7
      %v2460 = vrot.slane %v2459, 2
      %v2461 = vrot.slane %v2063, 7
      %v2462 = vrot.slane %v2461, 2
      %v2463 = vrot.slane %v1930, 7
      %v2464 = vrot.slane %v2463, 2
      %v2465 = vrot.slane %v2064, 7
      %v2466 = vrot.slane %v2465, 2
      %v2467 = vrot.slane %v2065, 7
      %v2468 = vrot.slane %v2467, 2
      %v2469 = vrot.slane %v2066, 7
      %v2470 = vrot.slane %v2469, 2
      %v2471 = vrot.slane %v1931, 7
      %v2472 = vrot.slane %v2471, 2
      %v2473 = vrot.slane %v2067, 7
      %v2474 = vrot.slane %v2473, 2
      %v2475 = vrot.slane %v2068, 7
      %v2476 = vrot.slane %v2475, 2
      %v2477 = vrot.slane %v2069, 7
      %v2478 = vrot.slane %v2477, 2
      %v2479 = vrot.slane %v1932, 7
      %v2480 = vrot.slane %v2479, 2
      %v2481 = vrot.slane %v2070, 7
      %v2482 = vrot.slane %v2481, 2
      %v2483 = vrot.slane %v2071, 7
      %v2484 = vrot.slane %v2483, 2
      %v2485 = vrot.slane %v2072, 7
      %v2486 = vrot.slane %v2485, 2
      %v2487 = vrot.slane %v1933, 7
      %v2488 = vrot.slane %v2487, 2
      %v2489 = vrot.slane %v2073, 7
      %v2490 = vrot.slane %v2489, 2
      %v2491 = vrot.slane %v2074, 7
      %v2492 = vrot.slane %v2491, 2
      %v2493 = vrot.slane %v2075, 7
      %v2494 = vrot.slane %v2493, 2
      %v2495 = vrot.slane %v1934, 7
      %v2496 = vrot.slane %v2495, 2
      %v2497 = vrot.slane %v2076, 7
      %v2498 = vrot.slane %v2497, 2
      %v2499 = vrot.slane %v2077, 7
      %v2500 = vrot.slane %v2499, 2
      %v2501 = vrot.slane %v2078, 7
      %v2502 = vrot.slane %v2501, 2
      %v2503 = vrot.slane %v1935, 7
      %v2504 = vrot.slane %v2503, 2
      %v2505 = vrot.slane %v2079, 7
      %v2506 = vrot.slane %v2505, 2
      %v2507 = vrot.slane %v2080, 7
      %v2508 = vrot.slane %v2507, 2
      %v2509 = vrot.slane %v2081, 7
      %v2510 = vrot.slane %v2509, 2
      %v2511 = vrot.slane %v1936, 7
      %v2512 = vrot.slane %v2511, 2
      %v2513 = vrot.slane %v2082, 7
      %v2514 = vrot.slane %v2513, 2
      %v2515 = vrot.slane %v2083, 7
      %v2516 = vrot.slane %v2515, 2
      %v2517 = vrot.slane %v2084, 7
      %v2518 = vrot.slane %v2517, 2
      %v2519 = vrot.slane %v1937, 7
      %v2520 = vrot.slane %v2519, 2
      %v2521 = vrot.slane %v2085, 7
      %v2522 = vrot.slane %v2521, 2
      %v2523 = vrot.slane %v2086, 7
      %v2524 = vrot.slane %v2523, 2
      %v2525 = vrot.slane %v2087, 7
      %v2526 = vrot.slane %v2525, 2
      %v2527 = vrot.slane %v1938, 7
      %v2528 = vrot.slane %v2527, 2
      %v2529 = vrot.slane %v2088, 7
      %v2530 = vrot.slane %v2529, 2
      %v2531 = vrot.slane %v2089, 7
      %v2532 = vrot.slane %v2531, 2
      %v2533 = vrot.slane %v2090, 7
      %v2534 = vrot.slane %v2533, 2
      %v2535 = vrot.slane %v1939, 7
      %v2536 = vrot.slane %v2535, 2
      %v2537 = vrot.slane %v2091, 7
      %v2538 = vrot.slane %v2537, 2
      %v2539 = vrot.slane %v2092, 7
      %v2540 = vrot.slane %v2539, 2
      %v2541 = vrot.slane %v2093, 7
      %v2542 = vrot.slane %v2541, 2
      %v2543 = vrot.slane %v1940, 7
      %v2544 = vrot.slane %v2543, 2
      %v2545 = vrot.slane %v2094, 7
      %v2546 = vrot.slane %v2545, 2
      %v2547 = vrot.slane %v2095, 7
      %v2548 = vrot.slane %v2547, 2
      %v2549 = vrot.slane %v2096, 7
      %v2550 = vrot.slane %v2549, 2
      %v2551 = vrot.slane %v1941, 7
      %v2552 = vrot.slane %v2551, 2
      %v2553 = vrot.slane %v2097, 7
      %v2554 = vrot.slane %v2553, 2
      %v2555 = vrot.slane %v2098, 7
      %v2556 = vrot.slane %v2555, 2
      %v2557 = vrot.slane %v2099, 7
      %v2558 = vrot.slane %v2557, 2
      %v2559 = vrot.slane %v1942, 7
      %v2560 = vrot.slane %v2559, 2
      %v2561 = vrot.slane %v2100, 7
      %v2562 = vrot.slane %v2561, 2
      %v2563 = vrot.slane %v2101, 7
      %v2564 = vrot.slane %v2563, 2
      %v2565 = vrot.slane %v2102, 7
      %v2566 = vrot.slane %v2565, 2
      %v2567 = vrot.slane %v1943, 7
      %v2568 = vrot.slane %v2567, 2
      %v2569 = vrot.slane %v2103, 7
      %v2570 = vrot.slane %v2569, 2
      %v2571 = vrot.slane %v2104, 7
      %v2572 = vrot.slane %v2571, 2
      %v2573 = vrot.slane %v2105, 7
      %v2574 = vrot.slane %v2573, 2
      %v2575 = vrot.slane %v1944, 7
      %v2576 = vrot.slane %v2575, 2
      %v2577 = vrot.slane %v2106, 7
      %v2578 = vrot.slane %v2577, 2
      %v2579 = vrot.slane %v2107, 7
      %v2580 = vrot.slane %v2579, 2
      %v2581 = vrot.slane %v2108, 7
      %v2582 = vrot.slane %v2581, 2
      %v2583 = vrot.slane %v1945, 7
      %v2584 = vrot.slane %v2583, 2
      %v2585 = vrot.slane %v2109, 7
      %v2586 = vrot.slane %v2585, 2
      %v2587 = vrot.slane %v2110, 7
      %v2588 = vrot.slane %v2587, 2
      %v2589 = vrot.slane %v2111, 7
      %v2590 = vrot.slane %v2589, 2
      %v2591 = vrot.slane %v1946, 7
      %v2592 = vrot.slane %v2591, 2
      %v2593 = vrot.slane %v2112, 7
      %v2594 = vrot.slane %v2593, 2
      %v2595 = vrot.slane %v2113, 7
      %v2596 = vrot.slane %v2595, 2
      %v2597 = vrot.slane %v2114, 7
      %v2598 = vrot.slane %v2597, 2
      %v2599 = vrot.slane %v1947, 7
      %v2600 = vrot.slane %v2599, 2
      %v2601 = vrot.slane %v2115, 7
      %v2602 = vrot.slane %v2601, 2
      %v2603 = vrot.slane %v2116, 7
      %v2604 = vrot.slane %v2603, 2
      %v2605 = vrot.slane %v2117, 7
      %v2606 = vrot.slane %v2605, 2
      %v2607 = vrot.slane %v1948, 7
      %v2608 = vrot.slane %v2607, 2
      %v2609 = vrot.slane %v2118, 7
      %v2610 = vrot.slane %v2609, 2
      %v2611 = vrot.slane %v2119, 7
      %v2612 = vrot.slane %v2611, 2
      %v2613 = vrot.slane %v2120, 7
      %v2614 = vrot.slane %v2613, 2
      %v2615 = vrot.slane %v1949, 7
      %v2616 = vrot.slane %v2615, 2
      %v2617 = vrot.slane %v2121, 7
      %v2618 = vrot.slane %v2617, 2
      %v2619 = vrot.slane %v2122, 7
      %v2620 = vrot.slane %v2619, 2
      %v2621 = vrot.slane %v2123, 7
      %v2622 = vrot.slane %v2621, 2
      %v2623 = vrot.slane %v1950, 7
      %v2624 = vrot.slane %v2623, 2
      %v2625 = vrot.slane %v2124, 7
      %v2626 = vrot.slane %v2625, 2
      %v2627 = vrot.slane %v2125, 7
      %v2628 = vrot.slane %v2627, 2
      %v2629 = vrot.slane %v2126, 7
      %v2630 = vrot.slane %v2629, 2
      %v2631 = vrot.slane %v1951, 7
      %v2632 = vrot.slane %v2631, 2
      %v2633 = vrot.slane %v2127, 7
      %v2634 = vrot.slane %v2633, 2
      %v2635 = vrot.slane %v2128, 7
      %v2636 = vrot.slane %v2635, 2
      %v2637 = vrot.slane %v2129, 7
      %v2638 = vrot.slane %v2637, 2
      %v2639 = vrot.slane %v1952, 7
      %v2640 = vrot.slane %v2639, 2
      %v2641 = vrot.slane %v2130, 7
      %v2642 = vrot.slane %v2641, 2
      %v2643 = vrot.slane %v2131, 7
      %v2644 = vrot.slane %v2643, 2
      %v2645 = vrot.slane %v2132, 7
      %v2646 = vrot.slane %v2645, 2
      %v2647 = vrot.slane %v1953, 7
      %v2648 = vrot.slane %v2647, 2
      %v2649 = vrot.slane %v2133, 7
      %v2650 = vrot.slane %v2649, 2
      %v2651 = vrot.slane %v2134, 7
      %v2652 = vrot.slane %v2651, 2
      %v2653 = vrot.slane %v2135, 7
      %v2654 = vrot.slane %v2653, 2
      %v2655 = vrot.slane %v1954, 7
      %v2656 = vrot.slane %v2655, 2
      %v2657 = vrot.slane %v2136, 7
      %v2658 = vrot.slane %v2657, 2
      %v2659 = vrot.slane %v2137, 7
      %v2660 = vrot.slane %v2659, 2
      %v2661 = vrot.slane %v2138, 7
      %v2662 = vrot.slane %v2661, 2
      %v2663 = vrot.slane %v1955, 7
      %v2664 = vrot.slane %v2663, 2
      %v2665 = vrot.slane %v2139, 7
      %v2666 = vrot.slane %v2665, 2
      %v2667 = vrot.slane %v2140, 7
      %v2668 = vrot.slane %v2667, 2
      %v2669 = vrot.slane %v2141, 7
      %v2670 = vrot.slane %v2669, 2
      %v2671 = vrot.slane %v1956, 7
      %v2672 = vrot.slane %v2671, 2
      %v2673 = vrot.slane %v2142, 7
      %v2674 = vrot.slane %v2673, 2
      %v2675 = vrot.slane %v2143, 7
      %v2676 = vrot.slane %v2675, 2
      %v2677 = vrot.slane %v2144, 7
      %v2678 = vrot.slane %v2677, 2
      %v2679 = vrot.slane %v1957, 7
      %v2680 = vrot.slane %v2679, 2
      %v2681 = vrot.slane %v2145, 7
      %v2682 = vrot.slane %v2681, 2
      %v2683 = vrot.slane %v2146, 7
      %v2684 = vrot.slane %v2683, 2
      %v2685 = vrot.slane %v2147, 7
      %v2686 = vrot.slane %v2685, 2
      %v2687 = vrot.slane %v1958, 7
      %v2688 = vrot.slane %v2687, 2
      %v2689 = vrot.slane %v2148, 7
      %v2690 = vrot.slane %v2689, 2
      %v2691 = vrot.slane %v2149, 7
      %v2692 = vrot.slane %v2691, 2
      %v2693 = vrot.slane %v2150, 7
      %v2694 = vrot.slane %v2693, 2
      %v2695 = vrot.slane %v1959, 7
      %v2696 = vrot.slane %v2695, 2
      %v2697 = vrot.slane %v2151, 7
      %v2698 = vrot.slane %v2697, 2
      %v2699 = vrot.slane %v2152, 7
      %v2700 = vrot.slane %v2699, 2
      %v2701 = vrot.slane %v2153, 7
      %v2702 = vrot.slane %v2701, 2
      %v2703 = vrot.slane %v1960, 7
      %v2704 = vrot.slane %v2703, 2
      %v2705 = vrot.slane %v2154, 7
      %v2706 = vrot.slane %v2705, 2
      %v2707 = vrot.slane %v2155, 7
      %v2708 = vrot.slane %v2707, 2
      %v2709 = vrot.slane %v2156, 7
      %v2710 = vrot.slane %v2709, 2
      %v2711 = vrot.slane %v1961, 7
      %v2712 = vrot.slane %v2711, 2
      %v2713 = vrot.slane %v2157, 7
      %v2714 = vrot.slane %v2713, 2
      %v2715 = vrot.slane %v2158, 7
      %v2716 = vrot.slane %v2715, 2
      %v2717 = vrot.slane %v2159, 7
      %v2718 = vrot.slane %v2717, 2
      %v2719 = vrot.slane %v1962, 7
      %v2720 = vrot.slane %v2719, 2
      %v2721 = vrot.slane %v2160, 7
      %v2722 = vrot.slane %v2721, 2
      %v2723 = vrot.slane %v2161, 7
      %v2724 = vrot.slane %v2723, 2
      %v2725 = vrot.slane %v2162, 7
      %v2726 = vrot.slane %v2725, 2
      %v2727 = vrot.slane %v1963, 7
      %v2728 = vrot.slane %v2727, 2
      %v2729 = vrot.slane %v2163, 7
      %v2730 = vrot.slane %v2729, 2
      %v2731 = vrot.slane %v2164, 7
      %v2732 = vrot.slane %v2731, 2
      %v2733 = vrot.slane %v2165, 7
      %v2734 = vrot.slane %v2733, 2
      %v2735 = vrot.slane %v1964, 7
      %v2736 = vrot.slane %v2735, 2
      %v2737 = vrot.slane %v2166, 7
      %v2738 = vrot.slane %v2737, 2
      %v2739 = vrot.slane %v2167, 7
      %v2740 = vrot.slane %v2739, 2
      %v2741 = vrot.slane %v2168, 7
      %v2742 = vrot.slane %v2741, 2
      %v2743 = vrot.slane %v1965, 7
      %v2744 = vrot.slane %v2743, 2
      %v2745 = vrot.slane %v2169, 7
      %v2746 = vrot.slane %v2745, 2
      %v2747 = vrot.slane %v2170, 7
      %v2748 = vrot.slane %v2747, 2
      %v2749 = vrot.slane %v2171, 7
      %v2750 = vrot.slane %v2749, 2
      %v2751 = vrot.slane %v1966, 7
      %v2752 = vrot.slane %v2751, 2
      %v2753 = vrot.slane %v2172, 7
      %v2754 = vrot.slane %v2753, 2
      %v2755 = vrot.slane %v2173, 7
      %v2756 = vrot.slane %v2755, 2
      %v2757 = vrot.slane %v2174, 7
      %v2758 = vrot.slane %v2757, 2
      %v2759 = vrot.slane %v1967, 7
      %v2760 = vrot.slane %v2759, 2
      %v2761 = vrot.slane %v2175, 7
      %v2762 = vrot.slane %v2761, 2
      %v2763 = vrot.slane %v2176, 7
      %v2764 = vrot.slane %v2763, 2
      %v2765 = vrot.slane %v2177, 7
      %v2766 = vrot.slane %v2765, 2
      %v2767 = vrot.slane %v1968, 7
      %v2768 = vrot.slane %v2767, 2
      %v2769 = vrot.slane %v2178, 7
      %v2770 = vrot.slane %v2769, 2
      %v2771 = vrot.slane %v2179, 7
      %v2772 = vrot.slane %v2771, 2
      %v2773 = vrot.slane %v2180, 7
      %v2774 = vrot.slane %v2773, 2
      %v2775 = vrot.slane %v1969, 7
      %v2776 = vrot.slane %v2775, 2
      %v2777 = vrot.slane %v2181, 7
      %v2778 = vrot.slane %v2777, 2
      %v2779 = vrot.slane %v2182, 7
      %v2780 = vrot.slane %v2779, 2
      %v2781 = vrot.slane %v2183, 7
      %v2782 = vrot.slane %v2781, 2
      %v2783 = vrot.slane %v1970, 7
      %v2784 = vrot.slane %v2783, 2
      %v2785 = vrot.slane %v2184, 7
      %v2786 = vrot.slane %v2785, 2
      %v2787 = vrot.slane %v2185, 7
      %v2788 = vrot.slane %v2787, 2
      %v2789 = vrot.slane %v2186, 7
      %v2790 = vrot.slane %v2789, 2
      %v2791 = vrot.slane %v1971, 7
      %v2792 = vrot.slane %v2791, 2
      %v2793 = vrot.slane %v2187, 7
      %v2794 = vrot.slane %v2793, 2
      %v2795 = vrot.slane %v2188, 7
      %v2796 = vrot.slane %v2795, 2
      %v2797 = vrot.slane %v2189, 7
      %v2798 = vrot.slane %v2797, 2
      %v2799 = vrot.slane %v1972, 7
      %v2800 = vrot.slane %v2799, 2
      %v2801 = vrot.slane %v2190, 7
      %v2802 = vrot.slane %v2801, 2
      %v2803 = vrot.slane %v2191, 7
      %v2804 = vrot.slane %v2803, 2
      %v2805 = vrot.slane %v2192, 7
      %v2806 = vrot.slane %v2805, 2
      %v2807 = vrot.slane %v1973, 7
      %v2808 = vrot.slane %v2807, 2
      %v2809 = vrot.slane %v2193, 7
      %v2810 = vrot.slane %v2809, 2
      %v2811 = vrot.slane %v2194, 7
      %v2812 = vrot.slane %v2811, 2
      %v2813 = vrot.slane %v2195, 7
      %v2814 = vrot.slane %v2813, 2
      %v2815 = vrot.slane %v1974, 7
      %v2816 = vrot.slane %v2815, 2
      %v2817 = vrot.slane %v2196, 7
      %v2818 = vrot.slane %v2817, 2
      %v2819 = vrot.slane %v2197, 7
      %v2820 = vrot.slane %v2819, 2
      %v2821 = vrot.slane %v2198, 7
      %v2822 = vrot.slane %v2821, 2
      %v2823 = vrot.slane %v1975, 7
      %v2824 = vrot.slane %v2823, 2
      %v2825 = vrot.slane %v2199, 7
      %v2826 = vrot.slane %v2825, 2
      %v2827 = vrot.slane %v2200, 7
      %v2828 = vrot.slane %v2827, 2
      %v2829 = vrot.slane %v2201, 7
      %v2830 = vrot.slane %v2829, 2
      %v2831 = vrot.slane %v1976, 7
      %v2832 = vrot.slane %v2831, 2
      %v2833 = vrot.slane %v2202, 7
      %v2834 = vrot.slane %v2833, 2
      %v2835 = vrot.slane %v2203, 7
      %v2836 = vrot.slane %v2835, 2
      %v2837 = vrot.slane %v2204, 7
      %v2838 = vrot.slane %v2837, 2
      %v2839 = vrot.slane %v1977, 7
      %v2840 = vrot.slane %v2839, 2
      %v2841 = vrot.slane %v2205, 7
      %v2842 = vrot.slane %v2841, 2
      %v2843 = vrot.slane %v2206, 7
      %v2844 = vrot.slane %v2843, 2
      %v2845 = vrot.slane %v2207, 7
      %v2846 = vrot.slane %v2845, 2
      %v2847 = vrot.slane %v1978, 7
      %v2848 = vrot.slane %v2847, 2
      %v2849 = vrot.slane %v2208, 7
      %v2850 = vrot.slane %v2849, 2
      %v2851 = vrot.slane %v2209, 7
      %v2852 = vrot.slane %v2851, 2
      %v2853 = vrot.slane %v2210, 7
      %v2854 = vrot.slane %v2853, 2
      %v2855 = vrot.slane %v1979, 7
      %v2856 = vrot.slane %v2855, 2
      %v2857 = vrot.slane %v2211, 7
      %v2858 = vrot.slane %v2857, 2
      %v2859 = vrot.slane %v2212, 7
      %v2860 = vrot.slane %v2859, 2
      %v2861 = vrot.slane %v2213, 7
      %v2862 = vrot.slane %v2861, 2
      %v2863 = vrot.slane %v1980, 7
      %v2864 = vrot.slane %v2863, 2
      %v2865 = vrot.slane %v2214, 7
      %v2866 = vrot.slane %v2865, 2
      %v2867 = vrot.slane %v2215, 7
      %v2868 = vrot.slane %v2867, 2
      %v2869 = vrot.slane %v2216, 7
      %v2870 = vrot.slane %v2869, 2
      %v2871 = vrot.slane %v1981, 7
      %v2872 = vrot.slane %v2871, 2
      %v2873 = vrot.slane %v2217, 7
      %v2874 = vrot.slane %v2873, 2
      %v2875 = vrot.slane %v2218, 7
      %v2876 = vrot.slane %v2875, 2
      %v2877 = vrot.slane %v2219, 7
      %v2878 = vrot.slane %v2877, 2
      %v2879 = vrot.slane %v1982, 7
      %v2880 = vrot.slane %v2879, 2
      %v2881 = vrot.slane %v2220, 7
      %v2882 = vrot.slane %v2881, 2
      %v2883 = vrot.slane %v2221, 7
      %v2884 = vrot.slane %v2883, 2
      %v2885 = vrot.slane %v2222, 7
      %v2886 = vrot.slane %v2885, 2
      %v2887 = vrot.slane %v1983, 7
      %v2888 = vrot.slane %v2887, 2
      %v2889 = vrot.slane %v2223, 7
      %v2890 = vrot.slane %v2889, 2
      %v2891 = vrot.slane %v2224, 7
      %v2892 = vrot.slane %v2891, 2
      %v2893 = vrot.slane %v2225, 7
      %v2894 = vrot.slane %v2893, 2
      %v2895 = vrot.slane %v1984, 7
      %v2896 = vrot.slane %v2895, 2
      %v2897 = vrot.slane %v2226, 7
      %v2898 = vrot.slane %v2897, 2
      %v2899 = vrot.slane %v2227, 7
      %v2900 = vrot.slane %v2899, 2
      %v2901 = vrot.slane %v2228, 7
      %v2902 = vrot.slane %v2901, 2
      %v2903 = vrot.slane %v1985, 7
      %v2904 = vrot.slane %v2903, 2
      %v2905 = vrot.slane %v2229, 7
      %v2906 = vrot.slane %v2905, 2
      %v2907 = vrot.slane %v2230, 7
      %v2908 = vrot.slane %v2907, 2
      %v2909 = vrot.slane %v2231, 7
      %v2910 = vrot.slane %v2909, 2
      %v2911 = vrot.slane %v1986, 7
      %v2912 = vrot.slane %v2911, 2
      %v2913 = vrot.slane %v2232, 7
      %v2914 = vrot.slane %v2913, 2
      %v2915 = vrot.slane %v2233, 7
      %v2916 = vrot.slane %v2915, 2
      %v2917 = vrot.slane %v2234, 7
      %v2918 = vrot.slane %v2917, 2
      %v2919 = vrot.slane %v1987, 7
      %v2920 = vrot.slane %v2919, 2
      %v2921 = vrot.slane %v2235, 7
      %v2922 = vrot.slane %v2921, 2
      %v2923 = vrot.slane %v2236, 7
      %v2924 = vrot.slane %v2923, 2
      %v2925 = vrot.slane %v2237, 7
      %v2926 = vrot.slane %v2925, 2
      %v2927 = vrot.slane %v1988, 7
      %v2928 = vrot.slane %v2927, 2
      %v2929 = vrot.slane %v2238, 7
      %v2930 = vrot.slane %v2929, 2
      %v2931 = vrot.slane %v2239, 7
      %v2932 = vrot.slane %v2931, 2
      %v2933 = vrot.slane %v2240, 7
      %v2934 = vrot.slane %v2933, 2
      %v2935 = vrot.slane %v1989, 7
      %v2936 = vrot.slane %v2935, 2
      %v2937 = vrot.slane %v2241, 7
      %v2938 = vrot.slane %v2937, 2
      %v2939 = vrot.slane %v2242, 7
      %v2940 = vrot.slane %v2939, 2
      %v2941 = vrot.slane %v2243, 7
      %v2942 = vrot.slane %v2941, 2
      %v2943 = vrot.slane %v1990, 7
      %v2944 = vrot.slane %v2943, 2
      %v2945 = vrot.slane %v2244, 7
      %v2946 = vrot.slane %v2945, 2
      %v2947 = vrot.slane %v2245, 7
      %v2948 = vrot.slane %v2947, 2
      %v2949 = vrot.slane %v2246, 7
      %v2950 = vrot.slane %v2949, 2
      %v3207 = vmax.f32 %v1927, %v2440
      %v3208 = vmax.f32 %v2055, %v2442
      %v3209 = vmax.f32 %v2056, %v2444
      %v3210 = vmax.f32 %v2057, %v2446
      %v3211 = vmax.f32 %v1928, %v2448
      %v3212 = vmax.f32 %v2058, %v2450
      %v3213 = vmax.f32 %v2059, %v2452
      %v3214 = vmax.f32 %v2060, %v2454
      %v3215 = vmax.f32 %v1929, %v2456
      %v3216 = vmax.f32 %v2061, %v2458
      %v3217 = vmax.f32 %v2062, %v2460
      %v3218 = vmax.f32 %v2063, %v2462
      %v3219 = vmax.f32 %v1930, %v2464
      %v3220 = vmax.f32 %v2064, %v2466
      %v3221 = vmax.f32 %v2065, %v2468
      %v3222 = vmax.f32 %v2066, %v2470
      %v3223 = vmax.f32 %v1931, %v2472
      %v3224 = vmax.f32 %v2067, %v2474
      %v3225 = vmax.f32 %v2068, %v2476
      %v3226 = vmax.f32 %v2069, %v2478
      %v3227 = vmax.f32 %v1932, %v2480
      %v3228 = vmax.f32 %v2070, %v2482
      %v3229 = vmax.f32 %v2071, %v2484
      %v3230 = vmax.f32 %v2072, %v2486
      %v3231 = vmax.f32 %v1933, %v2488
      %v3232 = vmax.f32 %v2073, %v2490
      %v3233 = vmax.f32 %v2074, %v2492
      %v3234 = vmax.f32 %v2075, %v2494
      %v3235 = vmax.f32 %v1934, %v2496
      %v3236 = vmax.f32 %v2076, %v2498
      %v3237 = vmax.f32 %v2077, %v2500
      %v3238 = vmax.f32 %v2078, %v2502
      %v3239 = vmax.f32 %v1935, %v2504
      %v3240 = vmax.f32 %v2079, %v2506
      %v3241 = vmax.f32 %v2080, %v2508
      %v3242 = vmax.f32 %v2081, %v2510
      %v3243 = vmax.f32 %v1936, %v2512
      %v3244 = vmax.f32 %v2082, %v2514
      %v3245 = vmax.f32 %v2083, %v2516
      %v3246 = vmax.f32 %v2084, %v2518
      %v3247 = vmax.f32 %v1937, %v2520
      %v3248 = vmax.f32 %v2085, %v2522
      %v3249 = vmax.f32 %v2086, %v2524
      %v3250 = vmax.f32 %v2087, %v2526
      %v3251 = vmax.f32 %v1938, %v2528
      %v3252 = vmax.f32 %v2088, %v2530
      %v3253 = vmax.f32 %v2089, %v2532
      %v3254 = vmax.f32 %v2090, %v2534
      %v3255 = vmax.f32 %v1939, %v2536
      %v3256 = vmax.f32 %v2091, %v2538
      %v3257 = vmax.f32 %v2092, %v2540
      %v3258 = vmax.f32 %v2093, %v2542
      %v3259 = vmax.f32 %v1940, %v2544
      %v3260 = vmax.f32 %v2094, %v2546
      %v3261 = vmax.f32 %v2095, %v2548
      %v3262 = vmax.f32 %v2096, %v2550
      %v3263 = vmax.f32 %v1941, %v2552
      %v3264 = vmax.f32 %v2097, %v2554
      %v3265 = vmax.f32 %v2098, %v2556
      %v3266 = vmax.f32 %v2099, %v2558
      %v3267 = vmax.f32 %v1942, %v2560
      %v3268 = vmax.f32 %v2100, %v2562
      %v3269 = vmax.f32 %v2101, %v2564
      %v3270 = vmax.f32 %v2102, %v2566
      %v3271 = vmax.f32 %v1943, %v2568
      %v3272 = vmax.f32 %v2103, %v2570
      %v3273 = vmax.f32 %v2104, %v2572
      %v3274 = vmax.f32 %v2105, %v2574
      %v3275 = vmax.f32 %v1944, %v2576
      %v3276 = vmax.f32 %v2106, %v2578
      %v3277 = vmax.f32 %v2107, %v2580
      %v3278 = vmax.f32 %v2108, %v2582
      %v3279 = vmax.f32 %v1945, %v2584
      %v3280 = vmax.f32 %v2109, %v2586
      %v3281 = vmax.f32 %v2110, %v2588
      %v3282 = vmax.f32 %v2111, %v2590
      %v3283 = vmax.f32 %v1946, %v2592
      %v3284 = vmax.f32 %v2112, %v2594
      %v3285 = vmax.f32 %v2113, %v2596
      %v3286 = vmax.f32 %v2114, %v2598
      %v3287 = vmax.f32 %v1947, %v2600
      %v3288 = vmax.f32 %v2115, %v2602
      %v3289 = vmax.f32 %v2116, %v2604
      %v3290 = vmax.f32 %v2117, %v2606
      %v3291 = vmax.f32 %v1948, %v2608
      %v3292 = vmax.f32 %v2118, %v2610
      %v3293 = vmax.f32 %v2119, %v2612
      %v3294 = vmax.f32 %v2120, %v2614
      %v3295 = vmax.f32 %v1949, %v2616
      %v3296 = vmax.f32 %v2121, %v2618
      %v3297 = vmax.f32 %v2122, %v2620
      %v3298 = vmax.f32 %v2123, %v2622
      %v3299 = vmax.f32 %v1950, %v2624
      %v3300 = vmax.f32 %v2124, %v2626
      %v3301 = vmax.f32 %v2125, %v2628
      %v3302 = vmax.f32 %v2126, %v2630
      %v3303 = vmax.f32 %v1951, %v2632
      %v3304 = vmax.f32 %v2127, %v2634
      %v3305 = vmax.f32 %v2128, %v2636
      %v3306 = vmax.f32 %v2129, %v2638
      %v3307 = vmax.f32 %v1952, %v2640
      %v3308 = vmax.f32 %v2130, %v2642
      %v3309 = vmax.f32 %v2131, %v2644
      %v3310 = vmax.f32 %v2132, %v2646
      %v3311 = vmax.f32 %v1953, %v2648
      %v3312 = vmax.f32 %v2133, %v2650
      %v3313 = vmax.f32 %v2134, %v2652
      %v3314 = vmax.f32 %v2135, %v2654
      %v3315 = vmax.f32 %v1954, %v2656
      %v3316 = vmax.f32 %v2136, %v2658
      %v3317 = vmax.f32 %v2137, %v2660
      %v3318 = vmax.f32 %v2138, %v2662
      %v3319 = vmax.f32 %v1955, %v2664
      %v3320 = vmax.f32 %v2139, %v2666
      %v3321 = vmax.f32 %v2140, %v2668
      %v3322 = vmax.f32 %v2141, %v2670
      %v3323 = vmax.f32 %v1956, %v2672
      %v3324 = vmax.f32 %v2142, %v2674
      %v3325 = vmax.f32 %v2143, %v2676
      %v3326 = vmax.f32 %v2144, %v2678
      %v3327 = vmax.f32 %v1957, %v2680
      %v3328 = vmax.f32 %v2145, %v2682
      %v3329 = vmax.f32 %v2146, %v2684
      %v3330 = vmax.f32 %v2147, %v2686
      %v3331 = vmax.f32 %v1958, %v2688
      %v3332 = vmax.f32 %v2148, %v2690
      %v3333 = vmax.f32 %v2149, %v2692
      %v3334 = vmax.f32 %v2150, %v2694
      %v3335 = vmax.f32 %v1959, %v2696
      %v3336 = vmax.f32 %v2151, %v2698
      %v3337 = vmax.f32 %v2152, %v2700
      %v3338 = vmax.f32 %v2153, %v2702
      %v3339 = vmax.f32 %v1960, %v2704
      %v3340 = vmax.f32 %v2154, %v2706
      %v3341 = vmax.f32 %v2155, %v2708
      %v3342 = vmax.f32 %v2156, %v2710
      %v3343 = vmax.f32 %v1961, %v2712
      %v3344 = vmax.f32 %v2157, %v2714
      %v3345 = vmax.f32 %v2158, %v2716
      %v3346 = vmax.f32 %v2159, %v2718
      %v3347 = vmax.f32 %v1962, %v2720
      %v3348 = vmax.f32 %v2160, %v2722
      %v3349 = vmax.f32 %v2161, %v2724
      %v3350 = vmax.f32 %v2162, %v2726
      %v3351 = vmax.f32 %v1963, %v2728
      %v3352 = vmax.f32 %v2163, %v2730
      %v3353 = vmax.f32 %v2164, %v2732
      %v3354 = vmax.f32 %v2165, %v2734
      %v3355 = vmax.f32 %v1964, %v2736
      %v3356 = vmax.f32 %v2166, %v2738
      %v3357 = vmax.f32 %v2167, %v2740
      %v3358 = vmax.f32 %v2168, %v2742
      %v3359 = vmax.f32 %v1965, %v2744
      %v3360 = vmax.f32 %v2169, %v2746
      %v3361 = vmax.f32 %v2170, %v2748
      %v3362 = vmax.f32 %v2171, %v2750
      %v3363 = vmax.f32 %v1966, %v2752
      %v3364 = vmax.f32 %v2172, %v2754
      %v3365 = vmax.f32 %v2173, %v2756
      %v3366 = vmax.f32 %v2174, %v2758
      %v3367 = vmax.f32 %v1967, %v2760
      %v3368 = vmax.f32 %v2175, %v2762
      %v3369 = vmax.f32 %v2176, %v2764
      %v3370 = vmax.f32 %v2177, %v2766
      %v3371 = vmax.f32 %v1968, %v2768
      %v3372 = vmax.f32 %v2178, %v2770
      %v3373 = vmax.f32 %v2179, %v2772
      %v3374 = vmax.f32 %v2180, %v2774
      %v3375 = vmax.f32 %v1969, %v2776
      %v3376 = vmax.f32 %v2181, %v2778
      %v3377 = vmax.f32 %v2182, %v2780
      %v3378 = vmax.f32 %v2183, %v2782
      %v3379 = vmax.f32 %v1970, %v2784
      %v3380 = vmax.f32 %v2184, %v2786
      %v3381 = vmax.f32 %v2185, %v2788
      %v3382 = vmax.f32 %v2186, %v2790
      %v3383 = vmax.f32 %v1971, %v2792
      %v3384 = vmax.f32 %v2187, %v2794
      %v3385 = vmax.f32 %v2188, %v2796
      %v3386 = vmax.f32 %v2189, %v2798
      %v3387 = vmax.f32 %v1972, %v2800
      %v3388 = vmax.f32 %v2190, %v2802
      %v3389 = vmax.f32 %v2191, %v2804
      %v3390 = vmax.f32 %v2192, %v2806
      %v3391 = vmax.f32 %v1973, %v2808
      %v3392 = vmax.f32 %v2193, %v2810
      %v3393 = vmax.f32 %v2194, %v2812
      %v3394 = vmax.f32 %v2195, %v2814
      %v3395 = vmax.f32 %v1974, %v2816
      %v3396 = vmax.f32 %v2196, %v2818
      %v3397 = vmax.f32 %v2197, %v2820
      %v3398 = vmax.f32 %v2198, %v2822
      %v3399 = vmax.f32 %v1975, %v2824
      %v3400 = vmax.f32 %v2199, %v2826
      %v3401 = vmax.f32 %v2200, %v2828
      %v3402 = vmax.f32 %v2201, %v2830
      %v3403 = vmax.f32 %v1976, %v2832
      %v3404 = vmax.f32 %v2202, %v2834
      %v3405 = vmax.f32 %v2203, %v2836
      %v3406 = vmax.f32 %v2204, %v2838
      %v3407 = vmax.f32 %v1977, %v2840
      %v3408 = vmax.f32 %v2205, %v2842
      %v3409 = vmax.f32 %v2206, %v2844
      %v3410 = vmax.f32 %v2207, %v2846
      %v3411 = vmax.f32 %v1978, %v2848
      %v3412 = vmax.f32 %v2208, %v2850
      %v3413 = vmax.f32 %v2209, %v2852
      %v3414 = vmax.f32 %v2210, %v2854
      %v3415 = vmax.f32 %v1979, %v2856
      %v3416 = vmax.f32 %v2211, %v2858
      %v3417 = vmax.f32 %v2212, %v2860
      %v3418 = vmax.f32 %v2213, %v2862
      %v3419 = vmax.f32 %v1980, %v2864
      %v3420 = vmax.f32 %v2214, %v2866
      %v3421 = vmax.f32 %v2215, %v2868
      %v3422 = vmax.f32 %v2216, %v2870
      %v3423 = vmax.f32 %v1981, %v2872
      %v3424 = vmax.f32 %v2217, %v2874
      %v3425 = vmax.f32 %v2218, %v2876
      %v3426 = vmax.f32 %v2219, %v2878
      %v3427 = vmax.f32 %v1982, %v2880
      %v3428 = vmax.f32 %v2220, %v2882
      %v3429 = vmax.f32 %v2221, %v2884
      %v3430 = vmax.f32 %v2222, %v2886
      %v3431 = vmax.f32 %v1983, %v2888
      %v3432 = vmax.f32 %v2223, %v2890
      %v3433 = vmax.f32 %v2224, %v2892
      %v3434 = vmax.f32 %v2225, %v2894
      %v3435 = vmax.f32 %v1984, %v2896
      %v3436 = vmax.f32 %v2226, %v2898
      %v3437 = vmax.f32 %v2227, %v2900
      %v3438 = vmax.f32 %v2228, %v2902
      %v3439 = vmax.f32 %v1985, %v2904
      %v3440 = vmax.f32 %v2229, %v2906
      %v3441 = vmax.f32 %v2230, %v2908
      %v3442 = vmax.f32 %v2231, %v2910
      %v3443 = vmax.f32 %v1986, %v2912
      %v3444 = vmax.f32 %v2232, %v2914
      %v3445 = vmax.f32 %v2233, %v2916
      %v3446 = vmax.f32 %v2234, %v2918
      %v3447 = vmax.f32 %v1987, %v2920
      %v3448 = vmax.f32 %v2235, %v2922
      %v3449 = vmax.f32 %v2236, %v2924
      %v3450 = vmax.f32 %v2237, %v2926
      %v3451 = vmax.f32 %v1988, %v2928
      %v3452 = vmax.f32 %v2238, %v2930
      %v3453 = vmax.f32 %v2239, %v2932
      %v3454 = vmax.f32 %v2240, %v2934
      %v3455 = vmax.f32 %v1989, %v2936
      %v3456 = vmax.f32 %v2241, %v2938
      %v3457 = vmax.f32 %v2242, %v2940
      %v3458 = vmax.f32 %v2243, %v2942
      %v3459 = vmax.f32 %v1990, %v2944
      %v3460 = vmax.f32 %v2244, %v2946
      %v3461 = vmax.f32 %v2245, %v2948
      %v3462 = vmax.f32 %v2246, %v2950
      %v3463 = vpack.c.bf16 %v3207, %v3207
      %v3464 = vpack.c.bf16 %v3208, %v3208
      %v3465 = vpack.c.bf16 %v3209, %v3209
      %v3466 = vpack.c.bf16 %v3210, %v3210
      %v3467 = vpack.c.bf16 %v3211, %v3211
      %v3468 = vpack.c.bf16 %v3212, %v3212
      %v3469 = vpack.c.bf16 %v3213, %v3213
      %v3470 = vpack.c.bf16 %v3214, %v3214
      %v3471 = vpack.c.bf16 %v3215, %v3215
      %v3472 = vpack.c.bf16 %v3216, %v3216
      %v3473 = vpack.c.bf16 %v3217, %v3217
      %v3474 = vpack.c.bf16 %v3218, %v3218
      %v3475 = vpack.c.bf16 %v3219, %v3219
      %v3476 = vpack.c.bf16 %v3220, %v3220
      %v3477 = vpack.c.bf16 %v3221, %v3221
      %v3478 = vpack.c.bf16 %v3222, %v3222
      %v3479 = vpack.c.bf16 %v3223, %v3223
      %v3480 = vpack.c.bf16 %v3224, %v3224
      %v3481 = vpack.c.bf16 %v3225, %v3225
      %v3482 = vpack.c.bf16 %v3226, %v3226
      %v3483 = vpack.c.bf16 %v3227, %v3227
      %v3484 = vpack.c.bf16 %v3228, %v3228
      %v3485 = vpack.c.bf16 %v3229, %v3229
      %v3486 = vpack.c.bf16 %v3230, %v3230
      %v3487 = vpack.c.bf16 %v3231, %v3231
      %v3488 = vpack.c.bf16 %v3232, %v3232
      %v3489 = vpack.c.bf16 %v3233, %v3233
      %v3490 = vpack.c.bf16 %v3234, %v3234
      %v3491 = vpack.c.bf16 %v3235, %v3235
      %v3492 = vpack.c.bf16 %v3236, %v3236
      %v3493 = vpack.c.bf16 %v3237, %v3237
      %v3494 = vpack.c.bf16 %v3238, %v3238
      %v3495 = vpack.c.bf16 %v3239, %v3239
      %v3496 = vpack.c.bf16 %v3240, %v3240
      %v3497 = vpack.c.bf16 %v3241, %v3241
      %v3498 = vpack.c.bf16 %v3242, %v3242
      %v3499 = vpack.c.bf16 %v3243, %v3243
      %v3500 = vpack.c.bf16 %v3244, %v3244
      %v3501 = vpack.c.bf16 %v3245, %v3245
      %v3502 = vpack.c.bf16 %v3246, %v3246
      %v3503 = vpack.c.bf16 %v3247, %v3247
      %v3504 = vpack.c.bf16 %v3248, %v3248
      %v3505 = vpack.c.bf16 %v3249, %v3249
      %v3506 = vpack.c.bf16 %v3250, %v3250
      %v3507 = vpack.c.bf16 %v3251, %v3251
      %v3508 = vpack.c.bf16 %v3252, %v3252
      %v3509 = vpack.c.bf16 %v3253, %v3253
      %v3510 = vpack.c.bf16 %v3254, %v3254
      %v3511 = vpack.c.bf16 %v3255, %v3255
      %v3512 = vpack.c.bf16 %v3256, %v3256
      %v3513 = vpack.c.bf16 %v3257, %v3257
      %v3514 = vpack.c.bf16 %v3258, %v3258
      %v3515 = vpack.c.bf16 %v3259, %v3259
      %v3516 = vpack.c.bf16 %v3260, %v3260
      %v3517 = vpack.c.bf16 %v3261, %v3261
      %v3518 = vpack.c.bf16 %v3262, %v3262
      %v3519 = vpack.c.bf16 %v3263, %v3263
      %v3520 = vpack.c.bf16 %v3264, %v3264
      %v3521 = vpack.c.bf16 %v3265, %v3265
      %v3522 = vpack.c.bf16 %v3266, %v3266
      %v3523 = vpack.c.bf16 %v3267, %v3267
      %v3524 = vpack.c.bf16 %v3268, %v3268
      %v3525 = vpack.c.bf16 %v3269, %v3269
      %v3526 = vpack.c.bf16 %v3270, %v3270
      %v3527 = vpack.c.bf16 %v3271, %v3271
      %v3528 = vpack.c.bf16 %v3272, %v3272
      %v3529 = vpack.c.bf16 %v3273, %v3273
      %v3530 = vpack.c.bf16 %v3274, %v3274
      %v3531 = vpack.c.bf16 %v3275, %v3275
      %v3532 = vpack.c.bf16 %v3276, %v3276
      %v3533 = vpack.c.bf16 %v3277, %v3277
      %v3534 = vpack.c.bf16 %v3278, %v3278
      %v3535 = vpack.c.bf16 %v3279, %v3279
      %v3536 = vpack.c.bf16 %v3280, %v3280
      %v3537 = vpack.c.bf16 %v3281, %v3281
      %v3538 = vpack.c.bf16 %v3282, %v3282
      %v3539 = vpack.c.bf16 %v3283, %v3283
      %v3540 = vpack.c.bf16 %v3284, %v3284
      %v3541 = vpack.c.bf16 %v3285, %v3285
      %v3542 = vpack.c.bf16 %v3286, %v3286
      %v3543 = vpack.c.bf16 %v3287, %v3287
      %v3544 = vpack.c.bf16 %v3288, %v3288
      %v3545 = vpack.c.bf16 %v3289, %v3289
      %v3546 = vpack.c.bf16 %v3290, %v3290
      %v3547 = vpack.c.bf16 %v3291, %v3291
      %v3548 = vpack.c.bf16 %v3292, %v3292
      %v3549 = vpack.c.bf16 %v3293, %v3293
      %v3550 = vpack.c.bf16 %v3294, %v3294
      %v3551 = vpack.c.bf16 %v3295, %v3295
      %v3552 = vpack.c.bf16 %v3296, %v3296
      %v3553 = vpack.c.bf16 %v3297, %v3297
      %v3554 = vpack.c.bf16 %v3298, %v3298
      %v3555 = vpack.c.bf16 %v3299, %v3299
      %v3556 = vpack.c.bf16 %v3300, %v3300
      %v3557 = vpack.c.bf16 %v3301, %v3301
      %v3558 = vpack.c.bf16 %v3302, %v3302
      %v3559 = vpack.c.bf16 %v3303, %v3303
      %v3560 = vpack.c.bf16 %v3304, %v3304
      %v3561 = vpack.c.bf16 %v3305, %v3305
      %v3562 = vpack.c.bf16 %v3306, %v3306
      %v3563 = vpack.c.bf16 %v3307, %v3307
      %v3564 = vpack.c.bf16 %v3308, %v3308
      %v3565 = vpack.c.bf16 %v3309, %v3309
      %v3566 = vpack.c.bf16 %v3310, %v3310
      %v3567 = vpack.c.bf16 %v3311, %v3311
      %v3568 = vpack.c.bf16 %v3312, %v3312
      %v3569 = vpack.c.bf16 %v3313, %v3313
      %v3570 = vpack.c.bf16 %v3314, %v3314
      %v3571 = vpack.c.bf16 %v3315, %v3315
      %v3572 = vpack.c.bf16 %v3316, %v3316
      %v3573 = vpack.c.bf16 %v3317, %v3317
      %v3574 = vpack.c.bf16 %v3318, %v3318
      %v3575 = vpack.c.bf16 %v3319, %v3319
      %v3576 = vpack.c.bf16 %v3320, %v3320
      %v3577 = vpack.c.bf16 %v3321, %v3321
      %v3578 = vpack.c.bf16 %v3322, %v3322
      %v3579 = vpack.c.bf16 %v3323, %v3323
      %v3580 = vpack.c.bf16 %v3324, %v3324
      %v3581 = vpack.c.bf16 %v3325, %v3325
      %v3582 = vpack.c.bf16 %v3326, %v3326
      %v3583 = vpack.c.bf16 %v3327, %v3327
      %v3584 = vpack.c.bf16 %v3328, %v3328
      %v3585 = vpack.c.bf16 %v3329, %v3329
      %v3586 = vpack.c.bf16 %v3330, %v3330
      %v3587 = vpack.c.bf16 %v3331, %v3331
      %v3588 = vpack.c.bf16 %v3332, %v3332
      %v3589 = vpack.c.bf16 %v3333, %v3333
      %v3590 = vpack.c.bf16 %v3334, %v3334
      %v3591 = vpack.c.bf16 %v3335, %v3335
      %v3592 = vpack.c.bf16 %v3336, %v3336
      %v3593 = vpack.c.bf16 %v3337, %v3337
      %v3594 = vpack.c.bf16 %v3338, %v3338
      %v3595 = vpack.c.bf16 %v3339, %v3339
      %v3596 = vpack.c.bf16 %v3340, %v3340
      %v3597 = vpack.c.bf16 %v3341, %v3341
      %v3598 = vpack.c.bf16 %v3342, %v3342
      %v3599 = vpack.c.bf16 %v3343, %v3343
      %v3600 = vpack.c.bf16 %v3344, %v3344
      %v3601 = vpack.c.bf16 %v3345, %v3345
      %v3602 = vpack.c.bf16 %v3346, %v3346
      %v3603 = vpack.c.bf16 %v3347, %v3347
      %v3604 = vpack.c.bf16 %v3348, %v3348
      %v3605 = vpack.c.bf16 %v3349, %v3349
      %v3606 = vpack.c.bf16 %v3350, %v3350
      %v3607 = vpack.c.bf16 %v3351, %v3351
      %v3608 = vpack.c.bf16 %v3352, %v3352
      %v3609 = vpack.c.bf16 %v3353, %v3353
      %v3610 = vpack.c.bf16 %v3354, %v3354
      %v3611 = vpack.c.bf16 %v3355, %v3355
      %v3612 = vpack.c.bf16 %v3356, %v3356
      %v3613 = vpack.c.bf16 %v3357, %v3357
      %v3614 = vpack.c.bf16 %v3358, %v3358
      %v3615 = vpack.c.bf16 %v3359, %v3359
      %v3616 = vpack.c.bf16 %v3360, %v3360
      %v3617 = vpack.c.bf16 %v3361, %v3361
      %v3618 = vpack.c.bf16 %v3362, %v3362
      %v3619 = vpack.c.bf16 %v3363, %v3363
      %v3620 = vpack.c.bf16 %v3364, %v3364
      %v3621 = vpack.c.bf16 %v3365, %v3365
      %v3622 = vpack.c.bf16 %v3366, %v3366
      %v3623 = vpack.c.bf16 %v3367, %v3367
      %v3624 = vpack.c.bf16 %v3368, %v3368
      %v3625 = vpack.c.bf16 %v3369, %v3369
      %v3626 = vpack.c.bf16 %v3370, %v3370
      %v3627 = vpack.c.bf16 %v3371, %v3371
      %v3628 = vpack.c.bf16 %v3372, %v3372
      %v3629 = vpack.c.bf16 %v3373, %v3373
      %v3630 = vpack.c.bf16 %v3374, %v3374
      %v3631 = vpack.c.bf16 %v3375, %v3375
      %v3632 = vpack.c.bf16 %v3376, %v3376
      %v3633 = vpack.c.bf16 %v3377, %v3377
      %v3634 = vpack.c.bf16 %v3378, %v3378
      %v3635 = vpack.c.bf16 %v3379, %v3379
      %v3636 = vpack.c.bf16 %v3380, %v3380
      %v3637 = vpack.c.bf16 %v3381, %v3381
      %v3638 = vpack.c.bf16 %v3382, %v3382
      %v3639 = vpack.c.bf16 %v3383, %v3383
      %v3640 = vpack.c.bf16 %v3384, %v3384
      %v3641 = vpack.c.bf16 %v3385, %v3385
      %v3642 = vpack.c.bf16 %v3386, %v3386
      %v3643 = vpack.c.bf16 %v3387, %v3387
      %v3644 = vpack.c.bf16 %v3388, %v3388
      %v3645 = vpack.c.bf16 %v3389, %v3389
      %v3646 = vpack.c.bf16 %v3390, %v3390
      %v3647 = vpack.c.bf16 %v3391, %v3391
      %v3648 = vpack.c.bf16 %v3392, %v3392
      %v3649 = vpack.c.bf16 %v3393, %v3393
      %v3650 = vpack.c.bf16 %v3394, %v3394
      %v3651 = vpack.c.bf16 %v3395, %v3395
      %v3652 = vpack.c.bf16 %v3396, %v3396
      %v3653 = vpack.c.bf16 %v3397, %v3397
      %v3654 = vpack.c.bf16 %v3398, %v3398
      %v3655 = vpack.c.bf16 %v3399, %v3399
      %v3656 = vpack.c.bf16 %v3400, %v3400
      %v3657 = vpack.c.bf16 %v3401, %v3401
      %v3658 = vpack.c.bf16 %v3402, %v3402
      %v3659 = vpack.c.bf16 %v3403, %v3403
      %v3660 = vpack.c.bf16 %v3404, %v3404
      %v3661 = vpack.c.bf16 %v3405, %v3405
      %v3662 = vpack.c.bf16 %v3406, %v3406
      %v3663 = vpack.c.bf16 %v3407, %v3407
      %v3664 = vpack.c.bf16 %v3408, %v3408
      %v3665 = vpack.c.bf16 %v3409, %v3409
      %v3666 = vpack.c.bf16 %v3410, %v3410
      %v3667 = vpack.c.bf16 %v3411, %v3411
      %v3668 = vpack.c.bf16 %v3412, %v3412
      %v3669 = vpack.c.bf16 %v3413, %v3413
      %v3670 = vpack.c.bf16 %v3414, %v3414
      %v3671 = vpack.c.bf16 %v3415, %v3415
      %v3672 = vpack.c.bf16 %v3416, %v3416
      %v3673 = vpack.c.bf16 %v3417, %v3417
      %v3674 = vpack.c.bf16 %v3418, %v3418
      %v3675 = vpack.c.bf16 %v3419, %v3419
      %v3676 = vpack.c.bf16 %v3420, %v3420
      %v3677 = vpack.c.bf16 %v3421, %v3421
      %v3678 = vpack.c.bf16 %v3422, %v3422
      %v3679 = vpack.c.bf16 %v3423, %v3423
      %v3680 = vpack.c.bf16 %v3424, %v3424
      %v3681 = vpack.c.bf16 %v3425, %v3425
      %v3682 = vpack.c.bf16 %v3426, %v3426
      %v3683 = vpack.c.bf16 %v3427, %v3427
      %v3684 = vpack.c.bf16 %v3428, %v3428
      %v3685 = vpack.c.bf16 %v3429, %v3429
      %v3686 = vpack.c.bf16 %v3430, %v3430
      %v3687 = vpack.c.bf16 %v3431, %v3431
      %v3688 = vpack.c.bf16 %v3432, %v3432
      %v3689 = vpack.c.bf16 %v3433, %v3433
      %v3690 = vpack.c.bf16 %v3434, %v3434
      %v3691 = vpack.c.bf16 %v3435, %v3435
      %v3692 = vpack.c.bf16 %v3436, %v3436
      %v3693 = vpack.c.bf16 %v3437, %v3437
      %v3694 = vpack.c.bf16 %v3438, %v3438
      %v3695 = vpack.c.bf16 %v3439, %v3439
      %v3696 = vpack.c.bf16 %v3440, %v3440
      %v3697 = vpack.c.bf16 %v3441, %v3441
      %v3698 = vpack.c.bf16 %v3442, %v3442
      %v3699 = vpack.c.bf16 %v3443, %v3443
      %v3700 = vpack.c.bf16 %v3444, %v3444
      %v3701 = vpack.c.bf16 %v3445, %v3445
      %v3702 = vpack.c.bf16 %v3446, %v3446
      %v3703 = vpack.c.bf16 %v3447, %v3447
      %v3704 = vpack.c.bf16 %v3448, %v3448
      %v3705 = vpack.c.bf16 %v3449, %v3449
      %v3706 = vpack.c.bf16 %v3450, %v3450
      %v3707 = vpack.c.bf16 %v3451, %v3451
      %v3708 = vpack.c.bf16 %v3452, %v3452
      %v3709 = vpack.c.bf16 %v3453, %v3453
      %v3710 = vpack.c.bf16 %v3454, %v3454
      %v3711 = vpack.c.bf16 %v3455, %v3455
      %v3712 = vpack.c.bf16 %v3456, %v3456
      %v3713 = vpack.c.bf16 %v3457, %v3457
      %v3714 = vpack.c.bf16 %v3458, %v3458
      %v3715 = vpack.c.bf16 %v3459, %v3459
      %v3716 = vpack.c.bf16 %v3460, %v3460
      %v3717 = vpack.c.bf16 %v3461, %v3461
      %v3718 = vpack.c.bf16 %v3462, %v3462
      %v3975 = vunpack.c.l.b16 %v3463
      %v3976 = vunpack.c.l.b16 %v3464
      %v3977 = vunpack.c.l.b16 %v3465
      %v3978 = vunpack.c.l.b16 %v3466
      %v3979 = vunpack.c.l.b16 %v3467
      %v3980 = vunpack.c.l.b16 %v3468
      %v3981 = vunpack.c.l.b16 %v3469
      %v3982 = vunpack.c.l.b16 %v3470
      %v3983 = vunpack.c.l.b16 %v3471
      %v3984 = vunpack.c.l.b16 %v3472
      %v3985 = vunpack.c.l.b16 %v3473
      %v3986 = vunpack.c.l.b16 %v3474
      %v3987 = vunpack.c.l.b16 %v3475
      %v3988 = vunpack.c.l.b16 %v3476
      %v3989 = vunpack.c.l.b16 %v3477
      %v3990 = vunpack.c.l.b16 %v3478
      %v3991 = vunpack.c.l.b16 %v3479
      %v3992 = vunpack.c.l.b16 %v3480
      %v3993 = vunpack.c.l.b16 %v3481
      %v3994 = vunpack.c.l.b16 %v3482
      %v3995 = vunpack.c.l.b16 %v3483
      %v3996 = vunpack.c.l.b16 %v3484
      %v3997 = vunpack.c.l.b16 %v3485
      %v3998 = vunpack.c.l.b16 %v3486
      %v3999 = vunpack.c.l.b16 %v3487
      %v4000 = vunpack.c.l.b16 %v3488
      %v4001 = vunpack.c.l.b16 %v3489
      %v4002 = vunpack.c.l.b16 %v3490
      %v4003 = vunpack.c.l.b16 %v3491
      %v4004 = vunpack.c.l.b16 %v3492
      %v4005 = vunpack.c.l.b16 %v3493
      %v4006 = vunpack.c.l.b16 %v3494
      %v4007 = vunpack.c.l.b16 %v3495
      %v4008 = vunpack.c.l.b16 %v3496
      %v4009 = vunpack.c.l.b16 %v3497
      %v4010 = vunpack.c.l.b16 %v3498
      %v4011 = vunpack.c.l.b16 %v3499
      %v4012 = vunpack.c.l.b16 %v3500
      %v4013 = vunpack.c.l.b16 %v3501
      %v4014 = vunpack.c.l.b16 %v3502
      %v4015 = vunpack.c.l.b16 %v3503
      %v4016 = vunpack.c.l.b16 %v3504
      %v4017 = vunpack.c.l.b16 %v3505
      %v4018 = vunpack.c.l.b16 %v3506
      %v4019 = vunpack.c.l.b16 %v3507
      %v4020 = vunpack.c.l.b16 %v3508
      %v4021 = vunpack.c.l.b16 %v3509
      %v4022 = vunpack.c.l.b16 %v3510
      %v4023 = vunpack.c.l.b16 %v3511
      %v4024 = vunpack.c.l.b16 %v3512
      %v4025 = vunpack.c.l.b16 %v3513
      %v4026 = vunpack.c.l.b16 %v3514
      %v4027 = vunpack.c.l.b16 %v3515
      %v4028 = vunpack.c.l.b16 %v3516
      %v4029 = vunpack.c.l.b16 %v3517
      %v4030 = vunpack.c.l.b16 %v3518
      %v4031 = vunpack.c.l.b16 %v3519
      %v4032 = vunpack.c.l.b16 %v3520
      %v4033 = vunpack.c.l.b16 %v3521
      %v4034 = vunpack.c.l.b16 %v3522
      %v4035 = vunpack.c.l.b16 %v3523
      %v4036 = vunpack.c.l.b16 %v3524
      %v4037 = vunpack.c.l.b16 %v3525
      %v4038 = vunpack.c.l.b16 %v3526
      %v4039 = vunpack.c.l.b16 %v3527
      %v4040 = vunpack.c.l.b16 %v3528
      %v4041 = vunpack.c.l.b16 %v3529
      %v4042 = vunpack.c.l.b16 %v3530
      %v4043 = vunpack.c.l.b16 %v3531
      %v4044 = vunpack.c.l.b16 %v3532
      %v4045 = vunpack.c.l.b16 %v3533
      %v4046 = vunpack.c.l.b16 %v3534
      %v4047 = vunpack.c.l.b16 %v3535
      %v4048 = vunpack.c.l.b16 %v3536
      %v4049 = vunpack.c.l.b16 %v3537
      %v4050 = vunpack.c.l.b16 %v3538
      %v4051 = vunpack.c.l.b16 %v3539
      %v4052 = vunpack.c.l.b16 %v3540
      %v4053 = vunpack.c.l.b16 %v3541
      %v4054 = vunpack.c.l.b16 %v3542
      %v4055 = vunpack.c.l.b16 %v3543
      %v4056 = vunpack.c.l.b16 %v3544
      %v4057 = vunpack.c.l.b16 %v3545
      %v4058 = vunpack.c.l.b16 %v3546
      %v4059 = vunpack.c.l.b16 %v3547
      %v4060 = vunpack.c.l.b16 %v3548
      %v4061 = vunpack.c.l.b16 %v3549
      %v4062 = vunpack.c.l.b16 %v3550
      %v4063 = vunpack.c.l.b16 %v3551
      %v4064 = vunpack.c.l.b16 %v3552
      %v4065 = vunpack.c.l.b16 %v3553
      %v4066 = vunpack.c.l.b16 %v3554
      %v4067 = vunpack.c.l.b16 %v3555
      %v4068 = vunpack.c.l.b16 %v3556
      %v4069 = vunpack.c.l.b16 %v3557
      %v4070 = vunpack.c.l.b16 %v3558
      %v4071 = vunpack.c.l.b16 %v3559
      %v4072 = vunpack.c.l.b16 %v3560
      %v4073 = vunpack.c.l.b16 %v3561
      %v4074 = vunpack.c.l.b16 %v3562
      %v4075 = vunpack.c.l.b16 %v3563
      %v4076 = vunpack.c.l.b16 %v3564
      %v4077 = vunpack.c.l.b16 %v3565
      %v4078 = vunpack.c.l.b16 %v3566
      %v4079 = vunpack.c.l.b16 %v3567
      %v4080 = vunpack.c.l.b16 %v3568
      %v4081 = vunpack.c.l.b16 %v3569
      %v4082 = vunpack.c.l.b16 %v3570
      %v4083 = vunpack.c.l.b16 %v3571
      %v4084 = vunpack.c.l.b16 %v3572
      %v4085 = vunpack.c.l.b16 %v3573
      %v4086 = vunpack.c.l.b16 %v3574
      %v4087 = vunpack.c.l.b16 %v3575
      %v4088 = vunpack.c.l.b16 %v3576
      %v4089 = vunpack.c.l.b16 %v3577
      %v4090 = vunpack.c.l.b16 %v3578
      %v4091 = vunpack.c.l.b16 %v3579
      %v4092 = vunpack.c.l.b16 %v3580
      %v4093 = vunpack.c.l.b16 %v3581
      %v4094 = vunpack.c.l.b16 %v3582
      %v4095 = vunpack.c.l.b16 %v3583
      %v4096 = vunpack.c.l.b16 %v3584
      %v4097 = vunpack.c.l.b16 %v3585
      %v4098 = vunpack.c.l.b16 %v3586
      %v4099 = vunpack.c.l.b16 %v3587
      %v4100 = vunpack.c.l.b16 %v3588
      %v4101 = vunpack.c.l.b16 %v3589
      %v4102 = vunpack.c.l.b16 %v3590
      %v4103 = vunpack.c.l.b16 %v3591
      %v4104 = vunpack.c.l.b16 %v3592
      %v4105 = vunpack.c.l.b16 %v3593
      %v4106 = vunpack.c.l.b16 %v3594
      %v4107 = vunpack.c.l.b16 %v3595
      %v4108 = vunpack.c.l.b16 %v3596
      %v4109 = vunpack.c.l.b16 %v3597
      %v4110 = vunpack.c.l.b16 %v3598
      %v4111 = vunpack.c.l.b16 %v3599
      %v4112 = vunpack.c.l.b16 %v3600
      %v4113 = vunpack.c.l.b16 %v3601
      %v4114 = vunpack.c.l.b16 %v3602
      %v4115 = vunpack.c.l.b16 %v3603
      %v4116 = vunpack.c.l.b16 %v3604
      %v4117 = vunpack.c.l.b16 %v3605
      %v4118 = vunpack.c.l.b16 %v3606
      %v4119 = vunpack.c.l.b16 %v3607
      %v4120 = vunpack.c.l.b16 %v3608
      %v4121 = vunpack.c.l.b16 %v3609
      %v4122 = vunpack.c.l.b16 %v3610
      %v4123 = vunpack.c.l.b16 %v3611
      %v4124 = vunpack.c.l.b16 %v3612
      %v4125 = vunpack.c.l.b16 %v3613
      %v4126 = vunpack.c.l.b16 %v3614
      %v4127 = vunpack.c.l.b16 %v3615
      %v4128 = vunpack.c.l.b16 %v3616
      %v4129 = vunpack.c.l.b16 %v3617
      %v4130 = vunpack.c.l.b16 %v3618
      %v4131 = vunpack.c.l.b16 %v3619
      %v4132 = vunpack.c.l.b16 %v3620
      %v4133 = vunpack.c.l.b16 %v3621
      %v4134 = vunpack.c.l.b16 %v3622
      %v4135 = vunpack.c.l.b16 %v3623
      %v4136 = vunpack.c.l.b16 %v3624
      %v4137 = vunpack.c.l.b16 %v3625
      %v4138 = vunpack.c.l.b16 %v3626
      %v4139 = vunpack.c.l.b16 %v3627
      %v4140 = vunpack.c.l.b16 %v3628
      %v4141 = vunpack.c.l.b16 %v3629
      %v4142 = vunpack.c.l.b16 %v3630
      %v4143 = vunpack.c.l.b16 %v3631
      %v4144 = vunpack.c.l.b16 %v3632
      %v4145 = vunpack.c.l.b16 %v3633
      %v4146 = vunpack.c.l.b16 %v3634
      %v4147 = vunpack.c.l.b16 %v3635
      %v4148 = vunpack.c.l.b16 %v3636
      %v4149 = vunpack.c.l.b16 %v3637
      %v4150 = vunpack.c.l.b16 %v3638
      %v4151 = vunpack.c.l.b16 %v3639
      %v4152 = vunpack.c.l.b16 %v3640
      %v4153 = vunpack.c.l.b16 %v3641
      %v4154 = vunpack.c.l.b16 %v3642
      %v4155 = vunpack.c.l.b16 %v3643
      %v4156 = vunpack.c.l.b16 %v3644
      %v4157 = vunpack.c.l.b16 %v3645
      %v4158 = vunpack.c.l.b16 %v3646
      %v4159 = vunpack.c.l.b16 %v3647
      %v4160 = vunpack.c.l.b16 %v3648
      %v4161 = vunpack.c.l.b16 %v3649
      %v4162 = vunpack.c.l.b16 %v3650
      %v4163 = vunpack.c.l.b16 %v3651
      %v4164 = vunpack.c.l.b16 %v3652
      %v4165 = vunpack.c.l.b16 %v3653
      %v4166 = vunpack.c.l.b16 %v3654
      %v4167 = vunpack.c.l.b16 %v3655
      %v4168 = vunpack.c.l.b16 %v3656
      %v4169 = vunpack.c.l.b16 %v3657
      %v4170 = vunpack.c.l.b16 %v3658
      %v4171 = vunpack.c.l.b16 %v3659
      %v4172 = vunpack.c.l.b16 %v3660
      %v4173 = vunpack.c.l.b16 %v3661
      %v4174 = vunpack.c.l.b16 %v3662
      %v4175 = vunpack.c.l.b16 %v3663
      %v4176 = vunpack.c.l.b16 %v3664
      %v4177 = vunpack.c.l.b16 %v3665
      %v4178 = vunpack.c.l.b16 %v3666
      %v4179 = vunpack.c.l.b16 %v3667
      %v4180 = vunpack.c.l.b16 %v3668
      %v4181 = vunpack.c.l.b16 %v3669
      %v4182 = vunpack.c.l.b16 %v3670
      %v4183 = vunpack.c.l.b16 %v3671
      %v4184 = vunpack.c.l.b16 %v3672
      %v4185 = vunpack.c.l.b16 %v3673
      %v4186 = vunpack.c.l.b16 %v3674
      %v4187 = vunpack.c.l.b16 %v3675
      %v4188 = vunpack.c.l.b16 %v3676
      %v4189 = vunpack.c.l.b16 %v3677
      %v4190 = vunpack.c.l.b16 %v3678
      %v4191 = vunpack.c.l.b16 %v3679
      %v4192 = vunpack.c.l.b16 %v3680
      %v4193 = vunpack.c.l.b16 %v3681
      %v4194 = vunpack.c.l.b16 %v3682
      %v4195 = vunpack.c.l.b16 %v3683
      %v4196 = vunpack.c.l.b16 %v3684
      %v4197 = vunpack.c.l.b16 %v3685
      %v4198 = vunpack.c.l.b16 %v3686
      %v4199 = vunpack.c.l.b16 %v3687
      %v4200 = vunpack.c.l.b16 %v3688
      %v4201 = vunpack.c.l.b16 %v3689
      %v4202 = vunpack.c.l.b16 %v3690
      %v4203 = vunpack.c.l.b16 %v3691
      %v4204 = vunpack.c.l.b16 %v3692
      %v4205 = vunpack.c.l.b16 %v3693
      %v4206 = vunpack.c.l.b16 %v3694
      %v4207 = vunpack.c.l.b16 %v3695
      %v4208 = vunpack.c.l.b16 %v3696
      %v4209 = vunpack.c.l.b16 %v3697
      %v4210 = vunpack.c.l.b16 %v3698
      %v4211 = vunpack.c.l.b16 %v3699
      %v4212 = vunpack.c.l.b16 %v3700
      %v4213 = vunpack.c.l.b16 %v3701
      %v4214 = vunpack.c.l.b16 %v3702
      %v4215 = vunpack.c.l.b16 %v3703
      %v4216 = vunpack.c.l.b16 %v3704
      %v4217 = vunpack.c.l.b16 %v3705
      %v4218 = vunpack.c.l.b16 %v3706
      %v4219 = vunpack.c.l.b16 %v3707
      %v4220 = vunpack.c.l.b16 %v3708
      %v4221 = vunpack.c.l.b16 %v3709
      %v4222 = vunpack.c.l.b16 %v3710
      %v4223 = vunpack.c.l.b16 %v3711
      %v4224 = vunpack.c.l.b16 %v3712
      %v4225 = vunpack.c.l.b16 %v3713
      %v4226 = vunpack.c.l.b16 %v3714
      %v4227 = vunpack.c.l.b16 %v3715
      %v4228 = vunpack.c.l.b16 %v3716
      %v4229 = vunpack.c.l.b16 %v3717
      %v4230 = vunpack.c.l.b16 %v3718
      %v4231 = vrot.slane %v3976, 7
      %vm4232 = vcmask 1041409
      %v4233 = vsel %vm4232, %v4231, %v3975
      %v4234 = vrot.slane %v3977, 6
      %vm4235 = vcmask 1042434
      %v4236 = vsel %vm4235, %v4234, %v4233
      %v4237 = vrot.slane %v3978, 5
      %vm4238 = vcmask 1043459
      %v4239 = vsel %vm4238, %v4237, %v4236
      %v4240 = vrot.slane %v3979, 4
      %vm4241 = vcmask 1044484
      %v4242 = vsel %vm4241, %v4240, %v4239
      %v4243 = vrot.slane %v3980, 3
      %vm4244 = vcmask 1045509
      %v4245 = vsel %vm4244, %v4243, %v4242
      %v4246 = vrot.slane %v3981, 2
      %vm4247 = vcmask 1046534
      %v4248 = vsel %vm4247, %v4246, %v4245
      %v4249 = vrot.slane %v3982, 1
      %vm4250 = vcmask 1047559
      %v4251 = vsel %vm4250, %v4249, %v4248
      %v4252 = vrot.slane %v3984, 7
      %v4253 = vsel %vm4232, %v4252, %v3983
      %v4254 = vrot.slane %v3985, 6
      %v4255 = vsel %vm4235, %v4254, %v4253
      %v4256 = vrot.slane %v3986, 5
      %v4257 = vsel %vm4238, %v4256, %v4255
      %v4258 = vrot.slane %v3987, 4
      %v4259 = vsel %vm4241, %v4258, %v4257
      %v4260 = vrot.slane %v3988, 3
      %v4261 = vsel %vm4244, %v4260, %v4259
      %v4262 = vrot.slane %v3989, 2
      %v4263 = vsel %vm4247, %v4262, %v4261
      %v4264 = vrot.slane %v3990, 1
      %v4265 = vsel %vm4250, %v4264, %v4263
      %v4266 = vrot.slane %v3992, 7
      %v4267 = vsel %vm4232, %v4266, %v3991
      %v4268 = vrot.slane %v3993, 6
      %v4269 = vsel %vm4235, %v4268, %v4267
      %v4270 = vrot.slane %v3994, 5
      %v4271 = vsel %vm4238, %v4270, %v4269
      %v4272 = vrot.slane %v3995, 4
      %v4273 = vsel %vm4241, %v4272, %v4271
      %v4274 = vrot.slane %v3996, 3
      %v4275 = vsel %vm4244, %v4274, %v4273
      %v4276 = vrot.slane %v3997, 2
      %v4277 = vsel %vm4247, %v4276, %v4275
      %v4278 = vrot.slane %v3998, 1
      %v4279 = vsel %vm4250, %v4278, %v4277
      %v4280 = vrot.slane %v4000, 7
      %v4281 = vsel %vm4232, %v4280, %v3999
      %v4282 = vrot.slane %v4001, 6
      %v4283 = vsel %vm4235, %v4282, %v4281
      %v4284 = vrot.slane %v4002, 5
      %v4285 = vsel %vm4238, %v4284, %v4283
      %v4286 = vrot.slane %v4003, 4
      %v4287 = vsel %vm4241, %v4286, %v4285
      %v4288 = vrot.slane %v4004, 3
      %v4289 = vsel %vm4244, %v4288, %v4287
      %v4290 = vrot.slane %v4005, 2
      %v4291 = vsel %vm4247, %v4290, %v4289
      %v4292 = vrot.slane %v4006, 1
      %v4293 = vsel %vm4250, %v4292, %v4291
      %v4294 = vrot.slane %v4008, 7
      %v4295 = vsel %vm4232, %v4294, %v4007
      %v4296 = vrot.slane %v4009, 6
      %v4297 = vsel %vm4235, %v4296, %v4295
      %v4298 = vrot.slane %v4010, 5
      %v4299 = vsel %vm4238, %v4298, %v4297
      %v4300 = vrot.slane %v4011, 4
      %v4301 = vsel %vm4241, %v4300, %v4299
      %v4302 = vrot.slane %v4012, 3
      %v4303 = vsel %vm4244, %v4302, %v4301
      %v4304 = vrot.slane %v4013, 2
      %v4305 = vsel %vm4247, %v4304, %v4303
      %v4306 = vrot.slane %v4014, 1
      %v4307 = vsel %vm4250, %v4306, %v4305
      %v4308 = vrot.slane %v4016, 7
      %v4309 = vsel %vm4232, %v4308, %v4015
      %v4310 = vrot.slane %v4017, 6
      %v4311 = vsel %vm4235, %v4310, %v4309
      %v4312 = vrot.slane %v4018, 5
      %v4313 = vsel %vm4238, %v4312, %v4311
      %v4314 = vrot.slane %v4019, 4
      %v4315 = vsel %vm4241, %v4314, %v4313
      %v4316 = vrot.slane %v4020, 3
      %v4317 = vsel %vm4244, %v4316, %v4315
      %v4318 = vrot.slane %v4021, 2
      %v4319 = vsel %vm4247, %v4318, %v4317
      %v4320 = vrot.slane %v4022, 1
      %v4321 = vsel %vm4250, %v4320, %v4319
      %v4322 = vrot.slane %v4024, 7
      %v4323 = vsel %vm4232, %v4322, %v4023
      %v4324 = vrot.slane %v4025, 6
      %v4325 = vsel %vm4235, %v4324, %v4323
      %v4326 = vrot.slane %v4026, 5
      %v4327 = vsel %vm4238, %v4326, %v4325
      %v4328 = vrot.slane %v4027, 4
      %v4329 = vsel %vm4241, %v4328, %v4327
      %v4330 = vrot.slane %v4028, 3
      %v4331 = vsel %vm4244, %v4330, %v4329
      %v4332 = vrot.slane %v4029, 2
      %v4333 = vsel %vm4247, %v4332, %v4331
      %v4334 = vrot.slane %v4030, 1
      %v4335 = vsel %vm4250, %v4334, %v4333
      %v4336 = vrot.slane %v4032, 7
      %v4337 = vsel %vm4232, %v4336, %v4031
      %v4338 = vrot.slane %v4033, 6
      %v4339 = vsel %vm4235, %v4338, %v4337
      %v4340 = vrot.slane %v4034, 5
      %v4341 = vsel %vm4238, %v4340, %v4339
      %v4342 = vrot.slane %v4035, 4
      %v4343 = vsel %vm4241, %v4342, %v4341
      %v4344 = vrot.slane %v4036, 3
      %v4345 = vsel %vm4244, %v4344, %v4343
      %v4346 = vrot.slane %v4037, 2
      %v4347 = vsel %vm4247, %v4346, %v4345
      %v4348 = vrot.slane %v4038, 1
      %v4349 = vsel %vm4250, %v4348, %v4347
      %v4350 = vrot.slane %v4040, 7
      %v4351 = vsel %vm4232, %v4350, %v4039
      %v4352 = vrot.slane %v4041, 6
      %v4353 = vsel %vm4235, %v4352, %v4351
      %v4354 = vrot.slane %v4042, 5
      %v4355 = vsel %vm4238, %v4354, %v4353
      %v4356 = vrot.slane %v4043, 4
      %v4357 = vsel %vm4241, %v4356, %v4355
      %v4358 = vrot.slane %v4044, 3
      %v4359 = vsel %vm4244, %v4358, %v4357
      %v4360 = vrot.slane %v4045, 2
      %v4361 = vsel %vm4247, %v4360, %v4359
      %v4362 = vrot.slane %v4046, 1
      %v4363 = vsel %vm4250, %v4362, %v4361
      %v4364 = vrot.slane %v4048, 7
      %v4365 = vsel %vm4232, %v4364, %v4047
      %v4366 = vrot.slane %v4049, 6
      %v4367 = vsel %vm4235, %v4366, %v4365
      %v4368 = vrot.slane %v4050, 5
      %v4369 = vsel %vm4238, %v4368, %v4367
      %v4370 = vrot.slane %v4051, 4
      %v4371 = vsel %vm4241, %v4370, %v4369
      %v4372 = vrot.slane %v4052, 3
      %v4373 = vsel %vm4244, %v4372, %v4371
      %v4374 = vrot.slane %v4053, 2
      %v4375 = vsel %vm4247, %v4374, %v4373
      %v4376 = vrot.slane %v4054, 1
      %v4377 = vsel %vm4250, %v4376, %v4375
      %v4378 = vrot.slane %v4056, 7
      %v4379 = vsel %vm4232, %v4378, %v4055
      %v4380 = vrot.slane %v4057, 6
      %v4381 = vsel %vm4235, %v4380, %v4379
      %v4382 = vrot.slane %v4058, 5
      %v4383 = vsel %vm4238, %v4382, %v4381
      %v4384 = vrot.slane %v4059, 4
      %v4385 = vsel %vm4241, %v4384, %v4383
      %v4386 = vrot.slane %v4060, 3
      %v4387 = vsel %vm4244, %v4386, %v4385
      %v4388 = vrot.slane %v4061, 2
      %v4389 = vsel %vm4247, %v4388, %v4387
      %v4390 = vrot.slane %v4062, 1
      %v4391 = vsel %vm4250, %v4390, %v4389
      %v4392 = vrot.slane %v4064, 7
      %v4393 = vsel %vm4232, %v4392, %v4063
      %v4394 = vrot.slane %v4065, 6
      %v4395 = vsel %vm4235, %v4394, %v4393
      %v4396 = vrot.slane %v4066, 5
      %v4397 = vsel %vm4238, %v4396, %v4395
      %v4398 = vrot.slane %v4067, 4
      %v4399 = vsel %vm4241, %v4398, %v4397
      %v4400 = vrot.slane %v4068, 3
      %v4401 = vsel %vm4244, %v4400, %v4399
      %v4402 = vrot.slane %v4069, 2
      %v4403 = vsel %vm4247, %v4402, %v4401
      %v4404 = vrot.slane %v4070, 1
      %v4405 = vsel %vm4250, %v4404, %v4403
      %v4406 = vrot.slane %v4072, 7
      %v4407 = vsel %vm4232, %v4406, %v4071
      %v4408 = vrot.slane %v4073, 6
      %v4409 = vsel %vm4235, %v4408, %v4407
      %v4410 = vrot.slane %v4074, 5
      %v4411 = vsel %vm4238, %v4410, %v4409
      %v4412 = vrot.slane %v4075, 4
      %v4413 = vsel %vm4241, %v4412, %v4411
      %v4414 = vrot.slane %v4076, 3
      %v4415 = vsel %vm4244, %v4414, %v4413
      %v4416 = vrot.slane %v4077, 2
      %v4417 = vsel %vm4247, %v4416, %v4415
      %v4418 = vrot.slane %v4078, 1
      %v4419 = vsel %vm4250, %v4418, %v4417
      %v4420 = vrot.slane %v4080, 7
      %v4421 = vsel %vm4232, %v4420, %v4079
      %v4422 = vrot.slane %v4081, 6
      %v4423 = vsel %vm4235, %v4422, %v4421
      %v4424 = vrot.slane %v4082, 5
      %v4425 = vsel %vm4238, %v4424, %v4423
      %v4426 = vrot.slane %v4083, 4
      %v4427 = vsel %vm4241, %v4426, %v4425
      %v4428 = vrot.slane %v4084, 3
      %v4429 = vsel %vm4244, %v4428, %v4427
      %v4430 = vrot.slane %v4085, 2
      %v4431 = vsel %vm4247, %v4430, %v4429
      %v4432 = vrot.slane %v4086, 1
      %v4433 = vsel %vm4250, %v4432, %v4431
      %v4434 = vrot.slane %v4088, 7
      %v4435 = vsel %vm4232, %v4434, %v4087
      %v4436 = vrot.slane %v4089, 6
      %v4437 = vsel %vm4235, %v4436, %v4435
      %v4438 = vrot.slane %v4090, 5
      %v4439 = vsel %vm4238, %v4438, %v4437
      %v4440 = vrot.slane %v4091, 4
      %v4441 = vsel %vm4241, %v4440, %v4439
      %v4442 = vrot.slane %v4092, 3
      %v4443 = vsel %vm4244, %v4442, %v4441
      %v4444 = vrot.slane %v4093, 2
      %v4445 = vsel %vm4247, %v4444, %v4443
      %v4446 = vrot.slane %v4094, 1
      %v4447 = vsel %vm4250, %v4446, %v4445
      %v4448 = vrot.slane %v4096, 7
      %v4449 = vsel %vm4232, %v4448, %v4095
      %v4450 = vrot.slane %v4097, 6
      %v4451 = vsel %vm4235, %v4450, %v4449
      %v4452 = vrot.slane %v4098, 5
      %v4453 = vsel %vm4238, %v4452, %v4451
      %v4454 = vrot.slane %v4099, 4
      %v4455 = vsel %vm4241, %v4454, %v4453
      %v4456 = vrot.slane %v4100, 3
      %v4457 = vsel %vm4244, %v4456, %v4455
      %v4458 = vrot.slane %v4101, 2
      %v4459 = vsel %vm4247, %v4458, %v4457
      %v4460 = vrot.slane %v4102, 1
      %v4461 = vsel %vm4250, %v4460, %v4459
      %v4462 = vrot.slane %v4104, 7
      %v4463 = vsel %vm4232, %v4462, %v4103
      %v4464 = vrot.slane %v4105, 6
      %v4465 = vsel %vm4235, %v4464, %v4463
      %v4466 = vrot.slane %v4106, 5
      %v4467 = vsel %vm4238, %v4466, %v4465
      %v4468 = vrot.slane %v4107, 4
      %v4469 = vsel %vm4241, %v4468, %v4467
      %v4470 = vrot.slane %v4108, 3
      %v4471 = vsel %vm4244, %v4470, %v4469
      %v4472 = vrot.slane %v4109, 2
      %v4473 = vsel %vm4247, %v4472, %v4471
      %v4474 = vrot.slane %v4110, 1
      %v4475 = vsel %vm4250, %v4474, %v4473
      %v4476 = vrot.slane %v4112, 7
      %v4477 = vsel %vm4232, %v4476, %v4111
      %v4478 = vrot.slane %v4113, 6
      %v4479 = vsel %vm4235, %v4478, %v4477
      %v4480 = vrot.slane %v4114, 5
      %v4481 = vsel %vm4238, %v4480, %v4479
      %v4482 = vrot.slane %v4115, 4
      %v4483 = vsel %vm4241, %v4482, %v4481
      %v4484 = vrot.slane %v4116, 3
      %v4485 = vsel %vm4244, %v4484, %v4483
      %v4486 = vrot.slane %v4117, 2
      %v4487 = vsel %vm4247, %v4486, %v4485
      %v4488 = vrot.slane %v4118, 1
      %v4489 = vsel %vm4250, %v4488, %v4487
      %v4490 = vrot.slane %v4120, 7
      %v4491 = vsel %vm4232, %v4490, %v4119
      %v4492 = vrot.slane %v4121, 6
      %v4493 = vsel %vm4235, %v4492, %v4491
      %v4494 = vrot.slane %v4122, 5
      %v4495 = vsel %vm4238, %v4494, %v4493
      %v4496 = vrot.slane %v4123, 4
      %v4497 = vsel %vm4241, %v4496, %v4495
      %v4498 = vrot.slane %v4124, 3
      %v4499 = vsel %vm4244, %v4498, %v4497
      %v4500 = vrot.slane %v4125, 2
      %v4501 = vsel %vm4247, %v4500, %v4499
      %v4502 = vrot.slane %v4126, 1
      %v4503 = vsel %vm4250, %v4502, %v4501
      %v4504 = vrot.slane %v4128, 7
      %v4505 = vsel %vm4232, %v4504, %v4127
      %v4506 = vrot.slane %v4129, 6
      %v4507 = vsel %vm4235, %v4506, %v4505
      %v4508 = vrot.slane %v4130, 5
      %v4509 = vsel %vm4238, %v4508, %v4507
      %v4510 = vrot.slane %v4131, 4
      %v4511 = vsel %vm4241, %v4510, %v4509
      %v4512 = vrot.slane %v4132, 3
      %v4513 = vsel %vm4244, %v4512, %v4511
      %v4514 = vrot.slane %v4133, 2
      %v4515 = vsel %vm4247, %v4514, %v4513
      %v4516 = vrot.slane %v4134, 1
      %v4517 = vsel %vm4250, %v4516, %v4515
      %v4518 = vrot.slane %v4136, 7
      %v4519 = vsel %vm4232, %v4518, %v4135
      %v4520 = vrot.slane %v4137, 6
      %v4521 = vsel %vm4235, %v4520, %v4519
      %v4522 = vrot.slane %v4138, 5
      %v4523 = vsel %vm4238, %v4522, %v4521
      %v4524 = vrot.slane %v4139, 4
      %v4525 = vsel %vm4241, %v4524, %v4523
      %v4526 = vrot.slane %v4140, 3
      %v4527 = vsel %vm4244, %v4526, %v4525
      %v4528 = vrot.slane %v4141, 2
      %v4529 = vsel %vm4247, %v4528, %v4527
      %v4530 = vrot.slane %v4142, 1
      %v4531 = vsel %vm4250, %v4530, %v4529
      %v4532 = vrot.slane %v4144, 7
      %v4533 = vsel %vm4232, %v4532, %v4143
      %v4534 = vrot.slane %v4145, 6
      %v4535 = vsel %vm4235, %v4534, %v4533
      %v4536 = vrot.slane %v4146, 5
      %v4537 = vsel %vm4238, %v4536, %v4535
      %v4538 = vrot.slane %v4147, 4
      %v4539 = vsel %vm4241, %v4538, %v4537
      %v4540 = vrot.slane %v4148, 3
      %v4541 = vsel %vm4244, %v4540, %v4539
      %v4542 = vrot.slane %v4149, 2
      %v4543 = vsel %vm4247, %v4542, %v4541
      %v4544 = vrot.slane %v4150, 1
      %v4545 = vsel %vm4250, %v4544, %v4543
      %v4546 = vrot.slane %v4152, 7
      %v4547 = vsel %vm4232, %v4546, %v4151
      %v4548 = vrot.slane %v4153, 6
      %v4549 = vsel %vm4235, %v4548, %v4547
      %v4550 = vrot.slane %v4154, 5
      %v4551 = vsel %vm4238, %v4550, %v4549
      %v4552 = vrot.slane %v4155, 4
      %v4553 = vsel %vm4241, %v4552, %v4551
      %v4554 = vrot.slane %v4156, 3
      %v4555 = vsel %vm4244, %v4554, %v4553
      %v4556 = vrot.slane %v4157, 2
      %v4557 = vsel %vm4247, %v4556, %v4555
      %v4558 = vrot.slane %v4158, 1
      %v4559 = vsel %vm4250, %v4558, %v4557
      %v4560 = vrot.slane %v4160, 7
      %v4561 = vsel %vm4232, %v4560, %v4159
      %v4562 = vrot.slane %v4161, 6
      %v4563 = vsel %vm4235, %v4562, %v4561
      %v4564 = vrot.slane %v4162, 5
      %v4565 = vsel %vm4238, %v4564, %v4563
      %v4566 = vrot.slane %v4163, 4
      %v4567 = vsel %vm4241, %v4566, %v4565
      %v4568 = vrot.slane %v4164, 3
      %v4569 = vsel %vm4244, %v4568, %v4567
      %v4570 = vrot.slane %v4165, 2
      %v4571 = vsel %vm4247, %v4570, %v4569
      %v4572 = vrot.slane %v4166, 1
      %v4573 = vsel %vm4250, %v4572, %v4571
      %v4574 = vrot.slane %v4168, 7
      %v4575 = vsel %vm4232, %v4574, %v4167
      %v4576 = vrot.slane %v4169, 6
      %v4577 = vsel %vm4235, %v4576, %v4575
      %v4578 = vrot.slane %v4170, 5
      %v4579 = vsel %vm4238, %v4578, %v4577
      %v4580 = vrot.slane %v4171, 4
      %v4581 = vsel %vm4241, %v4580, %v4579
      %v4582 = vrot.slane %v4172, 3
      %v4583 = vsel %vm4244, %v4582, %v4581
      %v4584 = vrot.slane %v4173, 2
      %v4585 = vsel %vm4247, %v4584, %v4583
      %v4586 = vrot.slane %v4174, 1
      %v4587 = vsel %vm4250, %v4586, %v4585
      %v4588 = vrot.slane %v4176, 7
      %v4589 = vsel %vm4232, %v4588, %v4175
      %v4590 = vrot.slane %v4177, 6
      %v4591 = vsel %vm4235, %v4590, %v4589
      %v4592 = vrot.slane %v4178, 5
      %v4593 = vsel %vm4238, %v4592, %v4591
      %v4594 = vrot.slane %v4179, 4
      %v4595 = vsel %vm4241, %v4594, %v4593
      %v4596 = vrot.slane %v4180, 3
      %v4597 = vsel %vm4244, %v4596, %v4595
      %v4598 = vrot.slane %v4181, 2
      %v4599 = vsel %vm4247, %v4598, %v4597
      %v4600 = vrot.slane %v4182, 1
      %v4601 = vsel %vm4250, %v4600, %v4599
      %v4602 = vrot.slane %v4184, 7
      %v4603 = vsel %vm4232, %v4602, %v4183
      %v4604 = vrot.slane %v4185, 6
      %v4605 = vsel %vm4235, %v4604, %v4603
      %v4606 = vrot.slane %v4186, 5
      %v4607 = vsel %vm4238, %v4606, %v4605
      %v4608 = vrot.slane %v4187, 4
      %v4609 = vsel %vm4241, %v4608, %v4607
      %v4610 = vrot.slane %v4188, 3
      %v4611 = vsel %vm4244, %v4610, %v4609
      %v4612 = vrot.slane %v4189, 2
      %v4613 = vsel %vm4247, %v4612, %v4611
      %v4614 = vrot.slane %v4190, 1
      %v4615 = vsel %vm4250, %v4614, %v4613
      %v4616 = vrot.slane %v4192, 7
      %v4617 = vsel %vm4232, %v4616, %v4191
      %v4618 = vrot.slane %v4193, 6
      %v4619 = vsel %vm4235, %v4618, %v4617
      %v4620 = vrot.slane %v4194, 5
      %v4621 = vsel %vm4238, %v4620, %v4619
      %v4622 = vrot.slane %v4195, 4
      %v4623 = vsel %vm4241, %v4622, %v4621
      %v4624 = vrot.slane %v4196, 3
      %v4625 = vsel %vm4244, %v4624, %v4623
      %v4626 = vrot.slane %v4197, 2
      %v4627 = vsel %vm4247, %v4626, %v4625
      %v4628 = vrot.slane %v4198, 1
      %v4629 = vsel %vm4250, %v4628, %v4627
      %v4630 = vrot.slane %v4200, 7
      %v4631 = vsel %vm4232, %v4630, %v4199
      %v4632 = vrot.slane %v4201, 6
      %v4633 = vsel %vm4235, %v4632, %v4631
      %v4634 = vrot.slane %v4202, 5
      %v4635 = vsel %vm4238, %v4634, %v4633
      %v4636 = vrot.slane %v4203, 4
      %v4637 = vsel %vm4241, %v4636, %v4635
      %v4638 = vrot.slane %v4204, 3
      %v4639 = vsel %vm4244, %v4638, %v4637
      %v4640 = vrot.slane %v4205, 2
      %v4641 = vsel %vm4247, %v4640, %v4639
      %v4642 = vrot.slane %v4206, 1
      %v4643 = vsel %vm4250, %v4642, %v4641
      %v4644 = vrot.slane %v4208, 7
      %v4645 = vsel %vm4232, %v4644, %v4207
      %v4646 = vrot.slane %v4209, 6
      %v4647 = vsel %vm4235, %v4646, %v4645
      %v4648 = vrot.slane %v4210, 5
      %v4649 = vsel %vm4238, %v4648, %v4647
      %v4650 = vrot.slane %v4211, 4
      %v4651 = vsel %vm4241, %v4650, %v4649
      %v4652 = vrot.slane %v4212, 3
      %v4653 = vsel %vm4244, %v4652, %v4651
      %v4654 = vrot.slane %v4213, 2
      %v4655 = vsel %vm4247, %v4654, %v4653
      %v4656 = vrot.slane %v4214, 1
      %v4657 = vsel %vm4250, %v4656, %v4655
      %v4658 = vrot.slane %v4216, 7
      %v4659 = vsel %vm4232, %v4658, %v4215
      %v4660 = vrot.slane %v4217, 6
      %v4661 = vsel %vm4235, %v4660, %v4659
      %v4662 = vrot.slane %v4218, 5
      %v4663 = vsel %vm4238, %v4662, %v4661
      %v4664 = vrot.slane %v4219, 4
      %v4665 = vsel %vm4241, %v4664, %v4663
      %v4666 = vrot.slane %v4220, 3
      %v4667 = vsel %vm4244, %v4666, %v4665
      %v4668 = vrot.slane %v4221, 2
      %v4669 = vsel %vm4247, %v4668, %v4667
      %v4670 = vrot.slane %v4222, 1
      %v4671 = vsel %vm4250, %v4670, %v4669
      %v4672 = vrot.slane %v4224, 7
      %v4673 = vsel %vm4232, %v4672, %v4223
      %v4674 = vrot.slane %v4225, 6
      %v4675 = vsel %vm4235, %v4674, %v4673
      %v4676 = vrot.slane %v4226, 5
      %v4677 = vsel %vm4238, %v4676, %v4675
      %v4678 = vrot.slane %v4227, 4
      %v4679 = vsel %vm4241, %v4678, %v4677
      %v4680 = vrot.slane %v4228, 3
      %v4681 = vsel %vm4244, %v4680, %v4679
      %v4682 = vrot.slane %v4229, 2
      %v4683 = vsel %vm4247, %v4682, %v4681
      %v4684 = vrot.slane %v4230, 1
      %v4685 = vsel %vm4250, %v4684, %v4683
      %v4686 = vpack.c.b16 %v4251, %v4251
      %v4687 = vpack.c.b16 %v4265, %v4265
      %v4688 = vpack.c.b16 %v4279, %v4279
      %v4689 = vpack.c.b16 %v4293, %v4293
      %v4690 = vpack.c.b16 %v4307, %v4307
      %v4691 = vpack.c.b16 %v4321, %v4321
      %v4692 = vpack.c.b16 %v4335, %v4335
      %v4693 = vpack.c.b16 %v4349, %v4349
      %v4694 = vpack.c.b16 %v4363, %v4363
      %v4695 = vpack.c.b16 %v4377, %v4377
      %v4696 = vpack.c.b16 %v4391, %v4391
      %v4697 = vpack.c.b16 %v4405, %v4405
      %v4698 = vpack.c.b16 %v4419, %v4419
      %v4699 = vpack.c.b16 %v4433, %v4433
      %v4700 = vpack.c.b16 %v4447, %v4447
      %v4701 = vpack.c.b16 %v4461, %v4461
      %v4702 = vpack.c.b16 %v4475, %v4475
      %v4703 = vpack.c.b16 %v4489, %v4489
      %v4704 = vpack.c.b16 %v4503, %v4503
      %v4705 = vpack.c.b16 %v4517, %v4517
      %v4706 = vpack.c.b16 %v4531, %v4531
      %v4707 = vpack.c.b16 %v4545, %v4545
      %v4708 = vpack.c.b16 %v4559, %v4559
      %v4709 = vpack.c.b16 %v4573, %v4573
      %v4710 = vpack.c.b16 %v4587, %v4587
      %v4711 = vpack.c.b16 %v4601, %v4601
      %v4712 = vpack.c.b16 %v4615, %v4615
      %v4713 = vpack.c.b16 %v4629, %v4629
      %v4714 = vpack.c.b16 %v4643, %v4643
      %v4715 = vpack.c.b16 %v4657, %v4657
      %v4716 = vpack.c.b16 %v4671, %v4671
      %v4717 = vpack.c.b16 %v4685, %v4685
      %vm4750 = vcmask 257024
      %4751 = vst.msk [vmem:[%s279] sm:$0xf] %vm4750, %v4686
      %4752 = vst.msk [vmem:[%s279 + $0x4] sm:$0xf] %vm4750, %v4687
      %4753 = vst.msk [vmem:[%s279 + $0x8] sm:$0xf] %vm4750, %v4688
      %4754 = vst.msk [vmem:[%s279 + $0xc] sm:$0xf] %vm4750, %v4689
      %4755 = vst.msk [vmem:[%s279 + $0x10] sm:$0xf] %vm4750, %v4690
      %4756 = vst.msk [vmem:[%s279 + $0x14] sm:$0xf] %vm4750, %v4691
      %4757 = vst.msk [vmem:[%s279 + $0x18] sm:$0xf] %vm4750, %v4692
      %4758 = vst.msk [vmem:[%s279 + $0x1c] sm:$0xf] %vm4750, %v4693
      %4759 = vst.msk [vmem:[%s279 + $0x20] sm:$0xf] %vm4750, %v4694
      %4760 = vst.msk [vmem:[%s279 + $0x24] sm:$0xf] %vm4750, %v4695
      %4761 = vst.msk [vmem:[%s279 + $0x28] sm:$0xf] %vm4750, %v4696
      %4762 = vst.msk [vmem:[%s279 + $0x2c] sm:$0xf] %vm4750, %v4697
      %4763 = vst.msk [vmem:[%s279 + $0x30] sm:$0xf] %vm4750, %v4698
      %4764 = vst.msk [vmem:[%s279 + $0x34] sm:$0xf] %vm4750, %v4699
      %4765 = vst.msk [vmem:[%s279 + $0x38] sm:$0xf] %vm4750, %v4700
      %4766 = vst.msk [vmem:[%s279 + $0x3c] sm:$0xf] %vm4750, %v4701
      %4767 = vst.msk [vmem:[%s279 + $0x40] sm:$0xf] %vm4750, %v4702
      %4768 = vst.msk [vmem:[%s279 + $0x44] sm:$0xf] %vm4750, %v4703
      %4769 = vst.msk [vmem:[%s279 + $0x48] sm:$0xf] %vm4750, %v4704
      %4770 = vst.msk [vmem:[%s279 + $0x4c] sm:$0xf] %vm4750, %v4705
      %4771 = vst.msk [vmem:[%s279 + $0x50] sm:$0xf] %vm4750, %v4706
      %4772 = vst.msk [vmem:[%s279 + $0x54] sm:$0xf] %vm4750, %v4707
      %4773 = vst.msk [vmem:[%s279 + $0x58] sm:$0xf] %vm4750, %v4708
      %4774 = vst.msk [vmem:[%s279 + $0x5c] sm:$0xf] %vm4750, %v4709
      %4775 = vst.msk [vmem:[%s279 + $0x60] sm:$0xf] %vm4750, %v4710
      %4776 = vst.msk [vmem:[%s279 + $0x64] sm:$0xf] %vm4750, %v4711
      %4777 = vst.msk [vmem:[%s279 + $0x68] sm:$0xf] %vm4750, %v4712
      %4778 = vst.msk [vmem:[%s279 + $0x6c] sm:$0xf] %vm4750, %v4713
      %4779 = vst.msk [vmem:[%s279 + $0x70] sm:$0xf] %vm4750, %v4714
      %4780 = vst.msk [vmem:[%s279 + $0x74] sm:$0xf] %vm4750, %v4715
      %4781 = vst.msk [vmem:[%s279 + $0x78] sm:$0xf] %vm4750, %v4716
      %4782 = vst.msk [vmem:[%s279 + $0x7c] sm:$0xf] %vm4750, %v4717
      %s4783 = smul.u32 32, %s22
      %p4784 = scmp.lt.s32.totalorder %s20, 1
      %s4785 = scalar_select %p4784, %s20, 1
      %p4786 = scmp.lt.s32.totalorder %s4783, 31
      %s4787 = scalar_select %p4786, %s4783, 31
      %p4788 = scmp.lt.s32.totalorder %s21, 0
      %s4789 = scalar_select %p4788, %s21, 0
      %s4790 = sadd.s32 %s4789, %s4787
      %s4791 = smul.addr %s4785, 32
      %s4792 = sadd.s32 %s4790, %s4791
      %s4793 = smul.addr %s4792, 4
      %s4794 = scalar_lea.vmem %s4, %s4793
      // Predicated region
      $region37: #{tpu_custom_call.1} parent=35 // pred_check
        %p4795 = pneg %p160
      $region38: #{tpu_custom_call.1} parent=35 // pred_check_branch
        %4797 = sbr.rel (%p4795) target = $region40
      $region39: #{tpu_custom_call.1} parent=35 // pred_region
        %s4798 = smul.u32 32, %s22
      $region40: #{tpu_custom_call.1} parent=35 // pred_fallthru
        _
    $region36: #{tpu_custom_call.1} parent=5 // pred_fallthru
      _
    %p4799 = scmp.le.s32.totalorder 2, %s10
    // Predicated region
    $region41: #{tpu_custom_call.1} parent=5 // pred_check
      %p4800 = pneg %p4799
    $region42: #{tpu_custom_call.1} parent=5 // pred_check_branch
      %4802 = sbr.rel (%p4800) target = $region44
    $region43: #{tpu_custom_call.1} parent=5 // pred_region
      %s4803 = ssub.s32 %s10, 2
      // Predicated region
      $region45: #{tpu_custom_call.1} parent=43 // pred_check
        %p4804 = pneg %p166
      $region46: #{tpu_custom_call.1} parent=43 // pred_check_branch
        %4806 = sbr.rel (%p4804) target = $region48
      $region47: #{tpu_custom_call.1} parent=43 // pred_region
        %s4807 = smul.u32 32, %s25
        %p4808 = scmp.lt.s32.totalorder %s23, 1
        %s4809 = scalar_select %p4808, %s23, 1
        %p4810 = scmp.lt.s32.totalorder %s4807, 31
        %s4811 = scalar_select %p4810, %s4807, 31
        %p4812 = scmp.lt.s32.totalorder %s24, 0
        %s4813 = scalar_select %p4812, %s24, 0
        %s4814 = sadd.s32 %s4813, %s4811
        %s4815 = smul.addr %s4809, 32
        %s4816 = sadd.s32 %s4814, %s4815
        %s4817 = smul.addr %s4816, 4
        %s4818 = scalar_lea.vmem %s4, %s4817
      $region48: #{tpu_custom_call.1} parent=43 // pred_fallthru
        _
    $region44: #{tpu_custom_call.1} parent=5 // pred_fallthru
      _
  $region6: #{tpu_custom_call.1} parent=0 // loop_footer
    %s14 = sadd.s32 1, %s10
  $region7: #{tpu_custom_call.1} parent=0 // loop_footer_branch
    %9 = sbr.rel target = $region3
  $region8: #{tpu_custom_call.1} parent=0 // loop_exit
    _

</llo_original>
